<compile_context>
chip_gen: v7x
topology: tpu7x:2x2x1
jax: 0.10.0
libtpu: 0.0.40
codegen_flags: <defaults>
</compile_context>

<pallas_src>
import functools

import jax
import jax.numpy as jnp
from jax.experimental import pallas as pl
from jax.experimental.pallas import tpu as pltpu

D_FF = 16     # q_net.d_ff  (LLM hidden channels that feed the head)
SEQ = 256     # FlattenHead nf = d_ff * 256  =>  sequence length is fixed at 256

_I32_MAX = int(jnp.iinfo(jnp.int32).max)

# TODO(synk): GPT2Tokenizer / GPT2Model feature extraction and the prompt-template
# file read have no Pallas equivalent; the kernel consumes the LLM hidden states.


def _agent_head_kernel(x_ref, w_ref, b_ref, q_ref, a_ref, best_v, best_i,
                       *, batch, block_b):
    """Per batch-block: q = x @ w_padded + b ; carry flattened argmax across blocks."""
    i = pl.program_id(0)

    @pl.when(i == 0)
    def _init():
        best_v[...] = jnp.full_like(best_v, -jnp.inf)
        best_i[...] = jnp.zeros_like(best_i)

    # Linear head on the MXU, f32 accumulation; inputs consumed in their native
    # dtype (f32 here to match the module's .float() head; bf16 also works).
    q = jnp.dot(x_ref[...], w_ref[...], preferred_element_type=jnp.float32)
    q = q + b_ref[...].astype(jnp.float32)
    q_ref[...] = q.astype(q_ref.dtype)

    # Fused action selection (Agent.forward's th.argmax over the flattened
    # Q-values). Blocks are visited in increasing flat-index order, so a strict
    # '>' carry keeps first-occurrence tie-breaking.
    tb, a_dim = q.shape
    row = jax.lax.broadcasted_iota(jnp.int32, (tb, a_dim), 0) + i * block_b
    col = jax.lax.broadcasted_iota(jnp.int32, (tb, a_dim), 1)
    flat = row * a_dim + col

    if batch % block_b != 0:
        # Last block may contain rows read past the end of x (undefined data).
        valid = row < batch
        q = jnp.where(valid, q, -jnp.inf)
        flat = jnp.where(valid, flat, _I32_MAX)

    blk_max = jnp.max(q)                                           # f32 scalar
    blk_idx = jnp.min(jnp.where(q == blk_max, flat, _I32_MAX))     # i32 scalar

    better = best_v[...] < blk_max                                 # (1,1) bool
    best_i[...] = jnp.where(better, blk_idx, best_i[...])
    best_v[...] = jnp.where(better, blk_max, best_v[...])

    @pl.when(i == pl.num_programs(0) - 1)
    def _finalize():
        a_ref[0] = jnp.min(best_i[...])


def prepare_head_params(w, b, seq_len, embed_dim):
    """One-time parameter prep (do at init, not per step).

    Folds the `[:, :, :d_ff]` channel slice into the Linear weight by
    zero-padding it from (S*D_FF, A) to (S*E, A): row (s*E + c) carries the
    original row (s*D_FF + c) for c < D_FF and zeros otherwise.
    """
    nf, action_dim = w.shape
    assert nf == seq_len * D_FF
    w3 = w.reshape(seq_len, D_FF, action_dim)
    w_pad = jnp.zeros((seq_len, embed_dim, action_dim), dtype=w.dtype)
    w_pad = w_pad.at[:, :D_FF, :].set(w3)
    return w_pad.reshape(seq_len * embed_dim, action_dim), b.reshape(1, action_dim)


def _pick_block_b(batch, row_bytes, w_bytes, budget_bytes=40 * 1024 * 1024):
    """Rows per grid step: full batch if tiny; else the largest multiple of 8
    such that the double-buffered activation block + resident weight fit in a
    conservative VMEM budget (valid on v5e/v6e/v7x)."""
    if batch <= 8:
        return batch                      # full-dim block is always legal
    avail = max(budget_bytes - w_bytes, 2 * 8 * row_bytes)
    max_rows = avail // (2 * row_bytes)
    tb = min(batch, 512, int(max_rows))
    return max(8, (tb // 8) * 8)


def agent_forward(last_hidden_states, w_padded, b2):
    """Agent.forward downstream of the frozen LLM.

    last_hidden_states: (B, S, E) GPT2 hidden states (f32 or bf16).
    w_padded:           (S*E, A) zero-padded head weight (prepare_head_params).
    b2:                 (1, A) bias.
    Returns (action, q): flattened-argmax action (int32 scalar) and Q-values (B, A).
    """
    B, S, E = last_hidden_states.shape
    K, A = w_padded.shape
    assert K == S * E

    # Free, contiguous reshape — no slice, no copy, no extra XLA op.
    x = last_hidden_states.reshape(B, K)

    row_bytes = K * x.dtype.itemsize
    w_bytes = K * A * w_padded.dtype.itemsize
    tb = _pick_block_b(B, row_bytes, w_bytes)
    grid = (pl.cdiv(B, tb),)

    kernel = functools.partial(_agent_head_kernel, batch=B, block_b=tb)

    q, action = pl.pallas_call(
        kernel,
        out_shape=(
            jax.ShapeDtypeStruct((B, A), jnp.float32),
            jax.ShapeDtypeStruct((1,), jnp.int32),
        ),
        grid_spec=pltpu.PrefetchScalarGridSpec(
            num_scalar_prefetch=0,
            grid=grid,
            in_specs=[
                pl.BlockSpec((tb, K), lambda i: (i, 0)),   # activations: batch-tiled
                pl.BlockSpec((K, A), lambda i: (0, 0)),    # weight: resident (same block each step)
                pl.BlockSpec((1, A), lambda i: (0, 0)),    # bias: resident
            ],
            out_specs=(
                pl.BlockSpec((tb, A), lambda i: (i, 0)),
                pl.BlockSpec(memory_space=pltpu.MemorySpace.SMEM),
            ),
            scratch_shapes=[
                pltpu.VMEM((1, 1), jnp.float32),   # running max
                pltpu.VMEM((1, 1), jnp.int32),     # running flat argmax
            ],
        ),
        compiler_params=pltpu.CompilerParams(
            dimension_semantics=("arbitrary",),    # carried argmax state across batch blocks
            vmem_limit_bytes=48 * 1024 * 1024,
        ),
    )(x, w_padded, b2)
    # Dropout(head_dropout=0) is the identity.
    return action[0], q


if __name__ == "__main__":
    key = jax.random.PRNGKey(0)
    k_x, k_w, k_b = jax.random.split(key, 3)

    # nf = d_ff * 256 is hard-coded in the module, so S must be 256; keep the
    # embed dim small (>= d_ff) as a stand-in for GPT-2's n_embd. B=10 exercises
    # both the batch-tiled grid and the partial-final-block masking.
    B, S, E = 10, SEQ, 32
    action_dim = 4
    nf = D_FF * S  # 4096

    # Deterministic synthetic LLM hidden states (stand-in for GPT2 output).
    # The module casts features to f32 before the head, so use f32 here.
    last_hidden_states = jax.random.normal(k_x, (B, S, E), dtype=jnp.float32)

    # Deterministic Linear(nf, action_dim) parameters (x @ W layout).
    w = jax.random.normal(k_w, (nf, action_dim), dtype=jnp.float32) * 0.02
    b = jax.random.normal(k_b, (action_dim,), dtype=jnp.float32) * 0.01

    # One-time weight prep: fold the [:, :, :d_ff] slice into the weight.
    w_padded, b2 = prepare_head_params(w, b, S, E)

    fwd = jax.jit(agent_forward)
    action, q = fwd(last_hidden_states, w_padded, b2)
    action, q = jax.block_until_ready((action, q))

    # Pure-JAX reference: slice -> flatten -> linear (-> dropout(0)) -> argmax.
    ref_q = last_hidden_states[:, :, :D_FF].reshape(B, nf) @ w + b
    ref_a = jnp.argmax(ref_q)

    assert q.shape == (B, action_dim)
    assert jnp.allclose(q, ref_q, atol=1e-4, rtol=1e-4)
    assert int(action) == int(ref_a)

    print("KERNEL_OK")
</pallas_src>

<mosaic_0001>
module attributes {stable_mosaic.version = 11 : i64} {
  func.func @_agent_head_kernel(%arg0: i32, %arg1: memref<8x8192xf32, #tpu.memory_space<vmem>>, %arg2: memref<8192x4xf32, #tpu.memory_space<vmem>>, %arg3: memref<1x4xf32, #tpu.memory_space<vmem>>, %arg4: memref<8x4xf32, #tpu.memory_space<vmem>>, %arg5: memref<1xi32, #tpu.memory_space<smem>>, %arg6: memref<1x1xf32, #tpu.memory_space<vmem>>, %arg7: memref<1x1xi32, #tpu.memory_space<vmem>>) attributes {dimension_semantics = [#tpu.dimension_semantics<arbitrary>], iteration_bounds = array<i64: 2>, scalar_prefetch = 0 : i64, scratch_operands = 2 : i64, tpu.core_type = #tpu.core_type<tc>, window_params = [{transform_indices = @transform_0, window_bounds = array<i64: 8, 8192>}, {pipeline_mode = #tpu.pipeline_mode<synchronous>, transform_indices = @transform_1, window_bounds = array<i64: 8192, 4>}, {pipeline_mode = #tpu.pipeline_mode<synchronous>, transform_indices = @transform_2, window_bounds = array<i64: 1, 4>}, {transform_indices = @transform_3, window_bounds = array<i64: 8, 4>}, {transform_indices = @transform_4, window_bounds = array<i64: 1>}]} {
    %c0_i32 = arith.constant 0 : i32
    %0 = arith.cmpi eq, %arg0, %c0_i32 : i32
    %1 = arith.extui %0 : i1 to i32
    %c0_i32_0 = arith.constant 0 : i32
    %2 = arith.cmpi ne, %1, %c0_i32_0 : i32
    scf.if %2 {
      %cst_23 = arith.constant 0xFF800000 : f32
      %50 = vector.broadcast %cst_23 : f32 to vector<1x1xf32>
      %c0_24 = arith.constant 0 : index
      %c0_25 = arith.constant 0 : index
      %51 = vector.load %arg6[%c0_24, %c0_25] : memref<1x1xf32, #tpu.memory_space<vmem>>, vector<1x1xf32>
      tpu.vector_store %arg6[%c0_24, %c0_25], %50 {strides = array<i32>} : memref<1x1xf32, #tpu.memory_space<vmem>>, vector<1x1xf32>,
      %c0_i32_26 = arith.constant 0 : i32
      %52 = vector.broadcast %c0_i32_26 : i32 to vector<1x1xi32>
      %c0_27 = arith.constant 0 : index
      %c0_28 = arith.constant 0 : index
      %53 = vector.load %arg7[%c0_27, %c0_28] : memref<1x1xi32, #tpu.memory_space<vmem>>, vector<1x1xi32>
      tpu.vector_store %arg7[%c0_27, %c0_28], %52 {strides = array<i32>} : memref<1x1xi32, #tpu.memory_space<vmem>>, vector<1x1xi32>,
    } else {
    }
    %c0 = arith.constant 0 : index
    %c0_1 = arith.constant 0 : index
    %3 = vector.load %arg1[%c0, %c0_1] : memref<8x8192xf32, #tpu.memory_space<vmem>>, vector<8x8192xf32>
    %c0_2 = arith.constant 0 : index
    %c0_3 = arith.constant 0 : index
    %4 = vector.load %arg2[%c0_2, %c0_3] : memref<8192x4xf32, #tpu.memory_space<vmem>>, vector<8192x4xf32>
    %cst = arith.constant dense<0.000000e+00> : vector<8x4xf32>
    %5 = tpu.matmul %3, %4, %cst {dimension_numbers = #tpu.dot_dimension_numbers<[1], [0], [0], [1], [0, 0, 1, 1], [], []>} : vector<8x8192xf32>, vector<8192x4xf32>, vector<8x4xf32> -> vector<8x4xf32>
    %c0_4 = arith.constant 0 : index
    %c0_5 = arith.constant 0 : index
    %6 = vector.load %arg3[%c0_4, %c0_5] : memref<1x4xf32, #tpu.memory_space<vmem>>, vector<1x4xf32>
    %7 = vector.broadcast %6 : vector<1x4xf32> to vector<8x4xf32>
    %8 = arith.addf %5, %7 : vector<8x4xf32>
    %c0_6 = arith.constant 0 : index
    %c0_7 = arith.constant 0 : index
    %9 = vector.load %arg4[%c0_6, %c0_7] : memref<8x4xf32, #tpu.memory_space<vmem>>, vector<8x4xf32>
    tpu.vector_store %arg4[%c0_6, %c0_7], %8 {strides = array<i32>} : memref<8x4xf32, #tpu.memory_space<vmem>>, vector<8x4xf32>,
    %10 = tpu.iota {dimensions = array<i32: 0>} : vector<8x4xi32>
    %c8_i32 = arith.constant 8 : i32
    %11 = arith.muli %arg0, %c8_i32 : i32
    %12 = vector.broadcast %11 : i32 to vector<8x4xi32>
    %13 = arith.addi %10, %12 : vector<8x4xi32>
    %14 = tpu.iota {dimensions = array<i32: 1>} : vector<8x4xi32>
    %c4_i32 = arith.constant 4 : i32
    %15 = vector.broadcast %c4_i32 : i32 to vector<8x4xi32>
    %16 = arith.muli %13, %15 : vector<8x4xi32>
    %17 = arith.addi %16, %14 : vector<8x4xi32>
    %c10_i32 = arith.constant 10 : i32
    %18 = vector.broadcast %c10_i32 : i32 to vector<8x4xi32>
    %19 = arith.cmpi slt, %13, %18 : vector<8x4xi32>
    %cst_8 = arith.constant 0xFF800000 : f32
    %20 = vector.broadcast %cst_8 : f32 to vector<8x4xf32>
    %21 = arith.select %19, %8, %20 : vector<8x4xi1>, vector<8x4xf32>
    %c2147483647_i32 = arith.constant 2147483647 : i32
    %22 = vector.broadcast %c2147483647_i32 : i32 to vector<8x4xi32>
    %23 = arith.select %19, %17, %22 : vector<8x4xi1>, vector<8x4xi32>
    %24 = vector.shape_cast %21 : vector<8x4xf32> to vector<1x8x4xf32>
    %cst_9 = arith.constant dense<0xFF800000> : vector<1xf32>
    %25 = vector.multi_reduction <maximumf>, %24, %cst_9 [1, 2] : vector<1x8x4xf32> to vector<1xf32>
    %26 = vector.shape_cast %25 : vector<1xf32> to vector<1x1x1xf32>
    %27 = vector.extract %26[0, 0, 0] : f32 from vector<1x1x1xf32>
    %28 = vector.broadcast %27 : f32 to vector<8x4xf32>
    %29 = arith.cmpf oeq, %21, %28 : vector<8x4xf32>
    %c2147483647_i32_10 = arith.constant 2147483647 : i32
    %30 = vector.broadcast %c2147483647_i32_10 : i32 to vector<8x4xi32>
    %31 = arith.select %29, %23, %30 : vector<8x4xi1>, vector<8x4xi32>
    %32 = vector.shape_cast %31 : vector<8x4xi32> to vector<1x8x4xi32>
    %cst_11 = arith.constant dense<2147483647> : vector<1xi32>
    %33 = vector.multi_reduction <minsi>, %32, %cst_11 [1, 2] : vector<1x8x4xi32> to vector<1xi32>
    %34 = vector.shape_cast %33 : vector<1xi32> to vector<1x1x1xi32>
    %35 = vector.extract %34[0, 0, 0] : i32 from vector<1x1x1xi32>
    %c0_12 = arith.constant 0 : index
    %c0_13 = arith.constant 0 : index
    %36 = vector.load %arg6[%c0_12, %c0_13] : memref<1x1xf32, #tpu.memory_space<vmem>>, vector<1x1xf32>
    %37 = vector.broadcast %27 : f32 to vector<1x1xf32>
    %38 = arith.cmpf olt, %36, %37 : vector<1x1xf32>
    %c0_14 = arith.constant 0 : index
    %c0_15 = arith.constant 0 : index
    %39 = vector.load %arg7[%c0_14, %c0_15] : memref<1x1xi32, #tpu.memory_space<vmem>>, vector<1x1xi32>
    %40 = vector.broadcast %35 : i32 to vector<1x1xi32>
    %41 = arith.select %38, %40, %39 : vector<1x1xi1>, vector<1x1xi32>
    %c0_16 = arith.constant 0 : index
    %c0_17 = arith.constant 0 : index
    %42 = vector.load %arg7[%c0_16, %c0_17] : memref<1x1xi32, #tpu.memory_space<vmem>>, vector<1x1xi32>
    tpu.vector_store %arg7[%c0_16, %c0_17], %41 {strides = array<i32>} : memref<1x1xi32, #tpu.memory_space<vmem>>, vector<1x1xi32>,
    %c0_18 = arith.constant 0 : index
    %c0_19 = arith.constant 0 : index
    %43 = vector.load %arg6[%c0_18, %c0_19] : memref<1x1xf32, #tpu.memory_space<vmem>>, vector<1x1xf32>
    %44 = vector.broadcast %27 : f32 to vector<1x1xf32>
    %45 = arith.select %38, %44, %43 : vector<1x1xi1>, vector<1x1xf32>
    %c0_20 = arith.constant 0 : index
    %c0_21 = arith.constant 0 : index
    %46 = vector.load %arg6[%c0_20, %c0_21] : memref<1x1xf32, #tpu.memory_space<vmem>>, vector<1x1xf32>
    tpu.vector_store %arg6[%c0_20, %c0_21], %45 {strides = array<i32>} : memref<1x1xf32, #tpu.memory_space<vmem>>, vector<1x1xf32>,
    %c1_i32 = arith.constant 1 : i32
    %47 = arith.cmpi eq, %arg0, %c1_i32 : i32
    %48 = arith.extui %47 : i1 to i32
    %c0_i32_22 = arith.constant 0 : i32
    %49 = arith.cmpi ne, %48, %c0_i32_22 : i32
    scf.if %49 {
      %c0_23 = arith.constant 0 : index
      %c0_24 = arith.constant 0 : index
      %50 = vector.load %arg7[%c0_23, %c0_24] : memref<1x1xi32, #tpu.memory_space<vmem>>, vector<1x1xi32>
      %51 = vector.shape_cast %50 : vector<1x1xi32> to vector<1x1x1xi32>
      %cst_25 = arith.constant dense<2147483647> : vector<1xi32>
      %52 = vector.multi_reduction <minsi>, %51, %cst_25 [1, 2] : vector<1x1x1xi32> to vector<1xi32>
      %53 = vector.shape_cast %52 : vector<1xi32> to vector<1x1x1xi32>
      %54 = vector.extract %53[0, 0, 0] : i32 from vector<1x1x1xi32>
      %c0_26 = arith.constant 0 : index
      %55 = memref.load %arg5[%c0_26] : memref<1xi32, #tpu.memory_space<smem>>
      memref.store %54, %arg5[%c0_26] : memref<1xi32, #tpu.memory_space<smem>>
    } else {
    }
    return
  }
  func.func @transform_0(%arg0: i32) -> (i32, i32) {
    %c0_i32 = arith.constant 0 : i32
    %c0_i32_0 = arith.constant 0 : i32
    return %arg0, %c0_i32 : i32, i32
  }
  func.func @transform_1(%arg0: i32) -> (i32, i32) {
    %c0_i32 = arith.constant 0 : i32
    %c0_i32_0 = arith.constant 0 : i32
    %c0_i32_1 = arith.constant 0 : i32
    return %c0_i32, %c0_i32_0 : i32, i32
  }
  func.func @transform_2(%arg0: i32) -> (i32, i32) {
    %c0_i32 = arith.constant 0 : i32
    %c0_i32_0 = arith.constant 0 : i32
    %c0_i32_1 = arith.constant 0 : i32
    return %c0_i32, %c0_i32_0 : i32, i32
  }
  func.func @transform_3(%arg0: i32) -> (i32, i32) {
    %c0_i32 = arith.constant 0 : i32
    %c0_i32_0 = arith.constant 0 : i32
    return %arg0, %c0_i32 : i32, i32
  }
  func.func @transform_4(%arg0: i32) -> i32 {
    %c0_i32 = arith.constant 0 : i32
    %c0_i32_0 = arith.constant 0 : i32
    return %c0_i32 : i32
  }
}

</mosaic_0001>

<llo_original>
// kernel: agent_forward.1
$region0: #{agent_forward.1}
  #allocation0 [shape = 'u32[]', space=smem, size = 0x4, offset = 0x4, fixed_abs, tag = 'smem constant byte address 0x4 - core index']
  #allocation1 [shape = 'u32[144,128]{1,0:T(1,128)}', space=vmem, size = 0x12000, scoped, tag = 'internal scratch']
  #allocation2 [shape = 'f32[1,1]{1,0:T(1,128)}', space=vmem, size = 0x200, scoped, tag = 'scratch operand']
  #allocation3 [shape = 's32[1,1]{1,0:T(1,128)}', space=vmem, size = 0x200, scoped, tag = 'scratch operand']
  %s0 = inlined_call_operand.vmem [shape: f32[10,8192], index: 0, kind: input, shape index: {}]
  %s1 = inlined_call_operand.vmem [shape: f32[8192,4], index: 1, kind: input, shape index: {}]
  %s2 = inlined_call_operand.vmem [shape: f32[1,4], index: 2, kind: input, shape index: {}]
  %s3 = inlined_call_operand.vmem [shape: f32[10,4], index: 3, kind: output, shape index: {0}]
  %s4 = inlined_call_operand.hbm [shape: s32[1], index: 4, kind: output, shape index: {1}]
  %5 = xla_tuple %s3, %s4
  %s6 = sld [smem:[#allocation0]]
  $region61: #{agent_forward.1} parent=0
    _
  %s8 = ssub.s32 1, %s6
  %s9 = scalar_select 0, %s8, %s6
  $region1: #{agent_forward.1} parent=0
    #allocation4 [shape = 'u8[512]{0}', space=smem, size = 0x200, scoped, tag = 'output window, operand 1, single buffered']
    #allocation5 [shape = 's32[2]{0}', space=sflag, size = 0x8, scoped, tag = 'scoped memory for agent_forward.1']
    %10 = vsyncpa [#allocation5], 0
    loop: start=0, step=1, limit=4
    $region2: #{agent_forward.1} parent=1 // loop_pre_header
      _
    $region3: #{agent_forward.1} parent=1 // loop_header
      %s12 = sphi 0, %s16
      %p13 = scmp.ge.s32.totalorder %s12, 4
      %s22 = sphi 0, %s24
      %s25 = sphi 0, %s22
      %s26 = sphi 0, %s25
      %s42 = sphi 0, %s26
      %s46 = sphi 0, %s46
      %s48 = sphi 0, %s46
      %s49 = sphi 0, %s48
      %s63 = sphi 0, %s49
      %s67 = sphi 0, %s67
      %s69 = sphi 0, %s67
      %s70 = sphi 0, %s69
      %s84 = sphi 0, %s70
      %s90 = sphi 0, %s92
      %s93 = sphi 0, %s90
      %s94 = sphi 0, %s93
      %s110 = sphi 0, %s94
      %s114 = sphi 0, %s114
      %s116 = sphi 0, %s114
      %s117 = sphi 0, %s116
      %s131 = sphi 0, %s117
    $region4: #{agent_forward.1} parent=1 // loop_header_branch
      %15 = sbr.rel (%p13) target = $region8
    $region5: #{agent_forward.1} parent=1 // loop_body
      %s17 = ssub.s32 %s12, 1
      %s18 = ssub.s32 %s12, 2
      %s19 = sadd.s32 %s12, 1
      %s20 = ssub.s32 %s12, %s19
      %p21 = scmp.eq.s32.totalorder %s20, 0
      %s23 = sadd.s32 %s22, 1
      %s24 = scalar_select %p21, %s22, %s23
      %p27 = pneg %p21
      %p28 = scmp.eq.s32.totalorder %s12, 1
      %p29 = por %p27, %p28
      %p30 = scmp.ne.s32.totalorder %s22, %s25
      %p31 = scmp.eq.s32.totalorder %s12, 0
      %p32 = por %p30, %p31
      %p33 = scmp.ne.s32.totalorder %s22, %s25
      %p34 = scmp.eq.s32.totalorder %s17, 1
      %p35 = por %p33, %p34
      %p36 = scmp.ne.s32.totalorder %s25, %s26
      %p37 = scmp.eq.s32.totalorder %s17, 0
      %p38 = por %p36, %p37
      %p39 = scmp.ne.s32.totalorder %s25, %s26
      %p40 = scmp.eq.s32.totalorder %s18, 1
      %p41 = por %p39, %p40
      %p43 = scmp.ne.s32.totalorder %s26, %s42
      %p44 = scmp.eq.s32.totalorder %s18, 0
      %p45 = por %p43, %p44
      %s47 = sadd.s32 %s46, 1
      %p50 = scmp.eq.s32.totalorder %s12, 1
      %p51 = scmp.ne.s32.totalorder %s46, %s48
      %p52 = scmp.eq.s32.totalorder %s12, 0
      %p53 = por %p51, %p52
      %p54 = scmp.ne.s32.totalorder %s46, %s48
      %p55 = scmp.eq.s32.totalorder %s17, 1
      %p56 = por %p54, %p55
      %p57 = scmp.ne.s32.totalorder %s48, %s49
      %p58 = scmp.eq.s32.totalorder %s17, 0
      %p59 = por %p57, %p58
      %p60 = scmp.ne.s32.totalorder %s48, %s49
      %p61 = scmp.eq.s32.totalorder %s18, 1
      %p62 = por %p60, %p61
      %p64 = scmp.ne.s32.totalorder %s49, %s63
      %p65 = scmp.eq.s32.totalorder %s18, 0
      %p66 = por %p64, %p65
      %s68 = sadd.s32 %s67, 1
      %p71 = scmp.eq.s32.totalorder %s12, 1
      %p72 = scmp.ne.s32.totalorder %s67, %s69
      %p73 = scmp.eq.s32.totalorder %s12, 0
      %p74 = por %p72, %p73
      %p75 = scmp.ne.s32.totalorder %s67, %s69
      %p76 = scmp.eq.s32.totalorder %s17, 1
      %p77 = por %p75, %p76
      %p78 = scmp.ne.s32.totalorder %s69, %s70
      %p79 = scmp.eq.s32.totalorder %s17, 0
      %p80 = por %p78, %p79
      %p81 = scmp.ne.s32.totalorder %s69, %s70
      %p82 = scmp.eq.s32.totalorder %s18, 1
      %p83 = por %p81, %p82
      %p85 = scmp.ne.s32.totalorder %s70, %s84
      %p86 = scmp.eq.s32.totalorder %s18, 0
      %p87 = por %p85, %p86
      %s88 = ssub.s32 %s12, %s19
      %p89 = scmp.eq.s32.totalorder %s88, 0
      %s91 = sadd.s32 %s90, 1
      %s92 = scalar_select %p89, %s90, %s91
      %p95 = pneg %p89
      %p96 = scmp.eq.s32.totalorder %s12, 1
      %p97 = por %p95, %p96
      %p98 = scmp.ne.s32.totalorder %s90, %s93
      %p99 = scmp.eq.s32.totalorder %s12, 0
      %p100 = por %p98, %p99
      %p101 = scmp.ne.s32.totalorder %s90, %s93
      %p102 = scmp.eq.s32.totalorder %s17, 1
      %p103 = por %p101, %p102
      %p104 = scmp.ne.s32.totalorder %s93, %s94
      %p105 = scmp.eq.s32.totalorder %s17, 0
      %p106 = por %p104, %p105
      %p107 = scmp.ne.s32.totalorder %s93, %s94
      %p108 = scmp.eq.s32.totalorder %s18, 1
      %p109 = por %p107, %p108
      %p111 = scmp.ne.s32.totalorder %s94, %s110
      %p112 = scmp.eq.s32.totalorder %s18, 0
      %p113 = por %p111, %p112
      %s115 = sadd.s32 %s114, 1
      %p118 = scmp.eq.s32.totalorder %s12, 1
      %p119 = scmp.ne.s32.totalorder %s114, %s116
      %p120 = scmp.eq.s32.totalorder %s12, 0
      %p121 = por %p119, %p120
      %p122 = scmp.ne.s32.totalorder %s114, %s116
      %p123 = scmp.eq.s32.totalorder %s17, 1
      %p124 = por %p122, %p123
      %p125 = scmp.ne.s32.totalorder %s116, %s117
      %p126 = scmp.eq.s32.totalorder %s17, 0
      %p127 = por %p125, %p126
      %p128 = scmp.ne.s32.totalorder %s116, %s117
      %p129 = scmp.eq.s32.totalorder %s18, 1
      %p130 = por %p128, %p129
      %p132 = scmp.ne.s32.totalorder %s117, %s131
      %p133 = scmp.eq.s32.totalorder %s18, 0
      %p134 = por %p132, %p133
      %p135 = scmp.le.s32.totalorder 1, %s12
      %p136 = scmp.lt.s32.totalorder %s12, 3
      %p137 = pnand %p135, %p136
      %p138 = pneg %p137
      // Predicated region
      $region9: #{agent_forward.1} parent=5 // pred_check
        _
      $region10: #{agent_forward.1} parent=5 // pred_check_branch
        %140 = sbr.rel (%p137) target = $region12
      $region11: #{agent_forward.1} parent=5 // pred_region
        %s141 = ssub.s32 %s12, 1
        // Predicated region
        $region13: #{agent_forward.1} parent=11 // pred_check
          %p142 = pneg %p59
        $region14: #{agent_forward.1} parent=11 // pred_check_branch
          %144 = sbr.rel (%p142) target = $region16
        $region15: #{agent_forward.1} parent=11 // pred_region
          _
        $region16: #{agent_forward.1} parent=11 // pred_fallthru
          _
        // Predicated region
        $region17: #{agent_forward.1} parent=11 // pred_check
          %p145 = pneg %p80
        $region18: #{agent_forward.1} parent=11 // pred_check_branch
          %147 = sbr.rel (%p145) target = $region20
        $region19: #{agent_forward.1} parent=11 // pred_region
          _
        $region20: #{agent_forward.1} parent=11 // pred_fallthru
          _
      $region12: #{agent_forward.1} parent=5 // pred_fallthru
        _
      %p148 = scmp.lt.s32.totalorder %s12, 2
      // Predicated region
      $region21: #{agent_forward.1} parent=5 // pred_check
        %p149 = pneg %p148
      $region22: #{agent_forward.1} parent=5 // pred_check_branch
        %151 = sbr.rel (%p149) target = $region24
      $region23: #{agent_forward.1} parent=5 // pred_region
        // Predicated region
        $region25: #{agent_forward.1} parent=23 // pred_check
          %p152 = pneg %p32
        $region26: #{agent_forward.1} parent=23 // pred_check_branch
          %154 = sbr.rel (%p152) target = $region28
        $region27: #{agent_forward.1} parent=23 // pred_region
          %p155 = scmp.lt.s32.totalorder %s12, 1
          %s156 = scalar_select %p155, %s12, 1
          %s157 = smul.addr %s156, 64
          %s158 = smul.addr %s157, 8
          %s159 = scalar_lea.vmem %s0, %s158
        $region28: #{agent_forward.1} parent=23 // pred_fallthru
          _
      $region24: #{agent_forward.1} parent=5 // pred_fallthru
        _
      %p160 = scmp.le.s32.totalorder 1, %s12
      %p161 = scmp.lt.s32.totalorder %s12, 3
      %p162 = pnand %p160, %p161
      %p163 = pneg %p162
      // Predicated region
      $region29: #{agent_forward.1} parent=5 // pred_check
        _
      $region30: #{agent_forward.1} parent=5 // pred_check_branch
        %165 = sbr.rel (%p162) target = $region32
      $region31: #{agent_forward.1} parent=5 // pred_region
        %s166 = ssub.s32 %s12, 1
        %p167 = scmp.lt.s32.totalorder %s17, 1
        %s168 = scalar_select %p167, %s17, 1
        %s169 = smul.addr %s168, 64
        %s170 = smul.addr %s169, 8
        %s171 = scalar_lea.vmem %s0, %s170
        %p172 = pneg %p38
        %p173 = pneg %p35
        %p174 = pneg %p59
        %p175 = pneg %p56
        %p176 = pneg %p80
        %p177 = pneg %p77
        %p178 = pneg %p106
        %p179 = pneg %p103
        %p180 = scmp.lt.s32.totalorder %s17, 1
        %s181 = scalar_select %p180, %s17, 1
        %s182 = smul.addr %s181, 8
        %s183 = scalar_lea.vmem %s3, %s182
        %p184 = pneg %p127
        %p185 = pneg %p124
        %p186 = scmp.lt.s32.totalorder %s17, 1
        %s187 = scalar_select %p186, %s17, 1
        %s188 = smul.addr %s187, 64
        %s189 = smul.addr %s188, 8
        %s190 = scalar_lea.vmem %s0, %s189
        %p191 = scmp.lt.s32.totalorder %s17, 1
        %s192 = scalar_select %p191, %s17, 1
        %s193 = smul.addr %s192, 8
        %s194 = scalar_lea.vmem %s3, %s193
        %p195 = scmp.eq.s32.totalorder %s17, 0
        // Predicated region
        $region33: #{agent_forward.1} parent=31 // pred_check
          %p196 = pneg %p195
        $region34: #{agent_forward.1} parent=31 // pred_check_branch
          %198 = sbr.rel (%p196) target = $region36
        $region35: #{agent_forward.1} parent=31 // pred_region
          %vm199 = vcmask 0
          %200 = vst.msk [vmem:[#allocation2] sm:$0x1] %vm199, -inf
          %201 = vst.msk [vmem:[#allocation3] sm:$0x1] %vm199, 0
        $region36: #{agent_forward.1} parent=31 // pred_fallthru
          _
        %v202 = vld [vmem:[%s190] sm:$0xff]
        %v203 = vld [vmem:[%s190 + $0x8] sm:$0xff]
        %v204 = vld [vmem:[%s190 + $0x10] sm:$0xff]
        %v205 = vld [vmem:[%s190 + $0x18] sm:$0xff]
        %v206 = vld [vmem:[%s190 + $0x20] sm:$0xff]
        %v207 = vld [vmem:[%s190 + $0x28] sm:$0xff]
        %v208 = vld [vmem:[%s190 + $0x30] sm:$0xff]
        %v209 = vld [vmem:[%s190 + $0x38] sm:$0xff]
        %v210 = vld [vmem:[%s190 + $0x40] sm:$0xff]
        %v211 = vld [vmem:[%s190 + $0x48] sm:$0xff]
        %v212 = vld [vmem:[%s190 + $0x50] sm:$0xff]
        %v213 = vld [vmem:[%s190 + $0x58] sm:$0xff]
        %v214 = vld [vmem:[%s190 + $0x60] sm:$0xff]
        %v215 = vld [vmem:[%s190 + $0x68] sm:$0xff]
        %v216 = vld [vmem:[%s190 + $0x70] sm:$0xff]
        %v217 = vld [vmem:[%s190 + $0x78] sm:$0xff]
        %v218 = vld [vmem:[%s190 + $0x80] sm:$0xff]
        %v219 = vld [vmem:[%s190 + $0x88] sm:$0xff]
        %v220 = vld [vmem:[%s190 + $0x90] sm:$0xff]
        %v221 = vld [vmem:[%s190 + $0x98] sm:$0xff]
        %v222 = vld [vmem:[%s190 + $0xa0] sm:$0xff]
        %v223 = vld [vmem:[%s190 + $0xa8] sm:$0xff]
        %v224 = vld [vmem:[%s190 + $0xb0] sm:$0xff]
        %v225 = vld [vmem:[%s190 + $0xb8] sm:$0xff]
        %v226 = vld [vmem:[%s190 + $0xc0] sm:$0xff]
        %v227 = vld [vmem:[%s190 + $0xc8] sm:$0xff]
        %v228 = vld [vmem:[%s190 + $0xd0] sm:$0xff]
        %v229 = vld [vmem:[%s190 + $0xd8] sm:$0xff]
        %v230 = vld [vmem:[%s190 + $0xe0] sm:$0xff]
        %v231 = vld [vmem:[%s190 + $0xe8] sm:$0xff]
        %v232 = vld [vmem:[%s190 + $0xf0] sm:$0xff]
        %v233 = vld [vmem:[%s190 + $0xf8] sm:$0xff]
        %v234 = vld [vmem:[%s190 + $0x100] sm:$0xff]
        %v235 = vld [vmem:[%s190 + $0x108] sm:$0xff]
        %v236 = vld [vmem:[%s190 + $0x110] sm:$0xff]
        %v237 = vld [vmem:[%s190 + $0x118] sm:$0xff]
        %v238 = vld [vmem:[%s190 + $0x120] sm:$0xff]
        %v239 = vld [vmem:[%s190 + $0x128] sm:$0xff]
        %v240 = vld [vmem:[%s190 + $0x130] sm:$0xff]
        %v241 = vld [vmem:[%s190 + $0x138] sm:$0xff]
        %v242 = vld [vmem:[%s190 + $0x140] sm:$0xff]
        %v243 = vld [vmem:[%s190 + $0x148] sm:$0xff]
        %v244 = vld [vmem:[%s190 + $0x150] sm:$0xff]
        %v245 = vld [vmem:[%s190 + $0x158] sm:$0xff]
        %v246 = vld [vmem:[%s190 + $0x160] sm:$0xff]
        %v247 = vld [vmem:[%s190 + $0x168] sm:$0xff]
        %v248 = vld [vmem:[%s190 + $0x170] sm:$0xff]
        %v249 = vld [vmem:[%s190 + $0x178] sm:$0xff]
        %v250 = vld [vmem:[%s190 + $0x180] sm:$0xff]
        %v251 = vld [vmem:[%s190 + $0x188] sm:$0xff]
        %v252 = vld [vmem:[%s190 + $0x190] sm:$0xff]
        %v253 = vld [vmem:[%s190 + $0x198] sm:$0xff]
        %v254 = vld [vmem:[%s190 + $0x1a0] sm:$0xff]
        %v255 = vld [vmem:[%s190 + $0x1a8] sm:$0xff]
        %v256 = vld [vmem:[%s190 + $0x1b0] sm:$0xff]
        %v257 = vld [vmem:[%s190 + $0x1b8] sm:$0xff]
        %v258 = vld [vmem:[%s190 + $0x1c0] sm:$0xff]
        %v259 = vld [vmem:[%s190 + $0x1c8] sm:$0xff]
        %v260 = vld [vmem:[%s190 + $0x1d0] sm:$0xff]
        %v261 = vld [vmem:[%s190 + $0x1d8] sm:$0xff]
        %v262 = vld [vmem:[%s190 + $0x1e0] sm:$0xff]
        %v263 = vld [vmem:[%s190 + $0x1e8] sm:$0xff]
        %v264 = vld [vmem:[%s190 + $0x1f0] sm:$0xff]
        %v265 = vld [vmem:[%s190 + $0x1f8] sm:$0xff]
        %v266 = vld [vmem:[%s1] sm:$0xff]
        %v267 = vld [vmem:[%s1 + $0x8] sm:$0xff]
        %v268 = vld [vmem:[%s1 + $0x10] sm:$0xff]
        %v269 = vld [vmem:[%s1 + $0x18] sm:$0xff]
        %v270 = vld [vmem:[%s1 + $0x20] sm:$0xff]
        %v271 = vld [vmem:[%s1 + $0x28] sm:$0xff]
        %v272 = vld [vmem:[%s1 + $0x30] sm:$0xff]
        %v273 = vld [vmem:[%s1 + $0x38] sm:$0xff]
        %v274 = vld [vmem:[%s1 + $0x40] sm:$0xff]
        %v275 = vld [vmem:[%s1 + $0x48] sm:$0xff]
        %v276 = vld [vmem:[%s1 + $0x50] sm:$0xff]
        %v277 = vld [vmem:[%s1 + $0x58] sm:$0xff]
        %v278 = vld [vmem:[%s1 + $0x60] sm:$0xff]
        %v279 = vld [vmem:[%s1 + $0x68] sm:$0xff]
        %v280 = vld [vmem:[%s1 + $0x70] sm:$0xff]
        %v281 = vld [vmem:[%s1 + $0x78] sm:$0xff]
        %v282 = vld [vmem:[%s1 + $0x80] sm:$0xff]
        %v283 = vld [vmem:[%s1 + $0x88] sm:$0xff]
        %v284 = vld [vmem:[%s1 + $0x90] sm:$0xff]
        %v285 = vld [vmem:[%s1 + $0x98] sm:$0xff]
        %v286 = vld [vmem:[%s1 + $0xa0] sm:$0xff]
        %v287 = vld [vmem:[%s1 + $0xa8] sm:$0xff]
        %v288 = vld [vmem:[%s1 + $0xb0] sm:$0xff]
        %v289 = vld [vmem:[%s1 + $0xb8] sm:$0xff]
        %v290 = vld [vmem:[%s1 + $0xc0] sm:$0xff]
        %v291 = vld [vmem:[%s1 + $0xc8] sm:$0xff]
        %v292 = vld [vmem:[%s1 + $0xd0] sm:$0xff]
        %v293 = vld [vmem:[%s1 + $0xd8] sm:$0xff]
        %v294 = vld [vmem:[%s1 + $0xe0] sm:$0xff]
        %v295 = vld [vmem:[%s1 + $0xe8] sm:$0xff]
        %v296 = vld [vmem:[%s1 + $0xf0] sm:$0xff]
        %v297 = vld [vmem:[%s1 + $0xf8] sm:$0xff]
        %v298 = vld [vmem:[%s1 + $0x100] sm:$0xff]
        %v299 = vld [vmem:[%s1 + $0x108] sm:$0xff]
        %v300 = vld [vmem:[%s1 + $0x110] sm:$0xff]
        %v301 = vld [vmem:[%s1 + $0x118] sm:$0xff]
        %v302 = vld [vmem:[%s1 + $0x120] sm:$0xff]
        %v303 = vld [vmem:[%s1 + $0x128] sm:$0xff]
        %v304 = vld [vmem:[%s1 + $0x130] sm:$0xff]
        %v305 = vld [vmem:[%s1 + $0x138] sm:$0xff]
        %v306 = vld [vmem:[%s1 + $0x140] sm:$0xff]
        %v307 = vld [vmem:[%s1 + $0x148] sm:$0xff]
        %v308 = vld [vmem:[%s1 + $0x150] sm:$0xff]
        %v309 = vld [vmem:[%s1 + $0x158] sm:$0xff]
        %v310 = vld [vmem:[%s1 + $0x160] sm:$0xff]
        %v311 = vld [vmem:[%s1 + $0x168] sm:$0xff]
        %v312 = vld [vmem:[%s1 + $0x170] sm:$0xff]
        %v313 = vld [vmem:[%s1 + $0x178] sm:$0xff]
        %v314 = vld [vmem:[%s1 + $0x180] sm:$0xff]
        %v315 = vld [vmem:[%s1 + $0x188] sm:$0xff]
        %v316 = vld [vmem:[%s1 + $0x190] sm:$0xff]
        %v317 = vld [vmem:[%s1 + $0x198] sm:$0xff]
        %v318 = vld [vmem:[%s1 + $0x1a0] sm:$0xff]
        %v319 = vld [vmem:[%s1 + $0x1a8] sm:$0xff]
        %v320 = vld [vmem:[%s1 + $0x1b0] sm:$0xff]
        %v321 = vld [vmem:[%s1 + $0x1b8] sm:$0xff]
        %v322 = vld [vmem:[%s1 + $0x1c0] sm:$0xff]
        %v323 = vld [vmem:[%s1 + $0x1c8] sm:$0xff]
        %v324 = vld [vmem:[%s1 + $0x1d0] sm:$0xff]
        %v325 = vld [vmem:[%s1 + $0x1d8] sm:$0xff]
        %v326 = vld [vmem:[%s1 + $0x1e0] sm:$0xff]
        %v327 = vld [vmem:[%s1 + $0x1e8] sm:$0xff]
        %v328 = vld [vmem:[%s1 + $0x1f0] sm:$0xff]
        %v329 = vld [vmem:[%s1 + $0x1f8] sm:$0xff]
        %v330 = vld [vmem:[%s1 + $0x200] sm:$0xff]
        %v331 = vld [vmem:[%s1 + $0x208] sm:$0xff]
        %v332 = vld [vmem:[%s1 + $0x210] sm:$0xff]
        %v333 = vld [vmem:[%s1 + $0x218] sm:$0xff]
        %v334 = vld [vmem:[%s1 + $0x220] sm:$0xff]
        %v335 = vld [vmem:[%s1 + $0x228] sm:$0xff]
        %v336 = vld [vmem:[%s1 + $0x230] sm:$0xff]
        %v337 = vld [vmem:[%s1 + $0x238] sm:$0xff]
        %v338 = vld [vmem:[%s1 + $0x240] sm:$0xff]
        %v339 = vld [vmem:[%s1 + $0x248] sm:$0xff]
        %v340 = vld [vmem:[%s1 + $0x250] sm:$0xff]
        %v341 = vld [vmem:[%s1 + $0x258] sm:$0xff]
        %v342 = vld [vmem:[%s1 + $0x260] sm:$0xff]
        %v343 = vld [vmem:[%s1 + $0x268] sm:$0xff]
        %v344 = vld [vmem:[%s1 + $0x270] sm:$0xff]
        %v345 = vld [vmem:[%s1 + $0x278] sm:$0xff]
        %v346 = vld [vmem:[%s1 + $0x280] sm:$0xff]
        %v347 = vld [vmem:[%s1 + $0x288] sm:$0xff]
        %v348 = vld [vmem:[%s1 + $0x290] sm:$0xff]
        %v349 = vld [vmem:[%s1 + $0x298] sm:$0xff]
        %v350 = vld [vmem:[%s1 + $0x2a0] sm:$0xff]
        %v351 = vld [vmem:[%s1 + $0x2a8] sm:$0xff]
        %v352 = vld [vmem:[%s1 + $0x2b0] sm:$0xff]
        %v353 = vld [vmem:[%s1 + $0x2b8] sm:$0xff]
        %v354 = vld [vmem:[%s1 + $0x2c0] sm:$0xff]
        %v355 = vld [vmem:[%s1 + $0x2c8] sm:$0xff]
        %v356 = vld [vmem:[%s1 + $0x2d0] sm:$0xff]
        %v357 = vld [vmem:[%s1 + $0x2d8] sm:$0xff]
        %v358 = vld [vmem:[%s1 + $0x2e0] sm:$0xff]
        %v359 = vld [vmem:[%s1 + $0x2e8] sm:$0xff]
        %v360 = vld [vmem:[%s1 + $0x2f0] sm:$0xff]
        %v361 = vld [vmem:[%s1 + $0x2f8] sm:$0xff]
        %v362 = vld [vmem:[%s1 + $0x300] sm:$0xff]
        %v363 = vld [vmem:[%s1 + $0x308] sm:$0xff]
        %v364 = vld [vmem:[%s1 + $0x310] sm:$0xff]
        %v365 = vld [vmem:[%s1 + $0x318] sm:$0xff]
        %v366 = vld [vmem:[%s1 + $0x320] sm:$0xff]
        %v367 = vld [vmem:[%s1 + $0x328] sm:$0xff]
        %v368 = vld [vmem:[%s1 + $0x330] sm:$0xff]
        %v369 = vld [vmem:[%s1 + $0x338] sm:$0xff]
        %v370 = vld [vmem:[%s1 + $0x340] sm:$0xff]
        %v371 = vld [vmem:[%s1 + $0x348] sm:$0xff]
        %v372 = vld [vmem:[%s1 + $0x350] sm:$0xff]
        %v373 = vld [vmem:[%s1 + $0x358] sm:$0xff]
        %v374 = vld [vmem:[%s1 + $0x360] sm:$0xff]
        %v375 = vld [vmem:[%s1 + $0x368] sm:$0xff]
        %v376 = vld [vmem:[%s1 + $0x370] sm:$0xff]
        %v377 = vld [vmem:[%s1 + $0x378] sm:$0xff]
        %v378 = vld [vmem:[%s1 + $0x380] sm:$0xff]
        %v379 = vld [vmem:[%s1 + $0x388] sm:$0xff]
        %v380 = vld [vmem:[%s1 + $0x390] sm:$0xff]
        %v381 = vld [vmem:[%s1 + $0x398] sm:$0xff]
        %v382 = vld [vmem:[%s1 + $0x3a0] sm:$0xff]
        %v383 = vld [vmem:[%s1 + $0x3a8] sm:$0xff]
        %v384 = vld [vmem:[%s1 + $0x3b0] sm:$0xff]
        %v385 = vld [vmem:[%s1 + $0x3b8] sm:$0xff]
        %v386 = vld [vmem:[%s1 + $0x3c0] sm:$0xff]
        %v387 = vld [vmem:[%s1 + $0x3c8] sm:$0xff]
        %v388 = vld [vmem:[%s1 + $0x3d0] sm:$0xff]
        %v389 = vld [vmem:[%s1 + $0x3d8] sm:$0xff]
        %v390 = vld [vmem:[%s1 + $0x3e0] sm:$0xff]
        %v391 = vld [vmem:[%s1 + $0x3e8] sm:$0xff]
        %v392 = vld [vmem:[%s1 + $0x3f0] sm:$0xff]
        %v393 = vld [vmem:[%s1 + $0x3f8] sm:$0xff]
        %v394 = vld [vmem:[%s1 + $0x400] sm:$0xff]
        %v395 = vld [vmem:[%s1 + $0x408] sm:$0xff]
        %v396 = vld [vmem:[%s1 + $0x410] sm:$0xff]
        %v397 = vld [vmem:[%s1 + $0x418] sm:$0xff]
        %v398 = vld [vmem:[%s1 + $0x420] sm:$0xff]
        %v399 = vld [vmem:[%s1 + $0x428] sm:$0xff]
        %v400 = vld [vmem:[%s1 + $0x430] sm:$0xff]
        %v401 = vld [vmem:[%s1 + $0x438] sm:$0xff]
        %v402 = vld [vmem:[%s1 + $0x440] sm:$0xff]
        %v403 = vld [vmem:[%s1 + $0x448] sm:$0xff]
        %v404 = vld [vmem:[%s1 + $0x450] sm:$0xff]
        %v405 = vld [vmem:[%s1 + $0x458] sm:$0xff]
        %v406 = vld [vmem:[%s1 + $0x460] sm:$0xff]
        %v407 = vld [vmem:[%s1 + $0x468] sm:$0xff]
        %v408 = vld [vmem:[%s1 + $0x470] sm:$0xff]
        %v409 = vld [vmem:[%s1 + $0x478] sm:$0xff]
        %v410 = vld [vmem:[%s1 + $0x480] sm:$0xff]
        %v411 = vld [vmem:[%s1 + $0x488] sm:$0xff]
        %v412 = vld [vmem:[%s1 + $0x490] sm:$0xff]
        %v413 = vld [vmem:[%s1 + $0x498] sm:$0xff]
        %v414 = vld [vmem:[%s1 + $0x4a0] sm:$0xff]
        %v415 = vld [vmem:[%s1 + $0x4a8] sm:$0xff]
        %v416 = vld [vmem:[%s1 + $0x4b0] sm:$0xff]
        %v417 = vld [vmem:[%s1 + $0x4b8] sm:$0xff]
        %v418 = vld [vmem:[%s1 + $0x4c0] sm:$0xff]
        %v419 = vld [vmem:[%s1 + $0x4c8] sm:$0xff]
        %v420 = vld [vmem:[%s1 + $0x4d0] sm:$0xff]
        %v421 = vld [vmem:[%s1 + $0x4d8] sm:$0xff]
        %v422 = vld [vmem:[%s1 + $0x4e0] sm:$0xff]
        %v423 = vld [vmem:[%s1 + $0x4e8] sm:$0xff]
        %v424 = vld [vmem:[%s1 + $0x4f0] sm:$0xff]
        %v425 = vld [vmem:[%s1 + $0x4f8] sm:$0xff]
        %v426 = vld [vmem:[%s1 + $0x500] sm:$0xff]
        %v427 = vld [vmem:[%s1 + $0x508] sm:$0xff]
        %v428 = vld [vmem:[%s1 + $0x510] sm:$0xff]
        %v429 = vld [vmem:[%s1 + $0x518] sm:$0xff]
        %v430 = vld [vmem:[%s1 + $0x520] sm:$0xff]
        %v431 = vld [vmem:[%s1 + $0x528] sm:$0xff]
        %v432 = vld [vmem:[%s1 + $0x530] sm:$0xff]
        %v433 = vld [vmem:[%s1 + $0x538] sm:$0xff]
        %v434 = vld [vmem:[%s1 + $0x540] sm:$0xff]
        %v435 = vld [vmem:[%s1 + $0x548] sm:$0xff]
        %v436 = vld [vmem:[%s1 + $0x550] sm:$0xff]
        %v437 = vld [vmem:[%s1 + $0x558] sm:$0xff]
        %v438 = vld [vmem:[%s1 + $0x560] sm:$0xff]
        %v439 = vld [vmem:[%s1 + $0x568] sm:$0xff]
        %v440 = vld [vmem:[%s1 + $0x570] sm:$0xff]
        %v441 = vld [vmem:[%s1 + $0x578] sm:$0xff]
        %v442 = vld [vmem:[%s1 + $0x580] sm:$0xff]
        %v443 = vld [vmem:[%s1 + $0x588] sm:$0xff]
        %v444 = vld [vmem:[%s1 + $0x590] sm:$0xff]
        %v445 = vld [vmem:[%s1 + $0x598] sm:$0xff]
        %v446 = vld [vmem:[%s1 + $0x5a0] sm:$0xff]
        %v447 = vld [vmem:[%s1 + $0x5a8] sm:$0xff]
        %v448 = vld [vmem:[%s1 + $0x5b0] sm:$0xff]
        %v449 = vld [vmem:[%s1 + $0x5b8] sm:$0xff]
        %v450 = vld [vmem:[%s1 + $0x5c0] sm:$0xff]
        %v451 = vld [vmem:[%s1 + $0x5c8] sm:$0xff]
        %v452 = vld [vmem:[%s1 + $0x5d0] sm:$0xff]
        %v453 = vld [vmem:[%s1 + $0x5d8] sm:$0xff]
        %v454 = vld [vmem:[%s1 + $0x5e0] sm:$0xff]
        %v455 = vld [vmem:[%s1 + $0x5e8] sm:$0xff]
        %v456 = vld [vmem:[%s1 + $0x5f0] sm:$0xff]
        %v457 = vld [vmem:[%s1 + $0x5f8] sm:$0xff]
        %v458 = vld [vmem:[%s1 + $0x600] sm:$0xff]
        %v459 = vld [vmem:[%s1 + $0x608] sm:$0xff]
        %v460 = vld [vmem:[%s1 + $0x610] sm:$0xff]
        %v461 = vld [vmem:[%s1 + $0x618] sm:$0xff]
        %v462 = vld [vmem:[%s1 + $0x620] sm:$0xff]
        %v463 = vld [vmem:[%s1 + $0x628] sm:$0xff]
        %v464 = vld [vmem:[%s1 + $0x630] sm:$0xff]
        %v465 = vld [vmem:[%s1 + $0x638] sm:$0xff]
        %v466 = vld [vmem:[%s1 + $0x640] sm:$0xff]
        %v467 = vld [vmem:[%s1 + $0x648] sm:$0xff]
        %v468 = vld [vmem:[%s1 + $0x650] sm:$0xff]
        %v469 = vld [vmem:[%s1 + $0x658] sm:$0xff]
        %v470 = vld [vmem:[%s1 + $0x660] sm:$0xff]
        %v471 = vld [vmem:[%s1 + $0x668] sm:$0xff]
        %v472 = vld [vmem:[%s1 + $0x670] sm:$0xff]
        %v473 = vld [vmem:[%s1 + $0x678] sm:$0xff]
        %v474 = vld [vmem:[%s1 + $0x680] sm:$0xff]
        %v475 = vld [vmem:[%s1 + $0x688] sm:$0xff]
        %v476 = vld [vmem:[%s1 + $0x690] sm:$0xff]
        %v477 = vld [vmem:[%s1 + $0x698] sm:$0xff]
        %v478 = vld [vmem:[%s1 + $0x6a0] sm:$0xff]
        %v479 = vld [vmem:[%s1 + $0x6a8] sm:$0xff]
        %v480 = vld [vmem:[%s1 + $0x6b0] sm:$0xff]
        %v481 = vld [vmem:[%s1 + $0x6b8] sm:$0xff]
        %v482 = vld [vmem:[%s1 + $0x6c0] sm:$0xff]
        %v483 = vld [vmem:[%s1 + $0x6c8] sm:$0xff]
        %v484 = vld [vmem:[%s1 + $0x6d0] sm:$0xff]
        %v485 = vld [vmem:[%s1 + $0x6d8] sm:$0xff]
        %v486 = vld [vmem:[%s1 + $0x6e0] sm:$0xff]
        %v487 = vld [vmem:[%s1 + $0x6e8] sm:$0xff]
        %v488 = vld [vmem:[%s1 + $0x6f0] sm:$0xff]
        %v489 = vld [vmem:[%s1 + $0x6f8] sm:$0xff]
        %v490 = vld [vmem:[%s1 + $0x700] sm:$0xff]
        %v491 = vld [vmem:[%s1 + $0x708] sm:$0xff]
        %v492 = vld [vmem:[%s1 + $0x710] sm:$0xff]
        %v493 = vld [vmem:[%s1 + $0x718] sm:$0xff]
        %v494 = vld [vmem:[%s1 + $0x720] sm:$0xff]
        %v495 = vld [vmem:[%s1 + $0x728] sm:$0xff]
        %v496 = vld [vmem:[%s1 + $0x730] sm:$0xff]
        %v497 = vld [vmem:[%s1 + $0x738] sm:$0xff]
        %v498 = vld [vmem:[%s1 + $0x740] sm:$0xff]
        %v499 = vld [vmem:[%s1 + $0x748] sm:$0xff]
        %v500 = vld [vmem:[%s1 + $0x750] sm:$0xff]
        %v501 = vld [vmem:[%s1 + $0x758] sm:$0xff]
        %v502 = vld [vmem:[%s1 + $0x760] sm:$0xff]
        %v503 = vld [vmem:[%s1 + $0x768] sm:$0xff]
        %v504 = vld [vmem:[%s1 + $0x770] sm:$0xff]
        %v505 = vld [vmem:[%s1 + $0x778] sm:$0xff]
        %v506 = vld [vmem:[%s1 + $0x780] sm:$0xff]
        %v507 = vld [vmem:[%s1 + $0x788] sm:$0xff]
        %v508 = vld [vmem:[%s1 + $0x790] sm:$0xff]
        %v509 = vld [vmem:[%s1 + $0x798] sm:$0xff]
        %v510 = vld [vmem:[%s1 + $0x7a0] sm:$0xff]
        %v511 = vld [vmem:[%s1 + $0x7a8] sm:$0xff]
        %v512 = vld [vmem:[%s1 + $0x7b0] sm:$0xff]
        %v513 = vld [vmem:[%s1 + $0x7b8] sm:$0xff]
        %v514 = vld [vmem:[%s1 + $0x7c0] sm:$0xff]
        %v515 = vld [vmem:[%s1 + $0x7c8] sm:$0xff]
        %v516 = vld [vmem:[%s1 + $0x7d0] sm:$0xff]
        %v517 = vld [vmem:[%s1 + $0x7d8] sm:$0xff]
        %v518 = vld [vmem:[%s1 + $0x7e0] sm:$0xff]
        %v519 = vld [vmem:[%s1 + $0x7e8] sm:$0xff]
        %v520 = vld [vmem:[%s1 + $0x7f0] sm:$0xff]
        %v521 = vld [vmem:[%s1 + $0x7f8] sm:$0xff]
        %v522 = vld [vmem:[%s1 + $0x800] sm:$0xff]
        %v523 = vld [vmem:[%s1 + $0x808] sm:$0xff]
        %v524 = vld [vmem:[%s1 + $0x810] sm:$0xff]
        %v525 = vld [vmem:[%s1 + $0x818] sm:$0xff]
        %v526 = vld [vmem:[%s1 + $0x820] sm:$0xff]
        %v527 = vld [vmem:[%s1 + $0x828] sm:$0xff]
        %v528 = vld [vmem:[%s1 + $0x830] sm:$0xff]
        %v529 = vld [vmem:[%s1 + $0x838] sm:$0xff]
        %v530 = vld [vmem:[%s1 + $0x840] sm:$0xff]
        %v531 = vld [vmem:[%s1 + $0x848] sm:$0xff]
        %v532 = vld [vmem:[%s1 + $0x850] sm:$0xff]
        %v533 = vld [vmem:[%s1 + $0x858] sm:$0xff]
        %v534 = vld [vmem:[%s1 + $0x860] sm:$0xff]
        %v535 = vld [vmem:[%s1 + $0x868] sm:$0xff]
        %v536 = vld [vmem:[%s1 + $0x870] sm:$0xff]
        %v537 = vld [vmem:[%s1 + $0x878] sm:$0xff]
        %v538 = vld [vmem:[%s1 + $0x880] sm:$0xff]
        %v539 = vld [vmem:[%s1 + $0x888] sm:$0xff]
        %v540 = vld [vmem:[%s1 + $0x890] sm:$0xff]
        %v541 = vld [vmem:[%s1 + $0x898] sm:$0xff]
        %v542 = vld [vmem:[%s1 + $0x8a0] sm:$0xff]
        %v543 = vld [vmem:[%s1 + $0x8a8] sm:$0xff]
        %v544 = vld [vmem:[%s1 + $0x8b0] sm:$0xff]
        %v545 = vld [vmem:[%s1 + $0x8b8] sm:$0xff]
        %v546 = vld [vmem:[%s1 + $0x8c0] sm:$0xff]
        %v547 = vld [vmem:[%s1 + $0x8c8] sm:$0xff]
        %v548 = vld [vmem:[%s1 + $0x8d0] sm:$0xff]
        %v549 = vld [vmem:[%s1 + $0x8d8] sm:$0xff]
        %v550 = vld [vmem:[%s1 + $0x8e0] sm:$0xff]
        %v551 = vld [vmem:[%s1 + $0x8e8] sm:$0xff]
        %v552 = vld [vmem:[%s1 + $0x8f0] sm:$0xff]
        %v553 = vld [vmem:[%s1 + $0x8f8] sm:$0xff]
        %v554 = vld [vmem:[%s1 + $0x900] sm:$0xff]
        %v555 = vld [vmem:[%s1 + $0x908] sm:$0xff]
        %v556 = vld [vmem:[%s1 + $0x910] sm:$0xff]
        %v557 = vld [vmem:[%s1 + $0x918] sm:$0xff]
        %v558 = vld [vmem:[%s1 + $0x920] sm:$0xff]
        %v559 = vld [vmem:[%s1 + $0x928] sm:$0xff]
        %v560 = vld [vmem:[%s1 + $0x930] sm:$0xff]
        %v561 = vld [vmem:[%s1 + $0x938] sm:$0xff]
        %v562 = vld [vmem:[%s1 + $0x940] sm:$0xff]
        %v563 = vld [vmem:[%s1 + $0x948] sm:$0xff]
        %v564 = vld [vmem:[%s1 + $0x950] sm:$0xff]
        %v565 = vld [vmem:[%s1 + $0x958] sm:$0xff]
        %v566 = vld [vmem:[%s1 + $0x960] sm:$0xff]
        %v567 = vld [vmem:[%s1 + $0x968] sm:$0xff]
        %v568 = vld [vmem:[%s1 + $0x970] sm:$0xff]
        %v569 = vld [vmem:[%s1 + $0x978] sm:$0xff]
        %v570 = vld [vmem:[%s1 + $0x980] sm:$0xff]
        %v571 = vld [vmem:[%s1 + $0x988] sm:$0xff]
        %v572 = vld [vmem:[%s1 + $0x990] sm:$0xff]
        %v573 = vld [vmem:[%s1 + $0x998] sm:$0xff]
        %v574 = vld [vmem:[%s1 + $0x9a0] sm:$0xff]
        %v575 = vld [vmem:[%s1 + $0x9a8] sm:$0xff]
        %v576 = vld [vmem:[%s1 + $0x9b0] sm:$0xff]
        %v577 = vld [vmem:[%s1 + $0x9b8] sm:$0xff]
        %v578 = vld [vmem:[%s1 + $0x9c0] sm:$0xff]
        %v579 = vld [vmem:[%s1 + $0x9c8] sm:$0xff]
        %v580 = vld [vmem:[%s1 + $0x9d0] sm:$0xff]
        %v581 = vld [vmem:[%s1 + $0x9d8] sm:$0xff]
        %v582 = vld [vmem:[%s1 + $0x9e0] sm:$0xff]
        %v583 = vld [vmem:[%s1 + $0x9e8] sm:$0xff]
        %v584 = vld [vmem:[%s1 + $0x9f0] sm:$0xff]
        %v585 = vld [vmem:[%s1 + $0x9f8] sm:$0xff]
        %v586 = vld [vmem:[%s1 + $0xa00] sm:$0xff]
        %v587 = vld [vmem:[%s1 + $0xa08] sm:$0xff]
        %v588 = vld [vmem:[%s1 + $0xa10] sm:$0xff]
        %v589 = vld [vmem:[%s1 + $0xa18] sm:$0xff]
        %v590 = vld [vmem:[%s1 + $0xa20] sm:$0xff]
        %v591 = vld [vmem:[%s1 + $0xa28] sm:$0xff]
        %v592 = vld [vmem:[%s1 + $0xa30] sm:$0xff]
        %v593 = vld [vmem:[%s1 + $0xa38] sm:$0xff]
        %v594 = vld [vmem:[%s1 + $0xa40] sm:$0xff]
        %v595 = vld [vmem:[%s1 + $0xa48] sm:$0xff]
        %v596 = vld [vmem:[%s1 + $0xa50] sm:$0xff]
        %v597 = vld [vmem:[%s1 + $0xa58] sm:$0xff]
        %v598 = vld [vmem:[%s1 + $0xa60] sm:$0xff]
        %v599 = vld [vmem:[%s1 + $0xa68] sm:$0xff]
        %v600 = vld [vmem:[%s1 + $0xa70] sm:$0xff]
        %v601 = vld [vmem:[%s1 + $0xa78] sm:$0xff]
        %v602 = vld [vmem:[%s1 + $0xa80] sm:$0xff]
        %v603 = vld [vmem:[%s1 + $0xa88] sm:$0xff]
        %v604 = vld [vmem:[%s1 + $0xa90] sm:$0xff]
        %v605 = vld [vmem:[%s1 + $0xa98] sm:$0xff]
        %v606 = vld [vmem:[%s1 + $0xaa0] sm:$0xff]
        %v607 = vld [vmem:[%s1 + $0xaa8] sm:$0xff]
        %v608 = vld [vmem:[%s1 + $0xab0] sm:$0xff]
        %v609 = vld [vmem:[%s1 + $0xab8] sm:$0xff]
        %v610 = vld [vmem:[%s1 + $0xac0] sm:$0xff]
        %v611 = vld [vmem:[%s1 + $0xac8] sm:$0xff]
        %v612 = vld [vmem:[%s1 + $0xad0] sm:$0xff]
        %v613 = vld [vmem:[%s1 + $0xad8] sm:$0xff]
        %v614 = vld [vmem:[%s1 + $0xae0] sm:$0xff]
        %v615 = vld [vmem:[%s1 + $0xae8] sm:$0xff]
        %v616 = vld [vmem:[%s1 + $0xaf0] sm:$0xff]
        %v617 = vld [vmem:[%s1 + $0xaf8] sm:$0xff]
        %v618 = vld [vmem:[%s1 + $0xb00] sm:$0xff]
        %v619 = vld [vmem:[%s1 + $0xb08] sm:$0xff]
        %v620 = vld [vmem:[%s1 + $0xb10] sm:$0xff]
        %v621 = vld [vmem:[%s1 + $0xb18] sm:$0xff]
        %v622 = vld [vmem:[%s1 + $0xb20] sm:$0xff]
        %v623 = vld [vmem:[%s1 + $0xb28] sm:$0xff]
        %v624 = vld [vmem:[%s1 + $0xb30] sm:$0xff]
        %v625 = vld [vmem:[%s1 + $0xb38] sm:$0xff]
        %v626 = vld [vmem:[%s1 + $0xb40] sm:$0xff]
        %v627 = vld [vmem:[%s1 + $0xb48] sm:$0xff]
        %v628 = vld [vmem:[%s1 + $0xb50] sm:$0xff]
        %v629 = vld [vmem:[%s1 + $0xb58] sm:$0xff]
        %v630 = vld [vmem:[%s1 + $0xb60] sm:$0xff]
        %v631 = vld [vmem:[%s1 + $0xb68] sm:$0xff]
        %v632 = vld [vmem:[%s1 + $0xb70] sm:$0xff]
        %v633 = vld [vmem:[%s1 + $0xb78] sm:$0xff]
        %v634 = vld [vmem:[%s1 + $0xb80] sm:$0xff]
        %v635 = vld [vmem:[%s1 + $0xb88] sm:$0xff]
        %v636 = vld [vmem:[%s1 + $0xb90] sm:$0xff]
        %v637 = vld [vmem:[%s1 + $0xb98] sm:$0xff]
        %v638 = vld [vmem:[%s1 + $0xba0] sm:$0xff]
        %v639 = vld [vmem:[%s1 + $0xba8] sm:$0xff]
        %v640 = vld [vmem:[%s1 + $0xbb0] sm:$0xff]
        %v641 = vld [vmem:[%s1 + $0xbb8] sm:$0xff]
        %v642 = vld [vmem:[%s1 + $0xbc0] sm:$0xff]
        %v643 = vld [vmem:[%s1 + $0xbc8] sm:$0xff]
        %v644 = vld [vmem:[%s1 + $0xbd0] sm:$0xff]
        %v645 = vld [vmem:[%s1 + $0xbd8] sm:$0xff]
        %v646 = vld [vmem:[%s1 + $0xbe0] sm:$0xff]
        %v647 = vld [vmem:[%s1 + $0xbe8] sm:$0xff]
        %v648 = vld [vmem:[%s1 + $0xbf0] sm:$0xff]
        %v649 = vld [vmem:[%s1 + $0xbf8] sm:$0xff]
        %v650 = vld [vmem:[%s1 + $0xc00] sm:$0xff]
        %v651 = vld [vmem:[%s1 + $0xc08] sm:$0xff]
        %v652 = vld [vmem:[%s1 + $0xc10] sm:$0xff]
        %v653 = vld [vmem:[%s1 + $0xc18] sm:$0xff]
        %v654 = vld [vmem:[%s1 + $0xc20] sm:$0xff]
        %v655 = vld [vmem:[%s1 + $0xc28] sm:$0xff]
        %v656 = vld [vmem:[%s1 + $0xc30] sm:$0xff]
        %v657 = vld [vmem:[%s1 + $0xc38] sm:$0xff]
        %v658 = vld [vmem:[%s1 + $0xc40] sm:$0xff]
        %v659 = vld [vmem:[%s1 + $0xc48] sm:$0xff]
        %v660 = vld [vmem:[%s1 + $0xc50] sm:$0xff]
        %v661 = vld [vmem:[%s1 + $0xc58] sm:$0xff]
        %v662 = vld [vmem:[%s1 + $0xc60] sm:$0xff]
        %v663 = vld [vmem:[%s1 + $0xc68] sm:$0xff]
        %v664 = vld [vmem:[%s1 + $0xc70] sm:$0xff]
        %v665 = vld [vmem:[%s1 + $0xc78] sm:$0xff]
        %v666 = vld [vmem:[%s1 + $0xc80] sm:$0xff]
        %v667 = vld [vmem:[%s1 + $0xc88] sm:$0xff]
        %v668 = vld [vmem:[%s1 + $0xc90] sm:$0xff]
        %v669 = vld [vmem:[%s1 + $0xc98] sm:$0xff]
        %v670 = vld [vmem:[%s1 + $0xca0] sm:$0xff]
        %v671 = vld [vmem:[%s1 + $0xca8] sm:$0xff]
        %v672 = vld [vmem:[%s1 + $0xcb0] sm:$0xff]
        %v673 = vld [vmem:[%s1 + $0xcb8] sm:$0xff]
        %v674 = vld [vmem:[%s1 + $0xcc0] sm:$0xff]
        %v675 = vld [vmem:[%s1 + $0xcc8] sm:$0xff]
        %v676 = vld [vmem:[%s1 + $0xcd0] sm:$0xff]
        %v677 = vld [vmem:[%s1 + $0xcd8] sm:$0xff]
        %v678 = vld [vmem:[%s1 + $0xce0] sm:$0xff]
        %v679 = vld [vmem:[%s1 + $0xce8] sm:$0xff]
        %v680 = vld [vmem:[%s1 + $0xcf0] sm:$0xff]
        %v681 = vld [vmem:[%s1 + $0xcf8] sm:$0xff]
        %v682 = vld [vmem:[%s1 + $0xd00] sm:$0xff]
        %v683 = vld [vmem:[%s1 + $0xd08] sm:$0xff]
        %v684 = vld [vmem:[%s1 + $0xd10] sm:$0xff]
        %v685 = vld [vmem:[%s1 + $0xd18] sm:$0xff]
        %v686 = vld [vmem:[%s1 + $0xd20] sm:$0xff]
        %v687 = vld [vmem:[%s1 + $0xd28] sm:$0xff]
        %v688 = vld [vmem:[%s1 + $0xd30] sm:$0xff]
        %v689 = vld [vmem:[%s1 + $0xd38] sm:$0xff]
        %v690 = vld [vmem:[%s1 + $0xd40] sm:$0xff]
        %v691 = vld [vmem:[%s1 + $0xd48] sm:$0xff]
        %v692 = vld [vmem:[%s1 + $0xd50] sm:$0xff]
        %v693 = vld [vmem:[%s1 + $0xd58] sm:$0xff]
        %v694 = vld [vmem:[%s1 + $0xd60] sm:$0xff]
        %v695 = vld [vmem:[%s1 + $0xd68] sm:$0xff]
        %v696 = vld [vmem:[%s1 + $0xd70] sm:$0xff]
        %v697 = vld [vmem:[%s1 + $0xd78] sm:$0xff]
        %v698 = vld [vmem:[%s1 + $0xd80] sm:$0xff]
        %v699 = vld [vmem:[%s1 + $0xd88] sm:$0xff]
        %v700 = vld [vmem:[%s1 + $0xd90] sm:$0xff]
        %v701 = vld [vmem:[%s1 + $0xd98] sm:$0xff]
        %v702 = vld [vmem:[%s1 + $0xda0] sm:$0xff]
        %v703 = vld [vmem:[%s1 + $0xda8] sm:$0xff]
        %v704 = vld [vmem:[%s1 + $0xdb0] sm:$0xff]
        %v705 = vld [vmem:[%s1 + $0xdb8] sm:$0xff]
        %v706 = vld [vmem:[%s1 + $0xdc0] sm:$0xff]
        %v707 = vld [vmem:[%s1 + $0xdc8] sm:$0xff]
        %v708 = vld [vmem:[%s1 + $0xdd0] sm:$0xff]
        %v709 = vld [vmem:[%s1 + $0xdd8] sm:$0xff]
        %v710 = vld [vmem:[%s1 + $0xde0] sm:$0xff]
        %v711 = vld [vmem:[%s1 + $0xde8] sm:$0xff]
        %v712 = vld [vmem:[%s1 + $0xdf0] sm:$0xff]
        %v713 = vld [vmem:[%s1 + $0xdf8] sm:$0xff]
        %v714 = vld [vmem:[%s1 + $0xe00] sm:$0xff]
        %v715 = vld [vmem:[%s1 + $0xe08] sm:$0xff]
        %v716 = vld [vmem:[%s1 + $0xe10] sm:$0xff]
        %v717 = vld [vmem:[%s1 + $0xe18] sm:$0xff]
        %v718 = vld [vmem:[%s1 + $0xe20] sm:$0xff]
        %v719 = vld [vmem:[%s1 + $0xe28] sm:$0xff]
        %v720 = vld [vmem:[%s1 + $0xe30] sm:$0xff]
        %v721 = vld [vmem:[%s1 + $0xe38] sm:$0xff]
        %v722 = vld [vmem:[%s1 + $0xe40] sm:$0xff]
        %v723 = vld [vmem:[%s1 + $0xe48] sm:$0xff]
        %v724 = vld [vmem:[%s1 + $0xe50] sm:$0xff]
        %v725 = vld [vmem:[%s1 + $0xe58] sm:$0xff]
        %v726 = vld [vmem:[%s1 + $0xe60] sm:$0xff]
        %v727 = vld [vmem:[%s1 + $0xe68] sm:$0xff]
        %v728 = vld [vmem:[%s1 + $0xe70] sm:$0xff]
        %v729 = vld [vmem:[%s1 + $0xe78] sm:$0xff]
        %v730 = vld [vmem:[%s1 + $0xe80] sm:$0xff]
        %v731 = vld [vmem:[%s1 + $0xe88] sm:$0xff]
        %v732 = vld [vmem:[%s1 + $0xe90] sm:$0xff]
        %v733 = vld [vmem:[%s1 + $0xe98] sm:$0xff]
        %v734 = vld [vmem:[%s1 + $0xea0] sm:$0xff]
        %v735 = vld [vmem:[%s1 + $0xea8] sm:$0xff]
        %v736 = vld [vmem:[%s1 + $0xeb0] sm:$0xff]
        %v737 = vld [vmem:[%s1 + $0xeb8] sm:$0xff]
        %v738 = vld [vmem:[%s1 + $0xec0] sm:$0xff]
        %v739 = vld [vmem:[%s1 + $0xec8] sm:$0xff]
        %v740 = vld [vmem:[%s1 + $0xed0] sm:$0xff]
        %v741 = vld [vmem:[%s1 + $0xed8] sm:$0xff]
        %v742 = vld [vmem:[%s1 + $0xee0] sm:$0xff]
        %v743 = vld [vmem:[%s1 + $0xee8] sm:$0xff]
        %v744 = vld [vmem:[%s1 + $0xef0] sm:$0xff]
        %v745 = vld [vmem:[%s1 + $0xef8] sm:$0xff]
        %v746 = vld [vmem:[%s1 + $0xf00] sm:$0xff]
        %v747 = vld [vmem:[%s1 + $0xf08] sm:$0xff]
        %v748 = vld [vmem:[%s1 + $0xf10] sm:$0xff]
        %v749 = vld [vmem:[%s1 + $0xf18] sm:$0xff]
        %v750 = vld [vmem:[%s1 + $0xf20] sm:$0xff]
        %v751 = vld [vmem:[%s1 + $0xf28] sm:$0xff]
        %v752 = vld [vmem:[%s1 + $0xf30] sm:$0xff]
        %v753 = vld [vmem:[%s1 + $0xf38] sm:$0xff]
        %v754 = vld [vmem:[%s1 + $0xf40] sm:$0xff]
        %v755 = vld [vmem:[%s1 + $0xf48] sm:$0xff]
        %v756 = vld [vmem:[%s1 + $0xf50] sm:$0xff]
        %v757 = vld [vmem:[%s1 + $0xf58] sm:$0xff]
        %v758 = vld [vmem:[%s1 + $0xf60] sm:$0xff]
        %v759 = vld [vmem:[%s1 + $0xf68] sm:$0xff]
        %v760 = vld [vmem:[%s1 + $0xf70] sm:$0xff]
        %v761 = vld [vmem:[%s1 + $0xf78] sm:$0xff]
        %v762 = vld [vmem:[%s1 + $0xf80] sm:$0xff]
        %v763 = vld [vmem:[%s1 + $0xf88] sm:$0xff]
        %v764 = vld [vmem:[%s1 + $0xf90] sm:$0xff]
        %v765 = vld [vmem:[%s1 + $0xf98] sm:$0xff]
        %v766 = vld [vmem:[%s1 + $0xfa0] sm:$0xff]
        %v767 = vld [vmem:[%s1 + $0xfa8] sm:$0xff]
        %v768 = vld [vmem:[%s1 + $0xfb0] sm:$0xff]
        %v769 = vld [vmem:[%s1 + $0xfb8] sm:$0xff]
        %v770 = vld [vmem:[%s1 + $0xfc0] sm:$0xff]
        %v771 = vld [vmem:[%s1 + $0xfc8] sm:$0xff]
        %v772 = vld [vmem:[%s1 + $0xfd0] sm:$0xff]
        %v773 = vld [vmem:[%s1 + $0xfd8] sm:$0xff]
        %v774 = vld [vmem:[%s1 + $0xfe0] sm:$0xff]
        %v775 = vld [vmem:[%s1 + $0xfe8] sm:$0xff]
        %v776 = vld [vmem:[%s1 + $0xff0] sm:$0xff]
        %v777 = vld [vmem:[%s1 + $0xff8] sm:$0xff]
        %v778 = vld [vmem:[%s1 + $0x1000] sm:$0xff]
        %v779 = vld [vmem:[%s1 + $0x1008] sm:$0xff]
        %v780 = vld [vmem:[%s1 + $0x1010] sm:$0xff]
        %v781 = vld [vmem:[%s1 + $0x1018] sm:$0xff]
        %v782 = vld [vmem:[%s1 + $0x1020] sm:$0xff]
        %v783 = vld [vmem:[%s1 + $0x1028] sm:$0xff]
        %v784 = vld [vmem:[%s1 + $0x1030] sm:$0xff]
        %v785 = vld [vmem:[%s1 + $0x1038] sm:$0xff]
        %v786 = vld [vmem:[%s1 + $0x1040] sm:$0xff]
        %v787 = vld [vmem:[%s1 + $0x1048] sm:$0xff]
        %v788 = vld [vmem:[%s1 + $0x1050] sm:$0xff]
        %v789 = vld [vmem:[%s1 + $0x1058] sm:$0xff]
        %v790 = vld [vmem:[%s1 + $0x1060] sm:$0xff]
        %v791 = vld [vmem:[%s1 + $0x1068] sm:$0xff]
        %v792 = vld [vmem:[%s1 + $0x1070] sm:$0xff]
        %v793 = vld [vmem:[%s1 + $0x1078] sm:$0xff]
        %v794 = vld [vmem:[%s1 + $0x1080] sm:$0xff]
        %v795 = vld [vmem:[%s1 + $0x1088] sm:$0xff]
        %v796 = vld [vmem:[%s1 + $0x1090] sm:$0xff]
        %v797 = vld [vmem:[%s1 + $0x1098] sm:$0xff]
        %v798 = vld [vmem:[%s1 + $0x10a0] sm:$0xff]
        %v799 = vld [vmem:[%s1 + $0x10a8] sm:$0xff]
        %v800 = vld [vmem:[%s1 + $0x10b0] sm:$0xff]
        %v801 = vld [vmem:[%s1 + $0x10b8] sm:$0xff]
        %v802 = vld [vmem:[%s1 + $0x10c0] sm:$0xff]
        %v803 = vld [vmem:[%s1 + $0x10c8] sm:$0xff]
        %v804 = vld [vmem:[%s1 + $0x10d0] sm:$0xff]
        %v805 = vld [vmem:[%s1 + $0x10d8] sm:$0xff]
        %v806 = vld [vmem:[%s1 + $0x10e0] sm:$0xff]
        %v807 = vld [vmem:[%s1 + $0x10e8] sm:$0xff]
        %v808 = vld [vmem:[%s1 + $0x10f0] sm:$0xff]
        %v809 = vld [vmem:[%s1 + $0x10f8] sm:$0xff]
        %v810 = vld [vmem:[%s1 + $0x1100] sm:$0xff]
        %v811 = vld [vmem:[%s1 + $0x1108] sm:$0xff]
        %v812 = vld [vmem:[%s1 + $0x1110] sm:$0xff]
        %v813 = vld [vmem:[%s1 + $0x1118] sm:$0xff]
        %v814 = vld [vmem:[%s1 + $0x1120] sm:$0xff]
        %v815 = vld [vmem:[%s1 + $0x1128] sm:$0xff]
        %v816 = vld [vmem:[%s1 + $0x1130] sm:$0xff]
        %v817 = vld [vmem:[%s1 + $0x1138] sm:$0xff]
        %v818 = vld [vmem:[%s1 + $0x1140] sm:$0xff]
        %v819 = vld [vmem:[%s1 + $0x1148] sm:$0xff]
        %v820 = vld [vmem:[%s1 + $0x1150] sm:$0xff]
        %v821 = vld [vmem:[%s1 + $0x1158] sm:$0xff]
        %v822 = vld [vmem:[%s1 + $0x1160] sm:$0xff]
        %v823 = vld [vmem:[%s1 + $0x1168] sm:$0xff]
        %v824 = vld [vmem:[%s1 + $0x1170] sm:$0xff]
        %v825 = vld [vmem:[%s1 + $0x1178] sm:$0xff]
        %v826 = vld [vmem:[%s1 + $0x1180] sm:$0xff]
        %v827 = vld [vmem:[%s1 + $0x1188] sm:$0xff]
        %v828 = vld [vmem:[%s1 + $0x1190] sm:$0xff]
        %v829 = vld [vmem:[%s1 + $0x1198] sm:$0xff]
        %v830 = vld [vmem:[%s1 + $0x11a0] sm:$0xff]
        %v831 = vld [vmem:[%s1 + $0x11a8] sm:$0xff]
        %v832 = vld [vmem:[%s1 + $0x11b0] sm:$0xff]
        %v833 = vld [vmem:[%s1 + $0x11b8] sm:$0xff]
        %v834 = vld [vmem:[%s1 + $0x11c0] sm:$0xff]
        %v835 = vld [vmem:[%s1 + $0x11c8] sm:$0xff]
        %v836 = vld [vmem:[%s1 + $0x11d0] sm:$0xff]
        %v837 = vld [vmem:[%s1 + $0x11d8] sm:$0xff]
        %v838 = vld [vmem:[%s1 + $0x11e0] sm:$0xff]
        %v839 = vld [vmem:[%s1 + $0x11e8] sm:$0xff]
        %v840 = vld [vmem:[%s1 + $0x11f0] sm:$0xff]
        %v841 = vld [vmem:[%s1 + $0x11f8] sm:$0xff]
        %v842 = vld [vmem:[%s1 + $0x1200] sm:$0xff]
        %v843 = vld [vmem:[%s1 + $0x1208] sm:$0xff]
        %v844 = vld [vmem:[%s1 + $0x1210] sm:$0xff]
        %v845 = vld [vmem:[%s1 + $0x1218] sm:$0xff]
        %v846 = vld [vmem:[%s1 + $0x1220] sm:$0xff]
        %v847 = vld [vmem:[%s1 + $0x1228] sm:$0xff]
        %v848 = vld [vmem:[%s1 + $0x1230] sm:$0xff]
        %v849 = vld [vmem:[%s1 + $0x1238] sm:$0xff]
        %v850 = vld [vmem:[%s1 + $0x1240] sm:$0xff]
        %v851 = vld [vmem:[%s1 + $0x1248] sm:$0xff]
        %v852 = vld [vmem:[%s1 + $0x1250] sm:$0xff]
        %v853 = vld [vmem:[%s1 + $0x1258] sm:$0xff]
        %v854 = vld [vmem:[%s1 + $0x1260] sm:$0xff]
        %v855 = vld [vmem:[%s1 + $0x1268] sm:$0xff]
        %v856 = vld [vmem:[%s1 + $0x1270] sm:$0xff]
        %v857 = vld [vmem:[%s1 + $0x1278] sm:$0xff]
        %v858 = vld [vmem:[%s1 + $0x1280] sm:$0xff]
        %v859 = vld [vmem:[%s1 + $0x1288] sm:$0xff]
        %v860 = vld [vmem:[%s1 + $0x1290] sm:$0xff]
        %v861 = vld [vmem:[%s1 + $0x1298] sm:$0xff]
        %v862 = vld [vmem:[%s1 + $0x12a0] sm:$0xff]
        %v863 = vld [vmem:[%s1 + $0x12a8] sm:$0xff]
        %v864 = vld [vmem:[%s1 + $0x12b0] sm:$0xff]
        %v865 = vld [vmem:[%s1 + $0x12b8] sm:$0xff]
        %v866 = vld [vmem:[%s1 + $0x12c0] sm:$0xff]
        %v867 = vld [vmem:[%s1 + $0x12c8] sm:$0xff]
        %v868 = vld [vmem:[%s1 + $0x12d0] sm:$0xff]
        %v869 = vld [vmem:[%s1 + $0x12d8] sm:$0xff]
        %v870 = vld [vmem:[%s1 + $0x12e0] sm:$0xff]
        %v871 = vld [vmem:[%s1 + $0x12e8] sm:$0xff]
        %v872 = vld [vmem:[%s1 + $0x12f0] sm:$0xff]
        %v873 = vld [vmem:[%s1 + $0x12f8] sm:$0xff]
        %v874 = vld [vmem:[%s1 + $0x1300] sm:$0xff]
        %v875 = vld [vmem:[%s1 + $0x1308] sm:$0xff]
        %v876 = vld [vmem:[%s1 + $0x1310] sm:$0xff]
        %v877 = vld [vmem:[%s1 + $0x1318] sm:$0xff]
        %v878 = vld [vmem:[%s1 + $0x1320] sm:$0xff]
        %v879 = vld [vmem:[%s1 + $0x1328] sm:$0xff]
        %v880 = vld [vmem:[%s1 + $0x1330] sm:$0xff]
        %v881 = vld [vmem:[%s1 + $0x1338] sm:$0xff]
        %v882 = vld [vmem:[%s1 + $0x1340] sm:$0xff]
        %v883 = vld [vmem:[%s1 + $0x1348] sm:$0xff]
        %v884 = vld [vmem:[%s1 + $0x1350] sm:$0xff]
        %v885 = vld [vmem:[%s1 + $0x1358] sm:$0xff]
        %v886 = vld [vmem:[%s1 + $0x1360] sm:$0xff]
        %v887 = vld [vmem:[%s1 + $0x1368] sm:$0xff]
        %v888 = vld [vmem:[%s1 + $0x1370] sm:$0xff]
        %v889 = vld [vmem:[%s1 + $0x1378] sm:$0xff]
        %v890 = vld [vmem:[%s1 + $0x1380] sm:$0xff]
        %v891 = vld [vmem:[%s1 + $0x1388] sm:$0xff]
        %v892 = vld [vmem:[%s1 + $0x1390] sm:$0xff]
        %v893 = vld [vmem:[%s1 + $0x1398] sm:$0xff]
        %v894 = vld [vmem:[%s1 + $0x13a0] sm:$0xff]
        %v895 = vld [vmem:[%s1 + $0x13a8] sm:$0xff]
        %v896 = vld [vmem:[%s1 + $0x13b0] sm:$0xff]
        %v897 = vld [vmem:[%s1 + $0x13b8] sm:$0xff]
        %v898 = vld [vmem:[%s1 + $0x13c0] sm:$0xff]
        %v899 = vld [vmem:[%s1 + $0x13c8] sm:$0xff]
        %v900 = vld [vmem:[%s1 + $0x13d0] sm:$0xff]
        %v901 = vld [vmem:[%s1 + $0x13d8] sm:$0xff]
        %v902 = vld [vmem:[%s1 + $0x13e0] sm:$0xff]
        %v903 = vld [vmem:[%s1 + $0x13e8] sm:$0xff]
        %v904 = vld [vmem:[%s1 + $0x13f0] sm:$0xff]
        %v905 = vld [vmem:[%s1 + $0x13f8] sm:$0xff]
        %v906 = vld [vmem:[%s1 + $0x1400] sm:$0xff]
        %v907 = vld [vmem:[%s1 + $0x1408] sm:$0xff]
        %v908 = vld [vmem:[%s1 + $0x1410] sm:$0xff]
        %v909 = vld [vmem:[%s1 + $0x1418] sm:$0xff]
        %v910 = vld [vmem:[%s1 + $0x1420] sm:$0xff]
        %v911 = vld [vmem:[%s1 + $0x1428] sm:$0xff]
        %v912 = vld [vmem:[%s1 + $0x1430] sm:$0xff]
        %v913 = vld [vmem:[%s1 + $0x1438] sm:$0xff]
        %v914 = vld [vmem:[%s1 + $0x1440] sm:$0xff]
        %v915 = vld [vmem:[%s1 + $0x1448] sm:$0xff]
        %v916 = vld [vmem:[%s1 + $0x1450] sm:$0xff]
        %v917 = vld [vmem:[%s1 + $0x1458] sm:$0xff]
        %v918 = vld [vmem:[%s1 + $0x1460] sm:$0xff]
        %v919 = vld [vmem:[%s1 + $0x1468] sm:$0xff]
        %v920 = vld [vmem:[%s1 + $0x1470] sm:$0xff]
        %v921 = vld [vmem:[%s1 + $0x1478] sm:$0xff]
        %v922 = vld [vmem:[%s1 + $0x1480] sm:$0xff]
        %v923 = vld [vmem:[%s1 + $0x1488] sm:$0xff]
        %v924 = vld [vmem:[%s1 + $0x1490] sm:$0xff]
        %v925 = vld [vmem:[%s1 + $0x1498] sm:$0xff]
        %v926 = vld [vmem:[%s1 + $0x14a0] sm:$0xff]
        %v927 = vld [vmem:[%s1 + $0x14a8] sm:$0xff]
        %v928 = vld [vmem:[%s1 + $0x14b0] sm:$0xff]
        %v929 = vld [vmem:[%s1 + $0x14b8] sm:$0xff]
        %v930 = vld [vmem:[%s1 + $0x14c0] sm:$0xff]
        %v931 = vld [vmem:[%s1 + $0x14c8] sm:$0xff]
        %v932 = vld [vmem:[%s1 + $0x14d0] sm:$0xff]
        %v933 = vld [vmem:[%s1 + $0x14d8] sm:$0xff]
        %v934 = vld [vmem:[%s1 + $0x14e0] sm:$0xff]
        %v935 = vld [vmem:[%s1 + $0x14e8] sm:$0xff]
        %v936 = vld [vmem:[%s1 + $0x14f0] sm:$0xff]
        %v937 = vld [vmem:[%s1 + $0x14f8] sm:$0xff]
        %v938 = vld [vmem:[%s1 + $0x1500] sm:$0xff]
        %v939 = vld [vmem:[%s1 + $0x1508] sm:$0xff]
        %v940 = vld [vmem:[%s1 + $0x1510] sm:$0xff]
        %v941 = vld [vmem:[%s1 + $0x1518] sm:$0xff]
        %v942 = vld [vmem:[%s1 + $0x1520] sm:$0xff]
        %v943 = vld [vmem:[%s1 + $0x1528] sm:$0xff]
        %v944 = vld [vmem:[%s1 + $0x1530] sm:$0xff]
        %v945 = vld [vmem:[%s1 + $0x1538] sm:$0xff]
        %v946 = vld [vmem:[%s1 + $0x1540] sm:$0xff]
        %v947 = vld [vmem:[%s1 + $0x1548] sm:$0xff]
        %v948 = vld [vmem:[%s1 + $0x1550] sm:$0xff]
        %v949 = vld [vmem:[%s1 + $0x1558] sm:$0xff]
        %v950 = vld [vmem:[%s1 + $0x1560] sm:$0xff]
        %v951 = vld [vmem:[%s1 + $0x1568] sm:$0xff]
        %v952 = vld [vmem:[%s1 + $0x1570] sm:$0xff]
        %v953 = vld [vmem:[%s1 + $0x1578] sm:$0xff]
        %v954 = vld [vmem:[%s1 + $0x1580] sm:$0xff]
        %v955 = vld [vmem:[%s1 + $0x1588] sm:$0xff]
        %v956 = vld [vmem:[%s1 + $0x1590] sm:$0xff]
        %v957 = vld [vmem:[%s1 + $0x1598] sm:$0xff]
        %v958 = vld [vmem:[%s1 + $0x15a0] sm:$0xff]
        %v959 = vld [vmem:[%s1 + $0x15a8] sm:$0xff]
        %v960 = vld [vmem:[%s1 + $0x15b0] sm:$0xff]
        %v961 = vld [vmem:[%s1 + $0x15b8] sm:$0xff]
        %v962 = vld [vmem:[%s1 + $0x15c0] sm:$0xff]
        %v963 = vld [vmem:[%s1 + $0x15c8] sm:$0xff]
        %v964 = vld [vmem:[%s1 + $0x15d0] sm:$0xff]
        %v965 = vld [vmem:[%s1 + $0x15d8] sm:$0xff]
        %v966 = vld [vmem:[%s1 + $0x15e0] sm:$0xff]
        %v967 = vld [vmem:[%s1 + $0x15e8] sm:$0xff]
        %v968 = vld [vmem:[%s1 + $0x15f0] sm:$0xff]
        %v969 = vld [vmem:[%s1 + $0x15f8] sm:$0xff]
        %v970 = vld [vmem:[%s1 + $0x1600] sm:$0xff]
        %v971 = vld [vmem:[%s1 + $0x1608] sm:$0xff]
        %v972 = vld [vmem:[%s1 + $0x1610] sm:$0xff]
        %v973 = vld [vmem:[%s1 + $0x1618] sm:$0xff]
        %v974 = vld [vmem:[%s1 + $0x1620] sm:$0xff]
        %v975 = vld [vmem:[%s1 + $0x1628] sm:$0xff]
        %v976 = vld [vmem:[%s1 + $0x1630] sm:$0xff]
        %v977 = vld [vmem:[%s1 + $0x1638] sm:$0xff]
        %v978 = vld [vmem:[%s1 + $0x1640] sm:$0xff]
        %v979 = vld [vmem:[%s1 + $0x1648] sm:$0xff]
        %v980 = vld [vmem:[%s1 + $0x1650] sm:$0xff]
        %v981 = vld [vmem:[%s1 + $0x1658] sm:$0xff]
        %v982 = vld [vmem:[%s1 + $0x1660] sm:$0xff]
        %v983 = vld [vmem:[%s1 + $0x1668] sm:$0xff]
        %v984 = vld [vmem:[%s1 + $0x1670] sm:$0xff]
        %v985 = vld [vmem:[%s1 + $0x1678] sm:$0xff]
        %v986 = vld [vmem:[%s1 + $0x1680] sm:$0xff]
        %v987 = vld [vmem:[%s1 + $0x1688] sm:$0xff]
        %v988 = vld [vmem:[%s1 + $0x1690] sm:$0xff]
        %v989 = vld [vmem:[%s1 + $0x1698] sm:$0xff]
        %v990 = vld [vmem:[%s1 + $0x16a0] sm:$0xff]
        %v991 = vld [vmem:[%s1 + $0x16a8] sm:$0xff]
        %v992 = vld [vmem:[%s1 + $0x16b0] sm:$0xff]
        %v993 = vld [vmem:[%s1 + $0x16b8] sm:$0xff]
        %v994 = vld [vmem:[%s1 + $0x16c0] sm:$0xff]
        %v995 = vld [vmem:[%s1 + $0x16c8] sm:$0xff]
        %v996 = vld [vmem:[%s1 + $0x16d0] sm:$0xff]
        %v997 = vld [vmem:[%s1 + $0x16d8] sm:$0xff]
        %v998 = vld [vmem:[%s1 + $0x16e0] sm:$0xff]
        %v999 = vld [vmem:[%s1 + $0x16e8] sm:$0xff]
        %v1000 = vld [vmem:[%s1 + $0x16f0] sm:$0xff]
        %v1001 = vld [vmem:[%s1 + $0x16f8] sm:$0xff]
        %v1002 = vld [vmem:[%s1 + $0x1700] sm:$0xff]
        %v1003 = vld [vmem:[%s1 + $0x1708] sm:$0xff]
        %v1004 = vld [vmem:[%s1 + $0x1710] sm:$0xff]
        %v1005 = vld [vmem:[%s1 + $0x1718] sm:$0xff]
        %v1006 = vld [vmem:[%s1 + $0x1720] sm:$0xff]
        %v1007 = vld [vmem:[%s1 + $0x1728] sm:$0xff]
        %v1008 = vld [vmem:[%s1 + $0x1730] sm:$0xff]
        %v1009 = vld [vmem:[%s1 + $0x1738] sm:$0xff]
        %v1010 = vld [vmem:[%s1 + $0x1740] sm:$0xff]
        %v1011 = vld [vmem:[%s1 + $0x1748] sm:$0xff]
        %v1012 = vld [vmem:[%s1 + $0x1750] sm:$0xff]
        %v1013 = vld [vmem:[%s1 + $0x1758] sm:$0xff]
        %v1014 = vld [vmem:[%s1 + $0x1760] sm:$0xff]
        %v1015 = vld [vmem:[%s1 + $0x1768] sm:$0xff]
        %v1016 = vld [vmem:[%s1 + $0x1770] sm:$0xff]
        %v1017 = vld [vmem:[%s1 + $0x1778] sm:$0xff]
        %v1018 = vld [vmem:[%s1 + $0x1780] sm:$0xff]
        %v1019 = vld [vmem:[%s1 + $0x1788] sm:$0xff]
        %v1020 = vld [vmem:[%s1 + $0x1790] sm:$0xff]
        %v1021 = vld [vmem:[%s1 + $0x1798] sm:$0xff]
        %v1022 = vld [vmem:[%s1 + $0x17a0] sm:$0xff]
        %v1023 = vld [vmem:[%s1 + $0x17a8] sm:$0xff]
        %v1024 = vld [vmem:[%s1 + $0x17b0] sm:$0xff]
        %v1025 = vld [vmem:[%s1 + $0x17b8] sm:$0xff]
        %v1026 = vld [vmem:[%s1 + $0x17c0] sm:$0xff]
        %v1027 = vld [vmem:[%s1 + $0x17c8] sm:$0xff]
        %v1028 = vld [vmem:[%s1 + $0x17d0] sm:$0xff]
        %v1029 = vld [vmem:[%s1 + $0x17d8] sm:$0xff]
        %v1030 = vld [vmem:[%s1 + $0x17e0] sm:$0xff]
        %v1031 = vld [vmem:[%s1 + $0x17e8] sm:$0xff]
        %v1032 = vld [vmem:[%s1 + $0x17f0] sm:$0xff]
        %v1033 = vld [vmem:[%s1 + $0x17f8] sm:$0xff]
        %v1034 = vld [vmem:[%s1 + $0x1800] sm:$0xff]
        %v1035 = vld [vmem:[%s1 + $0x1808] sm:$0xff]
        %v1036 = vld [vmem:[%s1 + $0x1810] sm:$0xff]
        %v1037 = vld [vmem:[%s1 + $0x1818] sm:$0xff]
        %v1038 = vld [vmem:[%s1 + $0x1820] sm:$0xff]
        %v1039 = vld [vmem:[%s1 + $0x1828] sm:$0xff]
        %v1040 = vld [vmem:[%s1 + $0x1830] sm:$0xff]
        %v1041 = vld [vmem:[%s1 + $0x1838] sm:$0xff]
        %v1042 = vld [vmem:[%s1 + $0x1840] sm:$0xff]
        %v1043 = vld [vmem:[%s1 + $0x1848] sm:$0xff]
        %v1044 = vld [vmem:[%s1 + $0x1850] sm:$0xff]
        %v1045 = vld [vmem:[%s1 + $0x1858] sm:$0xff]
        %v1046 = vld [vmem:[%s1 + $0x1860] sm:$0xff]
        %v1047 = vld [vmem:[%s1 + $0x1868] sm:$0xff]
        %v1048 = vld [vmem:[%s1 + $0x1870] sm:$0xff]
        %v1049 = vld [vmem:[%s1 + $0x1878] sm:$0xff]
        %v1050 = vld [vmem:[%s1 + $0x1880] sm:$0xff]
        %v1051 = vld [vmem:[%s1 + $0x1888] sm:$0xff]
        %v1052 = vld [vmem:[%s1 + $0x1890] sm:$0xff]
        %v1053 = vld [vmem:[%s1 + $0x1898] sm:$0xff]
        %v1054 = vld [vmem:[%s1 + $0x18a0] sm:$0xff]
        %v1055 = vld [vmem:[%s1 + $0x18a8] sm:$0xff]
        %v1056 = vld [vmem:[%s1 + $0x18b0] sm:$0xff]
        %v1057 = vld [vmem:[%s1 + $0x18b8] sm:$0xff]
        %v1058 = vld [vmem:[%s1 + $0x18c0] sm:$0xff]
        %v1059 = vld [vmem:[%s1 + $0x18c8] sm:$0xff]
        %v1060 = vld [vmem:[%s1 + $0x18d0] sm:$0xff]
        %v1061 = vld [vmem:[%s1 + $0x18d8] sm:$0xff]
        %v1062 = vld [vmem:[%s1 + $0x18e0] sm:$0xff]
        %v1063 = vld [vmem:[%s1 + $0x18e8] sm:$0xff]
        %v1064 = vld [vmem:[%s1 + $0x18f0] sm:$0xff]
        %v1065 = vld [vmem:[%s1 + $0x18f8] sm:$0xff]
        %v1066 = vld [vmem:[%s1 + $0x1900] sm:$0xff]
        %v1067 = vld [vmem:[%s1 + $0x1908] sm:$0xff]
        %v1068 = vld [vmem:[%s1 + $0x1910] sm:$0xff]
        %v1069 = vld [vmem:[%s1 + $0x1918] sm:$0xff]
        %v1070 = vld [vmem:[%s1 + $0x1920] sm:$0xff]
        %v1071 = vld [vmem:[%s1 + $0x1928] sm:$0xff]
        %v1072 = vld [vmem:[%s1 + $0x1930] sm:$0xff]
        %v1073 = vld [vmem:[%s1 + $0x1938] sm:$0xff]
        %v1074 = vld [vmem:[%s1 + $0x1940] sm:$0xff]
        %v1075 = vld [vmem:[%s1 + $0x1948] sm:$0xff]
        %v1076 = vld [vmem:[%s1 + $0x1950] sm:$0xff]
        %v1077 = vld [vmem:[%s1 + $0x1958] sm:$0xff]
        %v1078 = vld [vmem:[%s1 + $0x1960] sm:$0xff]
        %v1079 = vld [vmem:[%s1 + $0x1968] sm:$0xff]
        %v1080 = vld [vmem:[%s1 + $0x1970] sm:$0xff]
        %v1081 = vld [vmem:[%s1 + $0x1978] sm:$0xff]
        %v1082 = vld [vmem:[%s1 + $0x1980] sm:$0xff]
        %v1083 = vld [vmem:[%s1 + $0x1988] sm:$0xff]
        %v1084 = vld [vmem:[%s1 + $0x1990] sm:$0xff]
        %v1085 = vld [vmem:[%s1 + $0x1998] sm:$0xff]
        %v1086 = vld [vmem:[%s1 + $0x19a0] sm:$0xff]
        %v1087 = vld [vmem:[%s1 + $0x19a8] sm:$0xff]
        %v1088 = vld [vmem:[%s1 + $0x19b0] sm:$0xff]
        %v1089 = vld [vmem:[%s1 + $0x19b8] sm:$0xff]
        %v1090 = vld [vmem:[%s1 + $0x19c0] sm:$0xff]
        %v1091 = vld [vmem:[%s1 + $0x19c8] sm:$0xff]
        %v1092 = vld [vmem:[%s1 + $0x19d0] sm:$0xff]
        %v1093 = vld [vmem:[%s1 + $0x19d8] sm:$0xff]
        %v1094 = vld [vmem:[%s1 + $0x19e0] sm:$0xff]
        %v1095 = vld [vmem:[%s1 + $0x19e8] sm:$0xff]
        %v1096 = vld [vmem:[%s1 + $0x19f0] sm:$0xff]
        %v1097 = vld [vmem:[%s1 + $0x19f8] sm:$0xff]
        %v1098 = vld [vmem:[%s1 + $0x1a00] sm:$0xff]
        %v1099 = vld [vmem:[%s1 + $0x1a08] sm:$0xff]
        %v1100 = vld [vmem:[%s1 + $0x1a10] sm:$0xff]
        %v1101 = vld [vmem:[%s1 + $0x1a18] sm:$0xff]
        %v1102 = vld [vmem:[%s1 + $0x1a20] sm:$0xff]
        %v1103 = vld [vmem:[%s1 + $0x1a28] sm:$0xff]
        %v1104 = vld [vmem:[%s1 + $0x1a30] sm:$0xff]
        %v1105 = vld [vmem:[%s1 + $0x1a38] sm:$0xff]
        %v1106 = vld [vmem:[%s1 + $0x1a40] sm:$0xff]
        %v1107 = vld [vmem:[%s1 + $0x1a48] sm:$0xff]
        %v1108 = vld [vmem:[%s1 + $0x1a50] sm:$0xff]
        %v1109 = vld [vmem:[%s1 + $0x1a58] sm:$0xff]
        %v1110 = vld [vmem:[%s1 + $0x1a60] sm:$0xff]
        %v1111 = vld [vmem:[%s1 + $0x1a68] sm:$0xff]
        %v1112 = vld [vmem:[%s1 + $0x1a70] sm:$0xff]
        %v1113 = vld [vmem:[%s1 + $0x1a78] sm:$0xff]
        %v1114 = vld [vmem:[%s1 + $0x1a80] sm:$0xff]
        %v1115 = vld [vmem:[%s1 + $0x1a88] sm:$0xff]
        %v1116 = vld [vmem:[%s1 + $0x1a90] sm:$0xff]
        %v1117 = vld [vmem:[%s1 + $0x1a98] sm:$0xff]
        %v1118 = vld [vmem:[%s1 + $0x1aa0] sm:$0xff]
        %v1119 = vld [vmem:[%s1 + $0x1aa8] sm:$0xff]
        %v1120 = vld [vmem:[%s1 + $0x1ab0] sm:$0xff]
        %v1121 = vld [vmem:[%s1 + $0x1ab8] sm:$0xff]
        %v1122 = vld [vmem:[%s1 + $0x1ac0] sm:$0xff]
        %v1123 = vld [vmem:[%s1 + $0x1ac8] sm:$0xff]
        %v1124 = vld [vmem:[%s1 + $0x1ad0] sm:$0xff]
        %v1125 = vld [vmem:[%s1 + $0x1ad8] sm:$0xff]
        %v1126 = vld [vmem:[%s1 + $0x1ae0] sm:$0xff]
        %v1127 = vld [vmem:[%s1 + $0x1ae8] sm:$0xff]
        %v1128 = vld [vmem:[%s1 + $0x1af0] sm:$0xff]
        %v1129 = vld [vmem:[%s1 + $0x1af8] sm:$0xff]
        %v1130 = vld [vmem:[%s1 + $0x1b00] sm:$0xff]
        %v1131 = vld [vmem:[%s1 + $0x1b08] sm:$0xff]
        %v1132 = vld [vmem:[%s1 + $0x1b10] sm:$0xff]
        %v1133 = vld [vmem:[%s1 + $0x1b18] sm:$0xff]
        %v1134 = vld [vmem:[%s1 + $0x1b20] sm:$0xff]
        %v1135 = vld [vmem:[%s1 + $0x1b28] sm:$0xff]
        %v1136 = vld [vmem:[%s1 + $0x1b30] sm:$0xff]
        %v1137 = vld [vmem:[%s1 + $0x1b38] sm:$0xff]
        %v1138 = vld [vmem:[%s1 + $0x1b40] sm:$0xff]
        %v1139 = vld [vmem:[%s1 + $0x1b48] sm:$0xff]
        %v1140 = vld [vmem:[%s1 + $0x1b50] sm:$0xff]
        %v1141 = vld [vmem:[%s1 + $0x1b58] sm:$0xff]
        %v1142 = vld [vmem:[%s1 + $0x1b60] sm:$0xff]
        %v1143 = vld [vmem:[%s1 + $0x1b68] sm:$0xff]
        %v1144 = vld [vmem:[%s1 + $0x1b70] sm:$0xff]
        %v1145 = vld [vmem:[%s1 + $0x1b78] sm:$0xff]
        %v1146 = vld [vmem:[%s1 + $0x1b80] sm:$0xff]
        %v1147 = vld [vmem:[%s1 + $0x1b88] sm:$0xff]
        %v1148 = vld [vmem:[%s1 + $0x1b90] sm:$0xff]
        %v1149 = vld [vmem:[%s1 + $0x1b98] sm:$0xff]
        %v1150 = vld [vmem:[%s1 + $0x1ba0] sm:$0xff]
        %v1151 = vld [vmem:[%s1 + $0x1ba8] sm:$0xff]
        %v1152 = vld [vmem:[%s1 + $0x1bb0] sm:$0xff]
        %v1153 = vld [vmem:[%s1 + $0x1bb8] sm:$0xff]
        %v1154 = vld [vmem:[%s1 + $0x1bc0] sm:$0xff]
        %v1155 = vld [vmem:[%s1 + $0x1bc8] sm:$0xff]
        %v1156 = vld [vmem:[%s1 + $0x1bd0] sm:$0xff]
        %v1157 = vld [vmem:[%s1 + $0x1bd8] sm:$0xff]
        %v1158 = vld [vmem:[%s1 + $0x1be0] sm:$0xff]
        %v1159 = vld [vmem:[%s1 + $0x1be8] sm:$0xff]
        %v1160 = vld [vmem:[%s1 + $0x1bf0] sm:$0xff]
        %v1161 = vld [vmem:[%s1 + $0x1bf8] sm:$0xff]
        %v1162 = vld [vmem:[%s1 + $0x1c00] sm:$0xff]
        %v1163 = vld [vmem:[%s1 + $0x1c08] sm:$0xff]
        %v1164 = vld [vmem:[%s1 + $0x1c10] sm:$0xff]
        %v1165 = vld [vmem:[%s1 + $0x1c18] sm:$0xff]
        %v1166 = vld [vmem:[%s1 + $0x1c20] sm:$0xff]
        %v1167 = vld [vmem:[%s1 + $0x1c28] sm:$0xff]
        %v1168 = vld [vmem:[%s1 + $0x1c30] sm:$0xff]
        %v1169 = vld [vmem:[%s1 + $0x1c38] sm:$0xff]
        %v1170 = vld [vmem:[%s1 + $0x1c40] sm:$0xff]
        %v1171 = vld [vmem:[%s1 + $0x1c48] sm:$0xff]
        %v1172 = vld [vmem:[%s1 + $0x1c50] sm:$0xff]
        %v1173 = vld [vmem:[%s1 + $0x1c58] sm:$0xff]
        %v1174 = vld [vmem:[%s1 + $0x1c60] sm:$0xff]
        %v1175 = vld [vmem:[%s1 + $0x1c68] sm:$0xff]
        %v1176 = vld [vmem:[%s1 + $0x1c70] sm:$0xff]
        %v1177 = vld [vmem:[%s1 + $0x1c78] sm:$0xff]
        %v1178 = vld [vmem:[%s1 + $0x1c80] sm:$0xff]
        %v1179 = vld [vmem:[%s1 + $0x1c88] sm:$0xff]
        %v1180 = vld [vmem:[%s1 + $0x1c90] sm:$0xff]
        %v1181 = vld [vmem:[%s1 + $0x1c98] sm:$0xff]
        %v1182 = vld [vmem:[%s1 + $0x1ca0] sm:$0xff]
        %v1183 = vld [vmem:[%s1 + $0x1ca8] sm:$0xff]
        %v1184 = vld [vmem:[%s1 + $0x1cb0] sm:$0xff]
        %v1185 = vld [vmem:[%s1 + $0x1cb8] sm:$0xff]
        %v1186 = vld [vmem:[%s1 + $0x1cc0] sm:$0xff]
        %v1187 = vld [vmem:[%s1 + $0x1cc8] sm:$0xff]
        %v1188 = vld [vmem:[%s1 + $0x1cd0] sm:$0xff]
        %v1189 = vld [vmem:[%s1 + $0x1cd8] sm:$0xff]
        %v1190 = vld [vmem:[%s1 + $0x1ce0] sm:$0xff]
        %v1191 = vld [vmem:[%s1 + $0x1ce8] sm:$0xff]
        %v1192 = vld [vmem:[%s1 + $0x1cf0] sm:$0xff]
        %v1193 = vld [vmem:[%s1 + $0x1cf8] sm:$0xff]
        %v1194 = vld [vmem:[%s1 + $0x1d00] sm:$0xff]
        %v1195 = vld [vmem:[%s1 + $0x1d08] sm:$0xff]
        %v1196 = vld [vmem:[%s1 + $0x1d10] sm:$0xff]
        %v1197 = vld [vmem:[%s1 + $0x1d18] sm:$0xff]
        %v1198 = vld [vmem:[%s1 + $0x1d20] sm:$0xff]
        %v1199 = vld [vmem:[%s1 + $0x1d28] sm:$0xff]
        %v1200 = vld [vmem:[%s1 + $0x1d30] sm:$0xff]
        %v1201 = vld [vmem:[%s1 + $0x1d38] sm:$0xff]
        %v1202 = vld [vmem:[%s1 + $0x1d40] sm:$0xff]
        %v1203 = vld [vmem:[%s1 + $0x1d48] sm:$0xff]
        %v1204 = vld [vmem:[%s1 + $0x1d50] sm:$0xff]
        %v1205 = vld [vmem:[%s1 + $0x1d58] sm:$0xff]
        %v1206 = vld [vmem:[%s1 + $0x1d60] sm:$0xff]
        %v1207 = vld [vmem:[%s1 + $0x1d68] sm:$0xff]
        %v1208 = vld [vmem:[%s1 + $0x1d70] sm:$0xff]
        %v1209 = vld [vmem:[%s1 + $0x1d78] sm:$0xff]
        %v1210 = vld [vmem:[%s1 + $0x1d80] sm:$0xff]
        %v1211 = vld [vmem:[%s1 + $0x1d88] sm:$0xff]
        %v1212 = vld [vmem:[%s1 + $0x1d90] sm:$0xff]
        %v1213 = vld [vmem:[%s1 + $0x1d98] sm:$0xff]
        %v1214 = vld [vmem:[%s1 + $0x1da0] sm:$0xff]
        %v1215 = vld [vmem:[%s1 + $0x1da8] sm:$0xff]
        %v1216 = vld [vmem:[%s1 + $0x1db0] sm:$0xff]
        %v1217 = vld [vmem:[%s1 + $0x1db8] sm:$0xff]
        %v1218 = vld [vmem:[%s1 + $0x1dc0] sm:$0xff]
        %v1219 = vld [vmem:[%s1 + $0x1dc8] sm:$0xff]
        %v1220 = vld [vmem:[%s1 + $0x1dd0] sm:$0xff]
        %v1221 = vld [vmem:[%s1 + $0x1dd8] sm:$0xff]
        %v1222 = vld [vmem:[%s1 + $0x1de0] sm:$0xff]
        %v1223 = vld [vmem:[%s1 + $0x1de8] sm:$0xff]
        %v1224 = vld [vmem:[%s1 + $0x1df0] sm:$0xff]
        %v1225 = vld [vmem:[%s1 + $0x1df8] sm:$0xff]
        %v1226 = vld [vmem:[%s1 + $0x1e00] sm:$0xff]
        %v1227 = vld [vmem:[%s1 + $0x1e08] sm:$0xff]
        %v1228 = vld [vmem:[%s1 + $0x1e10] sm:$0xff]
        %v1229 = vld [vmem:[%s1 + $0x1e18] sm:$0xff]
        %v1230 = vld [vmem:[%s1 + $0x1e20] sm:$0xff]
        %v1231 = vld [vmem:[%s1 + $0x1e28] sm:$0xff]
        %v1232 = vld [vmem:[%s1 + $0x1e30] sm:$0xff]
        %v1233 = vld [vmem:[%s1 + $0x1e38] sm:$0xff]
        %v1234 = vld [vmem:[%s1 + $0x1e40] sm:$0xff]
        %v1235 = vld [vmem:[%s1 + $0x1e48] sm:$0xff]
        %v1236 = vld [vmem:[%s1 + $0x1e50] sm:$0xff]
        %v1237 = vld [vmem:[%s1 + $0x1e58] sm:$0xff]
        %v1238 = vld [vmem:[%s1 + $0x1e60] sm:$0xff]
        %v1239 = vld [vmem:[%s1 + $0x1e68] sm:$0xff]
        %v1240 = vld [vmem:[%s1 + $0x1e70] sm:$0xff]
        %v1241 = vld [vmem:[%s1 + $0x1e78] sm:$0xff]
        %v1242 = vld [vmem:[%s1 + $0x1e80] sm:$0xff]
        %v1243 = vld [vmem:[%s1 + $0x1e88] sm:$0xff]
        %v1244 = vld [vmem:[%s1 + $0x1e90] sm:$0xff]
        %v1245 = vld [vmem:[%s1 + $0x1e98] sm:$0xff]
        %v1246 = vld [vmem:[%s1 + $0x1ea0] sm:$0xff]
        %v1247 = vld [vmem:[%s1 + $0x1ea8] sm:$0xff]
        %v1248 = vld [vmem:[%s1 + $0x1eb0] sm:$0xff]
        %v1249 = vld [vmem:[%s1 + $0x1eb8] sm:$0xff]
        %v1250 = vld [vmem:[%s1 + $0x1ec0] sm:$0xff]
        %v1251 = vld [vmem:[%s1 + $0x1ec8] sm:$0xff]
        %v1252 = vld [vmem:[%s1 + $0x1ed0] sm:$0xff]
        %v1253 = vld [vmem:[%s1 + $0x1ed8] sm:$0xff]
        %v1254 = vld [vmem:[%s1 + $0x1ee0] sm:$0xff]
        %v1255 = vld [vmem:[%s1 + $0x1ee8] sm:$0xff]
        %v1256 = vld [vmem:[%s1 + $0x1ef0] sm:$0xff]
        %v1257 = vld [vmem:[%s1 + $0x1ef8] sm:$0xff]
        %v1258 = vld [vmem:[%s1 + $0x1f00] sm:$0xff]
        %v1259 = vld [vmem:[%s1 + $0x1f08] sm:$0xff]
        %v1260 = vld [vmem:[%s1 + $0x1f10] sm:$0xff]
        %v1261 = vld [vmem:[%s1 + $0x1f18] sm:$0xff]
        %v1262 = vld [vmem:[%s1 + $0x1f20] sm:$0xff]
        %v1263 = vld [vmem:[%s1 + $0x1f28] sm:$0xff]
        %v1264 = vld [vmem:[%s1 + $0x1f30] sm:$0xff]
        %v1265 = vld [vmem:[%s1 + $0x1f38] sm:$0xff]
        %v1266 = vld [vmem:[%s1 + $0x1f40] sm:$0xff]
        %v1267 = vld [vmem:[%s1 + $0x1f48] sm:$0xff]
        %v1268 = vld [vmem:[%s1 + $0x1f50] sm:$0xff]
        %v1269 = vld [vmem:[%s1 + $0x1f58] sm:$0xff]
        %v1270 = vld [vmem:[%s1 + $0x1f60] sm:$0xff]
        %v1271 = vld [vmem:[%s1 + $0x1f68] sm:$0xff]
        %v1272 = vld [vmem:[%s1 + $0x1f70] sm:$0xff]
        %v1273 = vld [vmem:[%s1 + $0x1f78] sm:$0xff]
        %v1274 = vld [vmem:[%s1 + $0x1f80] sm:$0xff]
        %v1275 = vld [vmem:[%s1 + $0x1f88] sm:$0xff]
        %v1276 = vld [vmem:[%s1 + $0x1f90] sm:$0xff]
        %v1277 = vld [vmem:[%s1 + $0x1f98] sm:$0xff]
        %v1278 = vld [vmem:[%s1 + $0x1fa0] sm:$0xff]
        %v1279 = vld [vmem:[%s1 + $0x1fa8] sm:$0xff]
        %v1280 = vld [vmem:[%s1 + $0x1fb0] sm:$0xff]
        %v1281 = vld [vmem:[%s1 + $0x1fb8] sm:$0xff]
        %v1282 = vld [vmem:[%s1 + $0x1fc0] sm:$0xff]
        %v1283 = vld [vmem:[%s1 + $0x1fc8] sm:$0xff]
        %v1284 = vld [vmem:[%s1 + $0x1fd0] sm:$0xff]
        %v1285 = vld [vmem:[%s1 + $0x1fd8] sm:$0xff]
        %v1286 = vld [vmem:[%s1 + $0x1fe0] sm:$0xff]
        %v1287 = vld [vmem:[%s1 + $0x1fe8] sm:$0xff]
        %v1288 = vld [vmem:[%s1 + $0x1ff0] sm:$0xff]
        %v1289 = vld [vmem:[%s1 + $0x1ff8] sm:$0xff]
        %v1290 = vld [vmem:[%s2] sm:$0x1]
        %v1292 = vlaneseq
        %v1293 = vshrl.u32 %v1292, 7
        %v1294 = vsub.s32 0, %v1293
        %v1295 = vrot.slane %v1290, %v1294
        %1297 = vmatprep.subr.mxu0 0.0
        %1298 = vmatpush1.msra.mxu0 %v266
        %1299 = vmatprep.subr.mxu0 0.0
        %1300 = vmatpush1.msra.mxu0 %v267
        %1301 = vmatprep.subr.mxu0 0.0
        %1302 = vmatpush1.msra.mxu0 %v268
        %1303 = vmatprep.subr.mxu0 0.0
        %1304 = vmatpush1.msra.mxu0 %v269
        %1305 = vmatprep.subr.mxu0 0.0
        %1306 = vmatpush1.msra.mxu0 %v270
        %1307 = vmatprep.subr.mxu0 0.0
        %1308 = vmatpush1.msra.mxu0 %v271
        %1309 = vmatprep.subr.mxu0 0.0
        %1310 = vmatpush1.msra.mxu0 %v272
        %1311 = vmatprep.subr.mxu0 0.0
        %1312 = vmatpush1.msra.mxu0 %v273
        %1313 = vmatprep.subr.mxu0 0.0
        %1314 = vmatpush1.msra.mxu0 %v274
        %1315 = vmatprep.subr.mxu0 0.0
        %1316 = vmatpush1.msra.mxu0 %v275
        %1317 = vmatprep.subr.mxu0 0.0
        %1318 = vmatpush1.msra.mxu0 %v276
        %1319 = vmatprep.subr.mxu0 0.0
        %1320 = vmatpush1.msra.mxu0 %v277
        %1321 = vmatprep.subr.mxu0 0.0
        %1322 = vmatpush1.msra.mxu0 %v278
        %1323 = vmatprep.subr.mxu0 0.0
        %1324 = vmatpush1.msra.mxu0 %v279
        %1325 = vmatprep.subr.mxu0 0.0
        %1326 = vmatpush1.msra.mxu0 %v280
        %1327 = vmatprep.subr.mxu0 0.0
        %1328 = vmatpush1.msra.mxu0 %v281
        %1329 = vmatprep.subr.mxu0 0.0
        %1330 = vmatpush1.msra.mxu0 %v282
        %1331 = vmatprep.subr.mxu0 0.0
        %1332 = vmatpush1.msra.mxu0 %v283
        %1333 = vmatprep.subr.mxu0 0.0
        %1334 = vmatpush1.msra.mxu0 %v284
        %1335 = vmatprep.subr.mxu0 0.0
        %1336 = vmatpush1.msra.mxu0 %v285
        %1337 = vmatprep.subr.mxu0 0.0
        %1338 = vmatpush1.msra.mxu0 %v286
        %1339 = vmatprep.subr.mxu0 0.0
        %1340 = vmatpush1.msra.mxu0 %v287
        %1341 = vmatprep.subr.mxu0 0.0
        %1342 = vmatpush1.msra.mxu0 %v288
        %1343 = vmatprep.subr.mxu0 0.0
        %1344 = vmatpush1.msra.mxu0 %v289
        %1345 = vmatprep.subr.mxu0 0.0
        %1346 = vmatpush1.msra.mxu0 %v290
        %1347 = vmatprep.subr.mxu0 0.0
        %1348 = vmatpush1.msra.mxu0 %v291
        %1349 = vmatprep.subr.mxu0 0.0
        %1350 = vmatpush1.msra.mxu0 %v292
        %1351 = vmatprep.subr.mxu0 0.0
        %1352 = vmatpush1.msra.mxu0 %v293
        %1353 = vmatprep.subr.mxu0 0.0
        %1354 = vmatpush1.msra.mxu0 %v294
        %1355 = vmatprep.subr.mxu0 0.0
        %1356 = vmatpush1.msra.mxu0 %v295
        %1357 = vmatprep.subr.mxu0 0.0
        %1358 = vmatpush1.msra.mxu0 %v296
        %1359 = vmatprep.subr.mxu0 0.0
        %1360 = vmatpush1.msra.mxu0 %v297
        %1361 = vmatprep.mubr.f32.mxu0 %v203
        %1362 = vmatmul.mubr.f32.gmra.mrb[0].mxu0 %v202
        %v1363 = vpop.f32.mrb[0].mxu0
        %v1364 = vadd.f32 %v1295, %v1363
        %v1365 = vpop.f32.mrb[0].mxu0
        %1366 = vdwg.mxu0
        %1367 = vmatprep.subr.mxu0 0.0
        %1368 = vmatpush1.msra.mxu0 %v298
        %1369 = vmatprep.subr.mxu0 0.0
        %1370 = vmatpush1.msra.mxu0 %v299
        %1371 = vmatprep.subr.mxu0 0.0
        %1372 = vmatpush1.msra.mxu0 %v300
        %1373 = vmatprep.subr.mxu0 0.0
        %1374 = vmatpush1.msra.mxu0 %v301
        %1375 = vmatprep.subr.mxu0 0.0
        %1376 = vmatpush1.msra.mxu0 %v302
        %1377 = vmatprep.subr.mxu0 0.0
        %1378 = vmatpush1.msra.mxu0 %v303
        %1379 = vmatprep.subr.mxu0 0.0
        %1380 = vmatpush1.msra.mxu0 %v304
        %1381 = vmatprep.subr.mxu0 0.0
        %1382 = vmatpush1.msra.mxu0 %v305
        %1383 = vmatprep.subr.mxu0 0.0
        %1384 = vmatpush1.msra.mxu0 %v306
        %1385 = vmatprep.subr.mxu0 0.0
        %1386 = vmatpush1.msra.mxu0 %v307
        %1387 = vmatprep.subr.mxu0 0.0
        %1388 = vmatpush1.msra.mxu0 %v308
        %1389 = vmatprep.subr.mxu0 0.0
        %1390 = vmatpush1.msra.mxu0 %v309
        %1391 = vmatprep.subr.mxu0 0.0
        %1392 = vmatpush1.msra.mxu0 %v310
        %1393 = vmatprep.subr.mxu0 0.0
        %1394 = vmatpush1.msra.mxu0 %v311
        %1395 = vmatprep.subr.mxu0 0.0
        %1396 = vmatpush1.msra.mxu0 %v312
        %1397 = vmatprep.subr.mxu0 0.0
        %1398 = vmatpush1.msra.mxu0 %v313
        %1399 = vmatprep.subr.mxu0 0.0
        %1400 = vmatpush1.msra.mxu0 %v314
        %1401 = vmatprep.subr.mxu0 0.0
        %1402 = vmatpush1.msra.mxu0 %v315
        %1403 = vmatprep.subr.mxu0 0.0
        %1404 = vmatpush1.msra.mxu0 %v316
        %1405 = vmatprep.subr.mxu0 0.0
        %1406 = vmatpush1.msra.mxu0 %v317
        %1407 = vmatprep.subr.mxu0 0.0
        %1408 = vmatpush1.msra.mxu0 %v318
        %1409 = vmatprep.subr.mxu0 0.0
        %1410 = vmatpush1.msra.mxu0 %v319
        %1411 = vmatprep.subr.mxu0 0.0
        %1412 = vmatpush1.msra.mxu0 %v320
        %1413 = vmatprep.subr.mxu0 0.0
        %1414 = vmatpush1.msra.mxu0 %v321
        %1415 = vmatprep.subr.mxu0 0.0
        %1416 = vmatpush1.msra.mxu0 %v322
        %1417 = vmatprep.subr.mxu0 0.0
        %1418 = vmatpush1.msra.mxu0 %v323
        %1419 = vmatprep.subr.mxu0 0.0
        %1420 = vmatpush1.msra.mxu0 %v324
        %1421 = vmatprep.subr.mxu0 0.0
        %1422 = vmatpush1.msra.mxu0 %v325
        %1423 = vmatprep.subr.mxu0 0.0
        %1424 = vmatpush1.msra.mxu0 %v326
        %1425 = vmatprep.subr.mxu0 0.0
        %1426 = vmatpush1.msra.mxu0 %v327
        %1427 = vmatprep.subr.mxu0 0.0
        %1428 = vmatpush1.msra.mxu0 %v328
        %1429 = vmatprep.subr.mxu0 0.0
        %1430 = vmatpush1.msra.mxu0 %v329
        %1431 = vmatprep.mubr.f32.mxu0 %v205
        %1432 = vmatmul.mubr.f32.gmra.mrb[0].mxu0 %v204
        %v1433 = vpop.f32.mrb[0].mxu0
        %v1434 = vadd.f32 %v1364, %v1433
        %v1435 = vpop.f32.mrb[0].mxu0
        %1436 = vdwg.mxu0
        %1437 = vmatprep.subr.mxu0 0.0
        %1438 = vmatpush1.msra.mxu0 %v330
        %1439 = vmatprep.subr.mxu0 0.0
        %1440 = vmatpush1.msra.mxu0 %v331
        %1441 = vmatprep.subr.mxu0 0.0
        %1442 = vmatpush1.msra.mxu0 %v332
        %1443 = vmatprep.subr.mxu0 0.0
        %1444 = vmatpush1.msra.mxu0 %v333
        %1445 = vmatprep.subr.mxu0 0.0
        %1446 = vmatpush1.msra.mxu0 %v334
        %1447 = vmatprep.subr.mxu0 0.0
        %1448 = vmatpush1.msra.mxu0 %v335
        %1449 = vmatprep.subr.mxu0 0.0
        %1450 = vmatpush1.msra.mxu0 %v336
        %1451 = vmatprep.subr.mxu0 0.0
        %1452 = vmatpush1.msra.mxu0 %v337
        %1453 = vmatprep.subr.mxu0 0.0
        %1454 = vmatpush1.msra.mxu0 %v338
        %1455 = vmatprep.subr.mxu0 0.0
        %1456 = vmatpush1.msra.mxu0 %v339
        %1457 = vmatprep.subr.mxu0 0.0
        %1458 = vmatpush1.msra.mxu0 %v340
        %1459 = vmatprep.subr.mxu0 0.0
        %1460 = vmatpush1.msra.mxu0 %v341
        %1461 = vmatprep.subr.mxu0 0.0
        %1462 = vmatpush1.msra.mxu0 %v342
        %1463 = vmatprep.subr.mxu0 0.0
        %1464 = vmatpush1.msra.mxu0 %v343
        %1465 = vmatprep.subr.mxu0 0.0
        %1466 = vmatpush1.msra.mxu0 %v344
        %1467 = vmatprep.subr.mxu0 0.0
        %1468 = vmatpush1.msra.mxu0 %v345
        %1469 = vmatprep.subr.mxu0 0.0
        %1470 = vmatpush1.msra.mxu0 %v346
        %1471 = vmatprep.subr.mxu0 0.0
        %1472 = vmatpush1.msra.mxu0 %v347
        %1473 = vmatprep.subr.mxu0 0.0
        %1474 = vmatpush1.msra.mxu0 %v348
        %1475 = vmatprep.subr.mxu0 0.0
        %1476 = vmatpush1.msra.mxu0 %v349
        %1477 = vmatprep.subr.mxu0 0.0
        %1478 = vmatpush1.msra.mxu0 %v350
        %1479 = vmatprep.subr.mxu0 0.0
        %1480 = vmatpush1.msra.mxu0 %v351
        %1481 = vmatprep.subr.mxu0 0.0
        %1482 = vmatpush1.msra.mxu0 %v352
        %1483 = vmatprep.subr.mxu0 0.0
        %1484 = vmatpush1.msra.mxu0 %v353
        %1485 = vmatprep.subr.mxu0 0.0
        %1486 = vmatpush1.msra.mxu0 %v354
        %1487 = vmatprep.subr.mxu0 0.0
        %1488 = vmatpush1.msra.mxu0 %v355
        %1489 = vmatprep.subr.mxu0 0.0
        %1490 = vmatpush1.msra.mxu0 %v356
        %1491 = vmatprep.subr.mxu0 0.0
        %1492 = vmatpush1.msra.mxu0 %v357
        %1493 = vmatprep.subr.mxu0 0.0
        %1494 = vmatpush1.msra.mxu0 %v358
        %1495 = vmatprep.subr.mxu0 0.0
        %1496 = vmatpush1.msra.mxu0 %v359
        %1497 = vmatprep.subr.mxu0 0.0
        %1498 = vmatpush1.msra.mxu0 %v360
        %1499 = vmatprep.subr.mxu0 0.0
        %1500 = vmatpush1.msra.mxu0 %v361
        %1501 = vmatprep.mubr.f32.mxu0 %v207
        %1502 = vmatmul.mubr.f32.gmra.mrb[0].mxu0 %v206
        %v1503 = vpop.f32.mrb[0].mxu0
        %v1504 = vadd.f32 %v1434, %v1503
        %v1505 = vpop.f32.mrb[0].mxu0
        %1506 = vdwg.mxu0
        %1507 = vmatprep.subr.mxu0 0.0
        %1508 = vmatpush1.msra.mxu0 %v362
        %1509 = vmatprep.subr.mxu0 0.0
        %1510 = vmatpush1.msra.mxu0 %v363
        %1511 = vmatprep.subr.mxu0 0.0
        %1512 = vmatpush1.msra.mxu0 %v364
        %1513 = vmatprep.subr.mxu0 0.0
        %1514 = vmatpush1.msra.mxu0 %v365
        %1515 = vmatprep.subr.mxu0 0.0
        %1516 = vmatpush1.msra.mxu0 %v366
        %1517 = vmatprep.subr.mxu0 0.0
        %1518 = vmatpush1.msra.mxu0 %v367
        %1519 = vmatprep.subr.mxu0 0.0
        %1520 = vmatpush1.msra.mxu0 %v368
        %1521 = vmatprep.subr.mxu0 0.0
        %1522 = vmatpush1.msra.mxu0 %v369
        %1523 = vmatprep.subr.mxu0 0.0
        %1524 = vmatpush1.msra.mxu0 %v370
        %1525 = vmatprep.subr.mxu0 0.0
        %1526 = vmatpush1.msra.mxu0 %v371
        %1527 = vmatprep.subr.mxu0 0.0
        %1528 = vmatpush1.msra.mxu0 %v372
        %1529 = vmatprep.subr.mxu0 0.0
        %1530 = vmatpush1.msra.mxu0 %v373
        %1531 = vmatprep.subr.mxu0 0.0
        %1532 = vmatpush1.msra.mxu0 %v374
        %1533 = vmatprep.subr.mxu0 0.0
        %1534 = vmatpush1.msra.mxu0 %v375
        %1535 = vmatprep.subr.mxu0 0.0
        %1536 = vmatpush1.msra.mxu0 %v376
        %1537 = vmatprep.subr.mxu0 0.0
        %1538 = vmatpush1.msra.mxu0 %v377
        %1539 = vmatprep.subr.mxu0 0.0
        %1540 = vmatpush1.msra.mxu0 %v378
        %1541 = vmatprep.subr.mxu0 0.0
        %1542 = vmatpush1.msra.mxu0 %v379
        %1543 = vmatprep.subr.mxu0 0.0
        %1544 = vmatpush1.msra.mxu0 %v380
        %1545 = vmatprep.subr.mxu0 0.0
        %1546 = vmatpush1.msra.mxu0 %v381
        %1547 = vmatprep.subr.mxu0 0.0
        %1548 = vmatpush1.msra.mxu0 %v382
        %1549 = vmatprep.subr.mxu0 0.0
        %1550 = vmatpush1.msra.mxu0 %v383
        %1551 = vmatprep.subr.mxu0 0.0
        %1552 = vmatpush1.msra.mxu0 %v384
        %1553 = vmatprep.subr.mxu0 0.0
        %1554 = vmatpush1.msra.mxu0 %v385
        %1555 = vmatprep.subr.mxu0 0.0
        %1556 = vmatpush1.msra.mxu0 %v386
        %1557 = vmatprep.subr.mxu0 0.0
        %1558 = vmatpush1.msra.mxu0 %v387
        %1559 = vmatprep.subr.mxu0 0.0
        %1560 = vmatpush1.msra.mxu0 %v388
        %1561 = vmatprep.subr.mxu0 0.0
        %1562 = vmatpush1.msra.mxu0 %v389
        %1563 = vmatprep.subr.mxu0 0.0
        %1564 = vmatpush1.msra.mxu0 %v390
        %1565 = vmatprep.subr.mxu0 0.0
        %1566 = vmatpush1.msra.mxu0 %v391
        %1567 = vmatprep.subr.mxu0 0.0
        %1568 = vmatpush1.msra.mxu0 %v392
        %1569 = vmatprep.subr.mxu0 0.0
        %1570 = vmatpush1.msra.mxu0 %v393
        %1571 = vmatprep.mubr.f32.mxu0 %v209
        %1572 = vmatmul.mubr.f32.gmra.mrb[0].mxu0 %v208
        %v1573 = vpop.f32.mrb[0].mxu0
        %v1574 = vadd.f32 %v1504, %v1573
        %v1575 = vpop.f32.mrb[0].mxu0
        %1576 = vdwg.mxu0
        %1577 = vmatprep.subr.mxu0 0.0
        %1578 = vmatpush1.msra.mxu0 %v394
        %1579 = vmatprep.subr.mxu0 0.0
        %1580 = vmatpush1.msra.mxu0 %v395
        %1581 = vmatprep.subr.mxu0 0.0
        %1582 = vmatpush1.msra.mxu0 %v396
        %1583 = vmatprep.subr.mxu0 0.0
        %1584 = vmatpush1.msra.mxu0 %v397
        %1585 = vmatprep.subr.mxu0 0.0
        %1586 = vmatpush1.msra.mxu0 %v398
        %1587 = vmatprep.subr.mxu0 0.0
        %1588 = vmatpush1.msra.mxu0 %v399
        %1589 = vmatprep.subr.mxu0 0.0
        %1590 = vmatpush1.msra.mxu0 %v400
        %1591 = vmatprep.subr.mxu0 0.0
        %1592 = vmatpush1.msra.mxu0 %v401
        %1593 = vmatprep.subr.mxu0 0.0
        %1594 = vmatpush1.msra.mxu0 %v402
        %1595 = vmatprep.subr.mxu0 0.0
        %1596 = vmatpush1.msra.mxu0 %v403
        %1597 = vmatprep.subr.mxu0 0.0
        %1598 = vmatpush1.msra.mxu0 %v404
        %1599 = vmatprep.subr.mxu0 0.0
        %1600 = vmatpush1.msra.mxu0 %v405
        %1601 = vmatprep.subr.mxu0 0.0
        %1602 = vmatpush1.msra.mxu0 %v406
        %1603 = vmatprep.subr.mxu0 0.0
        %1604 = vmatpush1.msra.mxu0 %v407
        %1605 = vmatprep.subr.mxu0 0.0
        %1606 = vmatpush1.msra.mxu0 %v408
        %1607 = vmatprep.subr.mxu0 0.0
        %1608 = vmatpush1.msra.mxu0 %v409
        %1609 = vmatprep.subr.mxu0 0.0
        %1610 = vmatpush1.msra.mxu0 %v410
        %1611 = vmatprep.subr.mxu0 0.0
        %1612 = vmatpush1.msra.mxu0 %v411
        %1613 = vmatprep.subr.mxu0 0.0
        %1614 = vmatpush1.msra.mxu0 %v412
        %1615 = vmatprep.subr.mxu0 0.0
        %1616 = vmatpush1.msra.mxu0 %v413
        %1617 = vmatprep.subr.mxu0 0.0
        %1618 = vmatpush1.msra.mxu0 %v414
        %1619 = vmatprep.subr.mxu0 0.0
        %1620 = vmatpush1.msra.mxu0 %v415
        %1621 = vmatprep.subr.mxu0 0.0
        %1622 = vmatpush1.msra.mxu0 %v416
        %1623 = vmatprep.subr.mxu0 0.0
        %1624 = vmatpush1.msra.mxu0 %v417
        %1625 = vmatprep.subr.mxu0 0.0
        %1626 = vmatpush1.msra.mxu0 %v418
        %1627 = vmatprep.subr.mxu0 0.0
        %1628 = vmatpush1.msra.mxu0 %v419
        %1629 = vmatprep.subr.mxu0 0.0
        %1630 = vmatpush1.msra.mxu0 %v420
        %1631 = vmatprep.subr.mxu0 0.0
        %1632 = vmatpush1.msra.mxu0 %v421
        %1633 = vmatprep.subr.mxu0 0.0
        %1634 = vmatpush1.msra.mxu0 %v422
        %1635 = vmatprep.subr.mxu0 0.0
        %1636 = vmatpush1.msra.mxu0 %v423
        %1637 = vmatprep.subr.mxu0 0.0
        %1638 = vmatpush1.msra.mxu0 %v424
        %1639 = vmatprep.subr.mxu0 0.0
        %1640 = vmatpush1.msra.mxu0 %v425
        %1641 = vmatprep.mubr.f32.mxu0 %v211
        %1642 = vmatmul.mubr.f32.gmra.mrb[0].mxu0 %v210
        %v1643 = vpop.f32.mrb[0].mxu0
        %v1644 = vadd.f32 %v1574, %v1643
        %v1645 = vpop.f32.mrb[0].mxu0
        %1646 = vdwg.mxu0
        %1647 = vmatprep.subr.mxu0 0.0
        %1648 = vmatpush1.msra.mxu0 %v426
        %1649 = vmatprep.subr.mxu0 0.0
        %1650 = vmatpush1.msra.mxu0 %v427
        %1651 = vmatprep.subr.mxu0 0.0
        %1652 = vmatpush1.msra.mxu0 %v428
        %1653 = vmatprep.subr.mxu0 0.0
        %1654 = vmatpush1.msra.mxu0 %v429
        %1655 = vmatprep.subr.mxu0 0.0
        %1656 = vmatpush1.msra.mxu0 %v430
        %1657 = vmatprep.subr.mxu0 0.0
        %1658 = vmatpush1.msra.mxu0 %v431
        %1659 = vmatprep.subr.mxu0 0.0
        %1660 = vmatpush1.msra.mxu0 %v432
        %1661 = vmatprep.subr.mxu0 0.0
        %1662 = vmatpush1.msra.mxu0 %v433
        %1663 = vmatprep.subr.mxu0 0.0
        %1664 = vmatpush1.msra.mxu0 %v434
        %1665 = vmatprep.subr.mxu0 0.0
        %1666 = vmatpush1.msra.mxu0 %v435
        %1667 = vmatprep.subr.mxu0 0.0
        %1668 = vmatpush1.msra.mxu0 %v436
        %1669 = vmatprep.subr.mxu0 0.0
        %1670 = vmatpush1.msra.mxu0 %v437
        %1671 = vmatprep.subr.mxu0 0.0
        %1672 = vmatpush1.msra.mxu0 %v438
        %1673 = vmatprep.subr.mxu0 0.0
        %1674 = vmatpush1.msra.mxu0 %v439
        %1675 = vmatprep.subr.mxu0 0.0
        %1676 = vmatpush1.msra.mxu0 %v440
        %1677 = vmatprep.subr.mxu0 0.0
        %1678 = vmatpush1.msra.mxu0 %v441
        %1679 = vmatprep.subr.mxu0 0.0
        %1680 = vmatpush1.msra.mxu0 %v442
        %1681 = vmatprep.subr.mxu0 0.0
        %1682 = vmatpush1.msra.mxu0 %v443
        %1683 = vmatprep.subr.mxu0 0.0
        %1684 = vmatpush1.msra.mxu0 %v444
        %1685 = vmatprep.subr.mxu0 0.0
        %1686 = vmatpush1.msra.mxu0 %v445
        %1687 = vmatprep.subr.mxu0 0.0
        %1688 = vmatpush1.msra.mxu0 %v446
        %1689 = vmatprep.subr.mxu0 0.0
        %1690 = vmatpush1.msra.mxu0 %v447
        %1691 = vmatprep.subr.mxu0 0.0
        %1692 = vmatpush1.msra.mxu0 %v448
        %1693 = vmatprep.subr.mxu0 0.0
        %1694 = vmatpush1.msra.mxu0 %v449
        %1695 = vmatprep.subr.mxu0 0.0
        %1696 = vmatpush1.msra.mxu0 %v450
        %1697 = vmatprep.subr.mxu0 0.0
        %1698 = vmatpush1.msra.mxu0 %v451
        %1699 = vmatprep.subr.mxu0 0.0
        %1700 = vmatpush1.msra.mxu0 %v452
        %1701 = vmatprep.subr.mxu0 0.0
        %1702 = vmatpush1.msra.mxu0 %v453
        %1703 = vmatprep.subr.mxu0 0.0
        %1704 = vmatpush1.msra.mxu0 %v454
        %1705 = vmatprep.subr.mxu0 0.0
        %1706 = vmatpush1.msra.mxu0 %v455
        %1707 = vmatprep.subr.mxu0 0.0
        %1708 = vmatpush1.msra.mxu0 %v456
        %1709 = vmatprep.subr.mxu0 0.0
        %1710 = vmatpush1.msra.mxu0 %v457
        %1711 = vmatprep.mubr.f32.mxu0 %v213
        %1712 = vmatmul.mubr.f32.gmra.mrb[0].mxu0 %v212
        %v1713 = vpop.f32.mrb[0].mxu0
        %v1714 = vadd.f32 %v1644, %v1713
        %v1715 = vpop.f32.mrb[0].mxu0
        %1716 = vdwg.mxu0
        %1717 = vmatprep.subr.mxu0 0.0
        %1718 = vmatpush1.msra.mxu0 %v458
        %1719 = vmatprep.subr.mxu0 0.0
        %1720 = vmatpush1.msra.mxu0 %v459
        %1721 = vmatprep.subr.mxu0 0.0
        %1722 = vmatpush1.msra.mxu0 %v460
        %1723 = vmatprep.subr.mxu0 0.0
        %1724 = vmatpush1.msra.mxu0 %v461
        %1725 = vmatprep.subr.mxu0 0.0
        %1726 = vmatpush1.msra.mxu0 %v462
        %1727 = vmatprep.subr.mxu0 0.0
        %1728 = vmatpush1.msra.mxu0 %v463
        %1729 = vmatprep.subr.mxu0 0.0
        %1730 = vmatpush1.msra.mxu0 %v464
        %1731 = vmatprep.subr.mxu0 0.0
        %1732 = vmatpush1.msra.mxu0 %v465
        %1733 = vmatprep.subr.mxu0 0.0
        %1734 = vmatpush1.msra.mxu0 %v466
        %1735 = vmatprep.subr.mxu0 0.0
        %1736 = vmatpush1.msra.mxu0 %v467
        %1737 = vmatprep.subr.mxu0 0.0
        %1738 = vmatpush1.msra.mxu0 %v468
        %1739 = vmatprep.subr.mxu0 0.0
        %1740 = vmatpush1.msra.mxu0 %v469
        %1741 = vmatprep.subr.mxu0 0.0
        %1742 = vmatpush1.msra.mxu0 %v470
        %1743 = vmatprep.subr.mxu0 0.0
        %1744 = vmatpush1.msra.mxu0 %v471
        %1745 = vmatprep.subr.mxu0 0.0
        %1746 = vmatpush1.msra.mxu0 %v472
        %1747 = vmatprep.subr.mxu0 0.0
        %1748 = vmatpush1.msra.mxu0 %v473
        %1749 = vmatprep.subr.mxu0 0.0
        %1750 = vmatpush1.msra.mxu0 %v474
        %1751 = vmatprep.subr.mxu0 0.0
        %1752 = vmatpush1.msra.mxu0 %v475
        %1753 = vmatprep.subr.mxu0 0.0
        %1754 = vmatpush1.msra.mxu0 %v476
        %1755 = vmatprep.subr.mxu0 0.0
        %1756 = vmatpush1.msra.mxu0 %v477
        %1757 = vmatprep.subr.mxu0 0.0
        %1758 = vmatpush1.msra.mxu0 %v478
        %1759 = vmatprep.subr.mxu0 0.0
        %1760 = vmatpush1.msra.mxu0 %v479
        %1761 = vmatprep.subr.mxu0 0.0
        %1762 = vmatpush1.msra.mxu0 %v480
        %1763 = vmatprep.subr.mxu0 0.0
        %1764 = vmatpush1.msra.mxu0 %v481
        %1765 = vmatprep.subr.mxu0 0.0
        %1766 = vmatpush1.msra.mxu0 %v482
        %1767 = vmatprep.subr.mxu0 0.0
        %1768 = vmatpush1.msra.mxu0 %v483
        %1769 = vmatprep.subr.mxu0 0.0
        %1770 = vmatpush1.msra.mxu0 %v484
        %1771 = vmatprep.subr.mxu0 0.0
        %1772 = vmatpush1.msra.mxu0 %v485
        %1773 = vmatprep.subr.mxu0 0.0
        %1774 = vmatpush1.msra.mxu0 %v486
        %1775 = vmatprep.subr.mxu0 0.0
        %1776 = vmatpush1.msra.mxu0 %v487
        %1777 = vmatprep.subr.mxu0 0.0
        %1778 = vmatpush1.msra.mxu0 %v488
        %1779 = vmatprep.subr.mxu0 0.0
        %1780 = vmatpush1.msra.mxu0 %v489
        %1781 = vmatprep.mubr.f32.mxu0 %v215
        %1782 = vmatmul.mubr.f32.gmra.mrb[0].mxu0 %v214
        %v1783 = vpop.f32.mrb[0].mxu0
        %v1784 = vadd.f32 %v1714, %v1783
        %v1785 = vpop.f32.mrb[0].mxu0
        %1786 = vdwg.mxu0
        %1787 = vmatprep.subr.mxu0 0.0
        %1788 = vmatpush1.msra.mxu0 %v490
        %1789 = vmatprep.subr.mxu0 0.0
        %1790 = vmatpush1.msra.mxu0 %v491
        %1791 = vmatprep.subr.mxu0 0.0
        %1792 = vmatpush1.msra.mxu0 %v492
        %1793 = vmatprep.subr.mxu0 0.0
        %1794 = vmatpush1.msra.mxu0 %v493
        %1795 = vmatprep.subr.mxu0 0.0
        %1796 = vmatpush1.msra.mxu0 %v494
        %1797 = vmatprep.subr.mxu0 0.0
        %1798 = vmatpush1.msra.mxu0 %v495
        %1799 = vmatprep.subr.mxu0 0.0
        %1800 = vmatpush1.msra.mxu0 %v496
        %1801 = vmatprep.subr.mxu0 0.0
        %1802 = vmatpush1.msra.mxu0 %v497
        %1803 = vmatprep.subr.mxu0 0.0
        %1804 = vmatpush1.msra.mxu0 %v498
        %1805 = vmatprep.subr.mxu0 0.0
        %1806 = vmatpush1.msra.mxu0 %v499
        %1807 = vmatprep.subr.mxu0 0.0
        %1808 = vmatpush1.msra.mxu0 %v500
        %1809 = vmatprep.subr.mxu0 0.0
        %1810 = vmatpush1.msra.mxu0 %v501
        %1811 = vmatprep.subr.mxu0 0.0
        %1812 = vmatpush1.msra.mxu0 %v502
        %1813 = vmatprep.subr.mxu0 0.0
        %1814 = vmatpush1.msra.mxu0 %v503
        %1815 = vmatprep.subr.mxu0 0.0
        %1816 = vmatpush1.msra.mxu0 %v504
        %1817 = vmatprep.subr.mxu0 0.0
        %1818 = vmatpush1.msra.mxu0 %v505
        %1819 = vmatprep.subr.mxu0 0.0
        %1820 = vmatpush1.msra.mxu0 %v506
        %1821 = vmatprep.subr.mxu0 0.0
        %1822 = vmatpush1.msra.mxu0 %v507
        %1823 = vmatprep.subr.mxu0 0.0
        %1824 = vmatpush1.msra.mxu0 %v508
        %1825 = vmatprep.subr.mxu0 0.0
        %1826 = vmatpush1.msra.mxu0 %v509
        %1827 = vmatprep.subr.mxu0 0.0
        %1828 = vmatpush1.msra.mxu0 %v510
        %1829 = vmatprep.subr.mxu0 0.0
        %1830 = vmatpush1.msra.mxu0 %v511
        %1831 = vmatprep.subr.mxu0 0.0
        %1832 = vmatpush1.msra.mxu0 %v512
        %1833 = vmatprep.subr.mxu0 0.0
        %1834 = vmatpush1.msra.mxu0 %v513
        %1835 = vmatprep.subr.mxu0 0.0
        %1836 = vmatpush1.msra.mxu0 %v514
        %1837 = vmatprep.subr.mxu0 0.0
        %1838 = vmatpush1.msra.mxu0 %v515
        %1839 = vmatprep.subr.mxu0 0.0
        %1840 = vmatpush1.msra.mxu0 %v516
        %1841 = vmatprep.subr.mxu0 0.0
        %1842 = vmatpush1.msra.mxu0 %v517
        %1843 = vmatprep.subr.mxu0 0.0
        %1844 = vmatpush1.msra.mxu0 %v518
        %1845 = vmatprep.subr.mxu0 0.0
        %1846 = vmatpush1.msra.mxu0 %v519
        %1847 = vmatprep.subr.mxu0 0.0
        %1848 = vmatpush1.msra.mxu0 %v520
        %1849 = vmatprep.subr.mxu0 0.0
        %1850 = vmatpush1.msra.mxu0 %v521
        %1851 = vmatprep.mubr.f32.mxu0 %v217
        %1852 = vmatmul.mubr.f32.gmra.mrb[0].mxu0 %v216
        %v1853 = vpop.f32.mrb[0].mxu0
        %v1854 = vadd.f32 %v1784, %v1853
        %v1855 = vpop.f32.mrb[0].mxu0
        %1856 = vdwg.mxu0
        %1857 = vmatprep.subr.mxu0 0.0
        %1858 = vmatpush1.msra.mxu0 %v522
        %1859 = vmatprep.subr.mxu0 0.0
        %1860 = vmatpush1.msra.mxu0 %v523
        %1861 = vmatprep.subr.mxu0 0.0
        %1862 = vmatpush1.msra.mxu0 %v524
        %1863 = vmatprep.subr.mxu0 0.0
        %1864 = vmatpush1.msra.mxu0 %v525
        %1865 = vmatprep.subr.mxu0 0.0
        %1866 = vmatpush1.msra.mxu0 %v526
        %1867 = vmatprep.subr.mxu0 0.0
        %1868 = vmatpush1.msra.mxu0 %v527
        %1869 = vmatprep.subr.mxu0 0.0
        %1870 = vmatpush1.msra.mxu0 %v528
        %1871 = vmatprep.subr.mxu0 0.0
        %1872 = vmatpush1.msra.mxu0 %v529
        %1873 = vmatprep.subr.mxu0 0.0
        %1874 = vmatpush1.msra.mxu0 %v530
        %1875 = vmatprep.subr.mxu0 0.0
        %1876 = vmatpush1.msra.mxu0 %v531
        %1877 = vmatprep.subr.mxu0 0.0
        %1878 = vmatpush1.msra.mxu0 %v532
        %1879 = vmatprep.subr.mxu0 0.0
        %1880 = vmatpush1.msra.mxu0 %v533
        %1881 = vmatprep.subr.mxu0 0.0
        %1882 = vmatpush1.msra.mxu0 %v534
        %1883 = vmatprep.subr.mxu0 0.0
        %1884 = vmatpush1.msra.mxu0 %v535
        %1885 = vmatprep.subr.mxu0 0.0
        %1886 = vmatpush1.msra.mxu0 %v536
        %1887 = vmatprep.subr.mxu0 0.0
        %1888 = vmatpush1.msra.mxu0 %v537
        %1889 = vmatprep.subr.mxu0 0.0
        %1890 = vmatpush1.msra.mxu0 %v538
        %1891 = vmatprep.subr.mxu0 0.0
        %1892 = vmatpush1.msra.mxu0 %v539
        %1893 = vmatprep.subr.mxu0 0.0
        %1894 = vmatpush1.msra.mxu0 %v540
        %1895 = vmatprep.subr.mxu0 0.0
        %1896 = vmatpush1.msra.mxu0 %v541
        %1897 = vmatprep.subr.mxu0 0.0
        %1898 = vmatpush1.msra.mxu0 %v542
        %1899 = vmatprep.subr.mxu0 0.0
        %1900 = vmatpush1.msra.mxu0 %v543
        %1901 = vmatprep.subr.mxu0 0.0
        %1902 = vmatpush1.msra.mxu0 %v544
        %1903 = vmatprep.subr.mxu0 0.0
        %1904 = vmatpush1.msra.mxu0 %v545
        %1905 = vmatprep.subr.mxu0 0.0
        %1906 = vmatpush1.msra.mxu0 %v546
        %1907 = vmatprep.subr.mxu0 0.0
        %1908 = vmatpush1.msra.mxu0 %v547
        %1909 = vmatprep.subr.mxu0 0.0
        %1910 = vmatpush1.msra.mxu0 %v548
        %1911 = vmatprep.subr.mxu0 0.0
        %1912 = vmatpush1.msra.mxu0 %v549
        %1913 = vmatprep.subr.mxu0 0.0
        %1914 = vmatpush1.msra.mxu0 %v550
        %1915 = vmatprep.subr.mxu0 0.0
        %1916 = vmatpush1.msra.mxu0 %v551
        %1917 = vmatprep.subr.mxu0 0.0
        %1918 = vmatpush1.msra.mxu0 %v552
        %1919 = vmatprep.subr.mxu0 0.0
        %1920 = vmatpush1.msra.mxu0 %v553
        %1921 = vmatprep.mubr.f32.mxu0 %v219
        %1922 = vmatmul.mubr.f32.gmra.mrb[0].mxu0 %v218
        %v1923 = vpop.f32.mrb[0].mxu0
        %v1924 = vadd.f32 %v1854, %v1923
        %v1925 = vpop.f32.mrb[0].mxu0
        %1926 = vdwg.mxu0
        %1927 = vmatprep.subr.mxu0 0.0
        %1928 = vmatpush1.msra.mxu0 %v554
        %1929 = vmatprep.subr.mxu0 0.0
        %1930 = vmatpush1.msra.mxu0 %v555
        %1931 = vmatprep.subr.mxu0 0.0
        %1932 = vmatpush1.msra.mxu0 %v556
        %1933 = vmatprep.subr.mxu0 0.0
        %1934 = vmatpush1.msra.mxu0 %v557
        %1935 = vmatprep.subr.mxu0 0.0
        %1936 = vmatpush1.msra.mxu0 %v558
        %1937 = vmatprep.subr.mxu0 0.0
        %1938 = vmatpush1.msra.mxu0 %v559
        %1939 = vmatprep.subr.mxu0 0.0
        %1940 = vmatpush1.msra.mxu0 %v560
        %1941 = vmatprep.subr.mxu0 0.0
        %1942 = vmatpush1.msra.mxu0 %v561
        %1943 = vmatprep.subr.mxu0 0.0
        %1944 = vmatpush1.msra.mxu0 %v562
        %1945 = vmatprep.subr.mxu0 0.0
        %1946 = vmatpush1.msra.mxu0 %v563
        %1947 = vmatprep.subr.mxu0 0.0
        %1948 = vmatpush1.msra.mxu0 %v564
        %1949 = vmatprep.subr.mxu0 0.0
        %1950 = vmatpush1.msra.mxu0 %v565
        %1951 = vmatprep.subr.mxu0 0.0
        %1952 = vmatpush1.msra.mxu0 %v566
        %1953 = vmatprep.subr.mxu0 0.0
        %1954 = vmatpush1.msra.mxu0 %v567
        %1955 = vmatprep.subr.mxu0 0.0
        %1956 = vmatpush1.msra.mxu0 %v568
        %1957 = vmatprep.subr.mxu0 0.0
        %1958 = vmatpush1.msra.mxu0 %v569
        %1959 = vmatprep.subr.mxu0 0.0
        %1960 = vmatpush1.msra.mxu0 %v570
        %1961 = vmatprep.subr.mxu0 0.0
        %1962 = vmatpush1.msra.mxu0 %v571
        %1963 = vmatprep.subr.mxu0 0.0
        %1964 = vmatpush1.msra.mxu0 %v572
        %1965 = vmatprep.subr.mxu0 0.0
        %1966 = vmatpush1.msra.mxu0 %v573
        %1967 = vmatprep.subr.mxu0 0.0
        %1968 = vmatpush1.msra.mxu0 %v574
        %1969 = vmatprep.subr.mxu0 0.0
        %1970 = vmatpush1.msra.mxu0 %v575
        %1971 = vmatprep.subr.mxu0 0.0
        %1972 = vmatpush1.msra.mxu0 %v576
        %1973 = vmatprep.subr.mxu0 0.0
        %1974 = vmatpush1.msra.mxu0 %v577
        %1975 = vmatprep.subr.mxu0 0.0
        %1976 = vmatpush1.msra.mxu0 %v578
        %1977 = vmatprep.subr.mxu0 0.0
        %1978 = vmatpush1.msra.mxu0 %v579
        %1979 = vmatprep.subr.mxu0 0.0
        %1980 = vmatpush1.msra.mxu0 %v580
        %1981 = vmatprep.subr.mxu0 0.0
        %1982 = vmatpush1.msra.mxu0 %v581
        %1983 = vmatprep.subr.mxu0 0.0
        %1984 = vmatpush1.msra.mxu0 %v582
        %1985 = vmatprep.subr.mxu0 0.0
        %1986 = vmatpush1.msra.mxu0 %v583
        %1987 = vmatprep.subr.mxu0 0.0
        %1988 = vmatpush1.msra.mxu0 %v584
        %1989 = vmatprep.subr.mxu0 0.0
        %1990 = vmatpush1.msra.mxu0 %v585
        %1991 = vmatprep.mubr.f32.mxu0 %v221
        %1992 = vmatmul.mubr.f32.gmra.mrb[0].mxu0 %v220
        %v1993 = vpop.f32.mrb[0].mxu0
        %v1994 = vadd.f32 %v1924, %v1993
        %v1995 = vpop.f32.mrb[0].mxu0
        %1996 = vdwg.mxu0
        %1997 = vmatprep.subr.mxu0 0.0
        %1998 = vmatpush1.msra.mxu0 %v586
        %1999 = vmatprep.subr.mxu0 0.0
        %2000 = vmatpush1.msra.mxu0 %v587
        %2001 = vmatprep.subr.mxu0 0.0
        %2002 = vmatpush1.msra.mxu0 %v588
        %2003 = vmatprep.subr.mxu0 0.0
        %2004 = vmatpush1.msra.mxu0 %v589
        %2005 = vmatprep.subr.mxu0 0.0
        %2006 = vmatpush1.msra.mxu0 %v590
        %2007 = vmatprep.subr.mxu0 0.0
        %2008 = vmatpush1.msra.mxu0 %v591
        %2009 = vmatprep.subr.mxu0 0.0
        %2010 = vmatpush1.msra.mxu0 %v592
        %2011 = vmatprep.subr.mxu0 0.0
        %2012 = vmatpush1.msra.mxu0 %v593
        %2013 = vmatprep.subr.mxu0 0.0
        %2014 = vmatpush1.msra.mxu0 %v594
        %2015 = vmatprep.subr.mxu0 0.0
        %2016 = vmatpush1.msra.mxu0 %v595
        %2017 = vmatprep.subr.mxu0 0.0
        %2018 = vmatpush1.msra.mxu0 %v596
        %2019 = vmatprep.subr.mxu0 0.0
        %2020 = vmatpush1.msra.mxu0 %v597
        %2021 = vmatprep.subr.mxu0 0.0
        %2022 = vmatpush1.msra.mxu0 %v598
        %2023 = vmatprep.subr.mxu0 0.0
        %2024 = vmatpush1.msra.mxu0 %v599
        %2025 = vmatprep.subr.mxu0 0.0
        %2026 = vmatpush1.msra.mxu0 %v600
        %2027 = vmatprep.subr.mxu0 0.0
        %2028 = vmatpush1.msra.mxu0 %v601
        %2029 = vmatprep.subr.mxu0 0.0
        %2030 = vmatpush1.msra.mxu0 %v602
        %2031 = vmatprep.subr.mxu0 0.0
        %2032 = vmatpush1.msra.mxu0 %v603
        %2033 = vmatprep.subr.mxu0 0.0
        %2034 = vmatpush1.msra.mxu0 %v604
        %2035 = vmatprep.subr.mxu0 0.0
        %2036 = vmatpush1.msra.mxu0 %v605
        %2037 = vmatprep.subr.mxu0 0.0
        %2038 = vmatpush1.msra.mxu0 %v606
        %2039 = vmatprep.subr.mxu0 0.0
        %2040 = vmatpush1.msra.mxu0 %v607
        %2041 = vmatprep.subr.mxu0 0.0
        %2042 = vmatpush1.msra.mxu0 %v608
        %2043 = vmatprep.subr.mxu0 0.0
        %2044 = vmatpush1.msra.mxu0 %v609
        %2045 = vmatprep.subr.mxu0 0.0
        %2046 = vmatpush1.msra.mxu0 %v610
        %2047 = vmatprep.subr.mxu0 0.0
        %2048 = vmatpush1.msra.mxu0 %v611
        %2049 = vmatprep.subr.mxu0 0.0
        %2050 = vmatpush1.msra.mxu0 %v612
        %2051 = vmatprep.subr.mxu0 0.0
        %2052 = vmatpush1.msra.mxu0 %v613
        %2053 = vmatprep.subr.mxu0 0.0
        %2054 = vmatpush1.msra.mxu0 %v614
        %2055 = vmatprep.subr.mxu0 0.0
        %2056 = vmatpush1.msra.mxu0 %v615
        %2057 = vmatprep.subr.mxu0 0.0
        %2058 = vmatpush1.msra.mxu0 %v616
        %2059 = vmatprep.subr.mxu0 0.0
        %2060 = vmatpush1.msra.mxu0 %v617
        %2061 = vmatprep.mubr.f32.mxu0 %v223
        %2062 = vmatmul.mubr.f32.gmra.mrb[0].mxu0 %v222
        %v2063 = vpop.f32.mrb[0].mxu0
        %v2064 = vadd.f32 %v1994, %v2063
        %v2065 = vpop.f32.mrb[0].mxu0
        %2066 = vdwg.mxu0
        %2067 = vmatprep.subr.mxu0 0.0
        %2068 = vmatpush1.msra.mxu0 %v618
        %2069 = vmatprep.subr.mxu0 0.0
        %2070 = vmatpush1.msra.mxu0 %v619
        %2071 = vmatprep.subr.mxu0 0.0
        %2072 = vmatpush1.msra.mxu0 %v620
        %2073 = vmatprep.subr.mxu0 0.0
        %2074 = vmatpush1.msra.mxu0 %v621
        %2075 = vmatprep.subr.mxu0 0.0
        %2076 = vmatpush1.msra.mxu0 %v622
        %2077 = vmatprep.subr.mxu0 0.0
        %2078 = vmatpush1.msra.mxu0 %v623
        %2079 = vmatprep.subr.mxu0 0.0
        %2080 = vmatpush1.msra.mxu0 %v624
        %2081 = vmatprep.subr.mxu0 0.0
        %2082 = vmatpush1.msra.mxu0 %v625
        %2083 = vmatprep.subr.mxu0 0.0
        %2084 = vmatpush1.msra.mxu0 %v626
        %2085 = vmatprep.subr.mxu0 0.0
        %2086 = vmatpush1.msra.mxu0 %v627
        %2087 = vmatprep.subr.mxu0 0.0
        %2088 = vmatpush1.msra.mxu0 %v628
        %2089 = vmatprep.subr.mxu0 0.0
        %2090 = vmatpush1.msra.mxu0 %v629
        %2091 = vmatprep.subr.mxu0 0.0
        %2092 = vmatpush1.msra.mxu0 %v630
        %2093 = vmatprep.subr.mxu0 0.0
        %2094 = vmatpush1.msra.mxu0 %v631
        %2095 = vmatprep.subr.mxu0 0.0
        %2096 = vmatpush1.msra.mxu0 %v632
        %2097 = vmatprep.subr.mxu0 0.0
        %2098 = vmatpush1.msra.mxu0 %v633
        %2099 = vmatprep.subr.mxu0 0.0
        %2100 = vmatpush1.msra.mxu0 %v634
        %2101 = vmatprep.subr.mxu0 0.0
        %2102 = vmatpush1.msra.mxu0 %v635
        %2103 = vmatprep.subr.mxu0 0.0
        %2104 = vmatpush1.msra.mxu0 %v636
        %2105 = vmatprep.subr.mxu0 0.0
        %2106 = vmatpush1.msra.mxu0 %v637
        %2107 = vmatprep.subr.mxu0 0.0
        %2108 = vmatpush1.msra.mxu0 %v638
        %2109 = vmatprep.subr.mxu0 0.0
        %2110 = vmatpush1.msra.mxu0 %v639
        %2111 = vmatprep.subr.mxu0 0.0
        %2112 = vmatpush1.msra.mxu0 %v640
        %2113 = vmatprep.subr.mxu0 0.0
        %2114 = vmatpush1.msra.mxu0 %v641
        %2115 = vmatprep.subr.mxu0 0.0
        %2116 = vmatpush1.msra.mxu0 %v642
        %2117 = vmatprep.subr.mxu0 0.0
        %2118 = vmatpush1.msra.mxu0 %v643
        %2119 = vmatprep.subr.mxu0 0.0
        %2120 = vmatpush1.msra.mxu0 %v644
        %2121 = vmatprep.subr.mxu0 0.0
        %2122 = vmatpush1.msra.mxu0 %v645
        %2123 = vmatprep.subr.mxu0 0.0
        %2124 = vmatpush1.msra.mxu0 %v646
        %2125 = vmatprep.subr.mxu0 0.0
        %2126 = vmatpush1.msra.mxu0 %v647
        %2127 = vmatprep.subr.mxu0 0.0
        %2128 = vmatpush1.msra.mxu0 %v648
        %2129 = vmatprep.subr.mxu0 0.0
        %2130 = vmatpush1.msra.mxu0 %v649
        %2131 = vmatprep.mubr.f32.mxu0 %v225
        %2132 = vmatmul.mubr.f32.gmra.mrb[0].mxu0 %v224
        %v2133 = vpop.f32.mrb[0].mxu0
        %v2134 = vadd.f32 %v2064, %v2133
        %v2135 = vpop.f32.mrb[0].mxu0
        %2136 = vdwg.mxu0
        %2137 = vmatprep.subr.mxu0 0.0
        %2138 = vmatpush1.msra.mxu0 %v650
        %2139 = vmatprep.subr.mxu0 0.0
        %2140 = vmatpush1.msra.mxu0 %v651
        %2141 = vmatprep.subr.mxu0 0.0
        %2142 = vmatpush1.msra.mxu0 %v652
        %2143 = vmatprep.subr.mxu0 0.0
        %2144 = vmatpush1.msra.mxu0 %v653
        %2145 = vmatprep.subr.mxu0 0.0
        %2146 = vmatpush1.msra.mxu0 %v654
        %2147 = vmatprep.subr.mxu0 0.0
        %2148 = vmatpush1.msra.mxu0 %v655
        %2149 = vmatprep.subr.mxu0 0.0
        %2150 = vmatpush1.msra.mxu0 %v656
        %2151 = vmatprep.subr.mxu0 0.0
        %2152 = vmatpush1.msra.mxu0 %v657
        %2153 = vmatprep.subr.mxu0 0.0
        %2154 = vmatpush1.msra.mxu0 %v658
        %2155 = vmatprep.subr.mxu0 0.0
        %2156 = vmatpush1.msra.mxu0 %v659
        %2157 = vmatprep.subr.mxu0 0.0
        %2158 = vmatpush1.msra.mxu0 %v660
        %2159 = vmatprep.subr.mxu0 0.0
        %2160 = vmatpush1.msra.mxu0 %v661
        %2161 = vmatprep.subr.mxu0 0.0
        %2162 = vmatpush1.msra.mxu0 %v662
        %2163 = vmatprep.subr.mxu0 0.0
        %2164 = vmatpush1.msra.mxu0 %v663
        %2165 = vmatprep.subr.mxu0 0.0
        %2166 = vmatpush1.msra.mxu0 %v664
        %2167 = vmatprep.subr.mxu0 0.0
        %2168 = vmatpush1.msra.mxu0 %v665
        %2169 = vmatprep.subr.mxu0 0.0
        %2170 = vmatpush1.msra.mxu0 %v666
        %2171 = vmatprep.subr.mxu0 0.0
        %2172 = vmatpush1.msra.mxu0 %v667
        %2173 = vmatprep.subr.mxu0 0.0
        %2174 = vmatpush1.msra.mxu0 %v668
        %2175 = vmatprep.subr.mxu0 0.0
        %2176 = vmatpush1.msra.mxu0 %v669
        %2177 = vmatprep.subr.mxu0 0.0
        %2178 = vmatpush1.msra.mxu0 %v670
        %2179 = vmatprep.subr.mxu0 0.0
        %2180 = vmatpush1.msra.mxu0 %v671
        %2181 = vmatprep.subr.mxu0 0.0
        %2182 = vmatpush1.msra.mxu0 %v672
        %2183 = vmatprep.subr.mxu0 0.0
        %2184 = vmatpush1.msra.mxu0 %v673
        %2185 = vmatprep.subr.mxu0 0.0
        %2186 = vmatpush1.msra.mxu0 %v674
        %2187 = vmatprep.subr.mxu0 0.0
        %2188 = vmatpush1.msra.mxu0 %v675
        %2189 = vmatprep.subr.mxu0 0.0
        %2190 = vmatpush1.msra.mxu0 %v676
        %2191 = vmatprep.subr.mxu0 0.0
        %2192 = vmatpush1.msra.mxu0 %v677
        %2193 = vmatprep.subr.mxu0 0.0
        %2194 = vmatpush1.msra.mxu0 %v678
        %2195 = vmatprep.subr.mxu0 0.0
        %2196 = vmatpush1.msra.mxu0 %v679
        %2197 = vmatprep.subr.mxu0 0.0
        %2198 = vmatpush1.msra.mxu0 %v680
        %2199 = vmatprep.subr.mxu0 0.0
        %2200 = vmatpush1.msra.mxu0 %v681
        %2201 = vmatprep.mubr.f32.mxu0 %v227
        %2202 = vmatmul.mubr.f32.gmra.mrb[0].mxu0 %v226
        %v2203 = vpop.f32.mrb[0].mxu0
        %v2204 = vadd.f32 %v2134, %v2203
        %v2205 = vpop.f32.mrb[0].mxu0
        %2206 = vdwg.mxu0
        %2207 = vmatprep.subr.mxu0 0.0
        %2208 = vmatpush1.msra.mxu0 %v682
        %2209 = vmatprep.subr.mxu0 0.0
        %2210 = vmatpush1.msra.mxu0 %v683
        %2211 = vmatprep.subr.mxu0 0.0
        %2212 = vmatpush1.msra.mxu0 %v684
        %2213 = vmatprep.subr.mxu0 0.0
        %2214 = vmatpush1.msra.mxu0 %v685
        %2215 = vmatprep.subr.mxu0 0.0
        %2216 = vmatpush1.msra.mxu0 %v686
        %2217 = vmatprep.subr.mxu0 0.0
        %2218 = vmatpush1.msra.mxu0 %v687
        %2219 = vmatprep.subr.mxu0 0.0
        %2220 = vmatpush1.msra.mxu0 %v688
        %2221 = vmatprep.subr.mxu0 0.0
        %2222 = vmatpush1.msra.mxu0 %v689
        %2223 = vmatprep.subr.mxu0 0.0
        %2224 = vmatpush1.msra.mxu0 %v690
        %2225 = vmatprep.subr.mxu0 0.0
        %2226 = vmatpush1.msra.mxu0 %v691
        %2227 = vmatprep.subr.mxu0 0.0
        %2228 = vmatpush1.msra.mxu0 %v692
        %2229 = vmatprep.subr.mxu0 0.0
        %2230 = vmatpush1.msra.mxu0 %v693
        %2231 = vmatprep.subr.mxu0 0.0
        %2232 = vmatpush1.msra.mxu0 %v694
        %2233 = vmatprep.subr.mxu0 0.0
        %2234 = vmatpush1.msra.mxu0 %v695
        %2235 = vmatprep.subr.mxu0 0.0
        %2236 = vmatpush1.msra.mxu0 %v696
        %2237 = vmatprep.subr.mxu0 0.0
        %2238 = vmatpush1.msra.mxu0 %v697
        %2239 = vmatprep.subr.mxu0 0.0
        %2240 = vmatpush1.msra.mxu0 %v698
        %2241 = vmatprep.subr.mxu0 0.0
        %2242 = vmatpush1.msra.mxu0 %v699
        %2243 = vmatprep.subr.mxu0 0.0
        %2244 = vmatpush1.msra.mxu0 %v700
        %2245 = vmatprep.subr.mxu0 0.0
        %2246 = vmatpush1.msra.mxu0 %v701
        %2247 = vmatprep.subr.mxu0 0.0
        %2248 = vmatpush1.msra.mxu0 %v702
        %2249 = vmatprep.subr.mxu0 0.0
        %2250 = vmatpush1.msra.mxu0 %v703
        %2251 = vmatprep.subr.mxu0 0.0
        %2252 = vmatpush1.msra.mxu0 %v704
        %2253 = vmatprep.subr.mxu0 0.0
        %2254 = vmatpush1.msra.mxu0 %v705
        %2255 = vmatprep.subr.mxu0 0.0
        %2256 = vmatpush1.msra.mxu0 %v706
        %2257 = vmatprep.subr.mxu0 0.0
        %2258 = vmatpush1.msra.mxu0 %v707
        %2259 = vmatprep.subr.mxu0 0.0
        %2260 = vmatpush1.msra.mxu0 %v708
        %2261 = vmatprep.subr.mxu0 0.0
        %2262 = vmatpush1.msra.mxu0 %v709
        %2263 = vmatprep.subr.mxu0 0.0
        %2264 = vmatpush1.msra.mxu0 %v710
        %2265 = vmatprep.subr.mxu0 0.0
        %2266 = vmatpush1.msra.mxu0 %v711
        %2267 = vmatprep.subr.mxu0 0.0
        %2268 = vmatpush1.msra.mxu0 %v712
        %2269 = vmatprep.subr.mxu0 0.0
        %2270 = vmatpush1.msra.mxu0 %v713
        %2271 = vmatprep.mubr.f32.mxu0 %v229
        %2272 = vmatmul.mubr.f32.gmra.mrb[0].mxu0 %v228
        %v2273 = vpop.f32.mrb[0].mxu0
        %v2274 = vadd.f32 %v2204, %v2273
        %v2275 = vpop.f32.mrb[0].mxu0
        %2276 = vdwg.mxu0
        %2277 = vmatprep.subr.mxu0 0.0
        %2278 = vmatpush1.msra.mxu0 %v714
        %2279 = vmatprep.subr.mxu0 0.0
        %2280 = vmatpush1.msra.mxu0 %v715
        %2281 = vmatprep.subr.mxu0 0.0
        %2282 = vmatpush1.msra.mxu0 %v716
        %2283 = vmatprep.subr.mxu0 0.0
        %2284 = vmatpush1.msra.mxu0 %v717
        %2285 = vmatprep.subr.mxu0 0.0
        %2286 = vmatpush1.msra.mxu0 %v718
        %2287 = vmatprep.subr.mxu0 0.0
        %2288 = vmatpush1.msra.mxu0 %v719
        %2289 = vmatprep.subr.mxu0 0.0
        %2290 = vmatpush1.msra.mxu0 %v720
        %2291 = vmatprep.subr.mxu0 0.0
        %2292 = vmatpush1.msra.mxu0 %v721
        %2293 = vmatprep.subr.mxu0 0.0
        %2294 = vmatpush1.msra.mxu0 %v722
        %2295 = vmatprep.subr.mxu0 0.0
        %2296 = vmatpush1.msra.mxu0 %v723
        %2297 = vmatprep.subr.mxu0 0.0
        %2298 = vmatpush1.msra.mxu0 %v724
        %2299 = vmatprep.subr.mxu0 0.0
        %2300 = vmatpush1.msra.mxu0 %v725
        %2301 = vmatprep.subr.mxu0 0.0
        %2302 = vmatpush1.msra.mxu0 %v726
        %2303 = vmatprep.subr.mxu0 0.0
        %2304 = vmatpush1.msra.mxu0 %v727
        %2305 = vmatprep.subr.mxu0 0.0
        %2306 = vmatpush1.msra.mxu0 %v728
        %2307 = vmatprep.subr.mxu0 0.0
        %2308 = vmatpush1.msra.mxu0 %v729
        %2309 = vmatprep.subr.mxu0 0.0
        %2310 = vmatpush1.msra.mxu0 %v730
        %2311 = vmatprep.subr.mxu0 0.0
        %2312 = vmatpush1.msra.mxu0 %v731
        %2313 = vmatprep.subr.mxu0 0.0
        %2314 = vmatpush1.msra.mxu0 %v732
        %2315 = vmatprep.subr.mxu0 0.0
        %2316 = vmatpush1.msra.mxu0 %v733
        %2317 = vmatprep.subr.mxu0 0.0
        %2318 = vmatpush1.msra.mxu0 %v734
        %2319 = vmatprep.subr.mxu0 0.0
        %2320 = vmatpush1.msra.mxu0 %v735
        %2321 = vmatprep.subr.mxu0 0.0
        %2322 = vmatpush1.msra.mxu0 %v736
        %2323 = vmatprep.subr.mxu0 0.0
        %2324 = vmatpush1.msra.mxu0 %v737
        %2325 = vmatprep.subr.mxu0 0.0
        %2326 = vmatpush1.msra.mxu0 %v738
        %2327 = vmatprep.subr.mxu0 0.0
        %2328 = vmatpush1.msra.mxu0 %v739
        %2329 = vmatprep.subr.mxu0 0.0
        %2330 = vmatpush1.msra.mxu0 %v740
        %2331 = vmatprep.subr.mxu0 0.0
        %2332 = vmatpush1.msra.mxu0 %v741
        %2333 = vmatprep.subr.mxu0 0.0
        %2334 = vmatpush1.msra.mxu0 %v742
        %2335 = vmatprep.subr.mxu0 0.0
        %2336 = vmatpush1.msra.mxu0 %v743
        %2337 = vmatprep.subr.mxu0 0.0
        %2338 = vmatpush1.msra.mxu0 %v744
        %2339 = vmatprep.subr.mxu0 0.0
        %2340 = vmatpush1.msra.mxu0 %v745
        %2341 = vmatprep.mubr.f32.mxu0 %v231
        %2342 = vmatmul.mubr.f32.gmra.mrb[0].mxu0 %v230
        %v2343 = vpop.f32.mrb[0].mxu0
        %v2344 = vadd.f32 %v2274, %v2343
        %v2345 = vpop.f32.mrb[0].mxu0
        %2346 = vdwg.mxu0
        %2347 = vmatprep.subr.mxu0 0.0
        %2348 = vmatpush1.msra.mxu0 %v746
        %2349 = vmatprep.subr.mxu0 0.0
        %2350 = vmatpush1.msra.mxu0 %v747
        %2351 = vmatprep.subr.mxu0 0.0
        %2352 = vmatpush1.msra.mxu0 %v748
        %2353 = vmatprep.subr.mxu0 0.0
        %2354 = vmatpush1.msra.mxu0 %v749
        %2355 = vmatprep.subr.mxu0 0.0
        %2356 = vmatpush1.msra.mxu0 %v750
        %2357 = vmatprep.subr.mxu0 0.0
        %2358 = vmatpush1.msra.mxu0 %v751
        %2359 = vmatprep.subr.mxu0 0.0
        %2360 = vmatpush1.msra.mxu0 %v752
        %2361 = vmatprep.subr.mxu0 0.0
        %2362 = vmatpush1.msra.mxu0 %v753
        %2363 = vmatprep.subr.mxu0 0.0
        %2364 = vmatpush1.msra.mxu0 %v754
        %2365 = vmatprep.subr.mxu0 0.0
        %2366 = vmatpush1.msra.mxu0 %v755
        %2367 = vmatprep.subr.mxu0 0.0
        %2368 = vmatpush1.msra.mxu0 %v756
        %2369 = vmatprep.subr.mxu0 0.0
        %2370 = vmatpush1.msra.mxu0 %v757
        %2371 = vmatprep.subr.mxu0 0.0
        %2372 = vmatpush1.msra.mxu0 %v758
        %2373 = vmatprep.subr.mxu0 0.0
        %2374 = vmatpush1.msra.mxu0 %v759
        %2375 = vmatprep.subr.mxu0 0.0
        %2376 = vmatpush1.msra.mxu0 %v760
        %2377 = vmatprep.subr.mxu0 0.0
        %2378 = vmatpush1.msra.mxu0 %v761
        %2379 = vmatprep.subr.mxu0 0.0
        %2380 = vmatpush1.msra.mxu0 %v762
        %2381 = vmatprep.subr.mxu0 0.0
        %2382 = vmatpush1.msra.mxu0 %v763
        %2383 = vmatprep.subr.mxu0 0.0
        %2384 = vmatpush1.msra.mxu0 %v764
        %2385 = vmatprep.subr.mxu0 0.0
        %2386 = vmatpush1.msra.mxu0 %v765
        %2387 = vmatprep.subr.mxu0 0.0
        %2388 = vmatpush1.msra.mxu0 %v766
        %2389 = vmatprep.subr.mxu0 0.0
        %2390 = vmatpush1.msra.mxu0 %v767
        %2391 = vmatprep.subr.mxu0 0.0
        %2392 = vmatpush1.msra.mxu0 %v768
        %2393 = vmatprep.subr.mxu0 0.0
        %2394 = vmatpush1.msra.mxu0 %v769
        %2395 = vmatprep.subr.mxu0 0.0
        %2396 = vmatpush1.msra.mxu0 %v770
        %2397 = vmatprep.subr.mxu0 0.0
        %2398 = vmatpush1.msra.mxu0 %v771
        %2399 = vmatprep.subr.mxu0 0.0
        %2400 = vmatpush1.msra.mxu0 %v772
        %2401 = vmatprep.subr.mxu0 0.0
        %2402 = vmatpush1.msra.mxu0 %v773
        %2403 = vmatprep.subr.mxu0 0.0
        %2404 = vmatpush1.msra.mxu0 %v774
        %2405 = vmatprep.subr.mxu0 0.0
        %2406 = vmatpush1.msra.mxu0 %v775
        %2407 = vmatprep.subr.mxu0 0.0
        %2408 = vmatpush1.msra.mxu0 %v776
        %2409 = vmatprep.subr.mxu0 0.0
        %2410 = vmatpush1.msra.mxu0 %v777
        %2411 = vmatprep.mubr.f32.mxu0 %v233
        %2412 = vmatmul.mubr.f32.gmra.mrb[0].mxu0 %v232
        %v2413 = vpop.f32.mrb[0].mxu0
        %v2414 = vadd.f32 %v2344, %v2413
        %v2415 = vpop.f32.mrb[0].mxu0
        %2416 = vdwg.mxu0
        %2417 = vmatprep.subr.mxu0 0.0
        %2418 = vmatpush1.msra.mxu0 %v778
        %2419 = vmatprep.subr.mxu0 0.0
        %2420 = vmatpush1.msra.mxu0 %v779
        %2421 = vmatprep.subr.mxu0 0.0
        %2422 = vmatpush1.msra.mxu0 %v780
        %2423 = vmatprep.subr.mxu0 0.0
        %2424 = vmatpush1.msra.mxu0 %v781
        %2425 = vmatprep.subr.mxu0 0.0
        %2426 = vmatpush1.msra.mxu0 %v782
        %2427 = vmatprep.subr.mxu0 0.0
        %2428 = vmatpush1.msra.mxu0 %v783
        %2429 = vmatprep.subr.mxu0 0.0
        %2430 = vmatpush1.msra.mxu0 %v784
        %2431 = vmatprep.subr.mxu0 0.0
        %2432 = vmatpush1.msra.mxu0 %v785
        %2433 = vmatprep.subr.mxu0 0.0
        %2434 = vmatpush1.msra.mxu0 %v786
        %2435 = vmatprep.subr.mxu0 0.0
        %2436 = vmatpush1.msra.mxu0 %v787
        %2437 = vmatprep.subr.mxu0 0.0
        %2438 = vmatpush1.msra.mxu0 %v788
        %2439 = vmatprep.subr.mxu0 0.0
        %2440 = vmatpush1.msra.mxu0 %v789
        %2441 = vmatprep.subr.mxu0 0.0
        %2442 = vmatpush1.msra.mxu0 %v790
        %2443 = vmatprep.subr.mxu0 0.0
        %2444 = vmatpush1.msra.mxu0 %v791
        %2445 = vmatprep.subr.mxu0 0.0
        %2446 = vmatpush1.msra.mxu0 %v792
        %2447 = vmatprep.subr.mxu0 0.0
        %2448 = vmatpush1.msra.mxu0 %v793
        %2449 = vmatprep.subr.mxu0 0.0
        %2450 = vmatpush1.msra.mxu0 %v794
        %2451 = vmatprep.subr.mxu0 0.0
        %2452 = vmatpush1.msra.mxu0 %v795
        %2453 = vmatprep.subr.mxu0 0.0
        %2454 = vmatpush1.msra.mxu0 %v796
        %2455 = vmatprep.subr.mxu0 0.0
        %2456 = vmatpush1.msra.mxu0 %v797
        %2457 = vmatprep.subr.mxu0 0.0
        %2458 = vmatpush1.msra.mxu0 %v798
        %2459 = vmatprep.subr.mxu0 0.0
        %2460 = vmatpush1.msra.mxu0 %v799
        %2461 = vmatprep.subr.mxu0 0.0
        %2462 = vmatpush1.msra.mxu0 %v800
        %2463 = vmatprep.subr.mxu0 0.0
        %2464 = vmatpush1.msra.mxu0 %v801
        %2465 = vmatprep.subr.mxu0 0.0
        %2466 = vmatpush1.msra.mxu0 %v802
        %2467 = vmatprep.subr.mxu0 0.0
        %2468 = vmatpush1.msra.mxu0 %v803
        %2469 = vmatprep.subr.mxu0 0.0
        %2470 = vmatpush1.msra.mxu0 %v804
        %2471 = vmatprep.subr.mxu0 0.0
        %2472 = vmatpush1.msra.mxu0 %v805
        %2473 = vmatprep.subr.mxu0 0.0
        %2474 = vmatpush1.msra.mxu0 %v806
        %2475 = vmatprep.subr.mxu0 0.0
        %2476 = vmatpush1.msra.mxu0 %v807
        %2477 = vmatprep.subr.mxu0 0.0
        %2478 = vmatpush1.msra.mxu0 %v808
        %2479 = vmatprep.subr.mxu0 0.0
        %2480 = vmatpush1.msra.mxu0 %v809
        %2481 = vmatprep.mubr.f32.mxu0 %v235
        %2482 = vmatmul.mubr.f32.gmra.mrb[0].mxu0 %v234
        %v2483 = vpop.f32.mrb[0].mxu0
        %v2484 = vadd.f32 %v2414, %v2483
        %v2485 = vpop.f32.mrb[0].mxu0
        %2486 = vdwg.mxu0
        %2487 = vmatprep.subr.mxu0 0.0
        %2488 = vmatpush1.msra.mxu0 %v810
        %2489 = vmatprep.subr.mxu0 0.0
        %2490 = vmatpush1.msra.mxu0 %v811
        %2491 = vmatprep.subr.mxu0 0.0
        %2492 = vmatpush1.msra.mxu0 %v812
        %2493 = vmatprep.subr.mxu0 0.0
        %2494 = vmatpush1.msra.mxu0 %v813
        %2495 = vmatprep.subr.mxu0 0.0
        %2496 = vmatpush1.msra.mxu0 %v814
        %2497 = vmatprep.subr.mxu0 0.0
        %2498 = vmatpush1.msra.mxu0 %v815
        %2499 = vmatprep.subr.mxu0 0.0
        %2500 = vmatpush1.msra.mxu0 %v816
        %2501 = vmatprep.subr.mxu0 0.0
        %2502 = vmatpush1.msra.mxu0 %v817
        %2503 = vmatprep.subr.mxu0 0.0
        %2504 = vmatpush1.msra.mxu0 %v818
        %2505 = vmatprep.subr.mxu0 0.0
        %2506 = vmatpush1.msra.mxu0 %v819
        %2507 = vmatprep.subr.mxu0 0.0
        %2508 = vmatpush1.msra.mxu0 %v820
        %2509 = vmatprep.subr.mxu0 0.0
        %2510 = vmatpush1.msra.mxu0 %v821
        %2511 = vmatprep.subr.mxu0 0.0
        %2512 = vmatpush1.msra.mxu0 %v822
        %2513 = vmatprep.subr.mxu0 0.0
        %2514 = vmatpush1.msra.mxu0 %v823
        %2515 = vmatprep.subr.mxu0 0.0
        %2516 = vmatpush1.msra.mxu0 %v824
        %2517 = vmatprep.subr.mxu0 0.0
        %2518 = vmatpush1.msra.mxu0 %v825
        %2519 = vmatprep.subr.mxu0 0.0
        %2520 = vmatpush1.msra.mxu0 %v826
        %2521 = vmatprep.subr.mxu0 0.0
        %2522 = vmatpush1.msra.mxu0 %v827
        %2523 = vmatprep.subr.mxu0 0.0
        %2524 = vmatpush1.msra.mxu0 %v828
        %2525 = vmatprep.subr.mxu0 0.0
        %2526 = vmatpush1.msra.mxu0 %v829
        %2527 = vmatprep.subr.mxu0 0.0
        %2528 = vmatpush1.msra.mxu0 %v830
        %2529 = vmatprep.subr.mxu0 0.0
        %2530 = vmatpush1.msra.mxu0 %v831
        %2531 = vmatprep.subr.mxu0 0.0
        %2532 = vmatpush1.msra.mxu0 %v832
        %2533 = vmatprep.subr.mxu0 0.0
        %2534 = vmatpush1.msra.mxu0 %v833
        %2535 = vmatprep.subr.mxu0 0.0
        %2536 = vmatpush1.msra.mxu0 %v834
        %2537 = vmatprep.subr.mxu0 0.0
        %2538 = vmatpush1.msra.mxu0 %v835
        %2539 = vmatprep.subr.mxu0 0.0
        %2540 = vmatpush1.msra.mxu0 %v836
        %2541 = vmatprep.subr.mxu0 0.0
        %2542 = vmatpush1.msra.mxu0 %v837
        %2543 = vmatprep.subr.mxu0 0.0
        %2544 = vmatpush1.msra.mxu0 %v838
        %2545 = vmatprep.subr.mxu0 0.0
        %2546 = vmatpush1.msra.mxu0 %v839
        %2547 = vmatprep.subr.mxu0 0.0
        %2548 = vmatpush1.msra.mxu0 %v840
        %2549 = vmatprep.subr.mxu0 0.0
        %2550 = vmatpush1.msra.mxu0 %v841
        %2551 = vmatprep.mubr.f32.mxu0 %v237
        %2552 = vmatmul.mubr.f32.gmra.mrb[0].mxu0 %v236
        %v2553 = vpop.f32.mrb[0].mxu0
        %v2554 = vadd.f32 %v2484, %v2553
        %v2555 = vpop.f32.mrb[0].mxu0
        %2556 = vdwg.mxu0
        %2557 = vmatprep.subr.mxu0 0.0
        %2558 = vmatpush1.msra.mxu0 %v842
        %2559 = vmatprep.subr.mxu0 0.0
        %2560 = vmatpush1.msra.mxu0 %v843
        %2561 = vmatprep.subr.mxu0 0.0
        %2562 = vmatpush1.msra.mxu0 %v844
        %2563 = vmatprep.subr.mxu0 0.0
        %2564 = vmatpush1.msra.mxu0 %v845
        %2565 = vmatprep.subr.mxu0 0.0
        %2566 = vmatpush1.msra.mxu0 %v846
        %2567 = vmatprep.subr.mxu0 0.0
        %2568 = vmatpush1.msra.mxu0 %v847
        %2569 = vmatprep.subr.mxu0 0.0
        %2570 = vmatpush1.msra.mxu0 %v848
        %2571 = vmatprep.subr.mxu0 0.0
        %2572 = vmatpush1.msra.mxu0 %v849
        %2573 = vmatprep.subr.mxu0 0.0
        %2574 = vmatpush1.msra.mxu0 %v850
        %2575 = vmatprep.subr.mxu0 0.0
        %2576 = vmatpush1.msra.mxu0 %v851
        %2577 = vmatprep.subr.mxu0 0.0
        %2578 = vmatpush1.msra.mxu0 %v852
        %2579 = vmatprep.subr.mxu0 0.0
        %2580 = vmatpush1.msra.mxu0 %v853
        %2581 = vmatprep.subr.mxu0 0.0
        %2582 = vmatpush1.msra.mxu0 %v854
        %2583 = vmatprep.subr.mxu0 0.0
        %2584 = vmatpush1.msra.mxu0 %v855
        %2585 = vmatprep.subr.mxu0 0.0
        %2586 = vmatpush1.msra.mxu0 %v856
        %2587 = vmatprep.subr.mxu0 0.0
        %2588 = vmatpush1.msra.mxu0 %v857
        %2589 = vmatprep.subr.mxu0 0.0
        %2590 = vmatpush1.msra.mxu0 %v858
        %2591 = vmatprep.subr.mxu0 0.0
        %2592 = vmatpush1.msra.mxu0 %v859
        %2593 = vmatprep.subr.mxu0 0.0
        %2594 = vmatpush1.msra.mxu0 %v860
        %2595 = vmatprep.subr.mxu0 0.0
        %2596 = vmatpush1.msra.mxu0 %v861
        %2597 = vmatprep.subr.mxu0 0.0
        %2598 = vmatpush1.msra.mxu0 %v862
        %2599 = vmatprep.subr.mxu0 0.0
        %2600 = vmatpush1.msra.mxu0 %v863
        %2601 = vmatprep.subr.mxu0 0.0
        %2602 = vmatpush1.msra.mxu0 %v864
        %2603 = vmatprep.subr.mxu0 0.0
        %2604 = vmatpush1.msra.mxu0 %v865
        %2605 = vmatprep.subr.mxu0 0.0
        %2606 = vmatpush1.msra.mxu0 %v866
        %2607 = vmatprep.subr.mxu0 0.0
        %2608 = vmatpush1.msra.mxu0 %v867
        %2609 = vmatprep.subr.mxu0 0.0
        %2610 = vmatpush1.msra.mxu0 %v868
        %2611 = vmatprep.subr.mxu0 0.0
        %2612 = vmatpush1.msra.mxu0 %v869
        %2613 = vmatprep.subr.mxu0 0.0
        %2614 = vmatpush1.msra.mxu0 %v870
        %2615 = vmatprep.subr.mxu0 0.0
        %2616 = vmatpush1.msra.mxu0 %v871
        %2617 = vmatprep.subr.mxu0 0.0
        %2618 = vmatpush1.msra.mxu0 %v872
        %2619 = vmatprep.subr.mxu0 0.0
        %2620 = vmatpush1.msra.mxu0 %v873
        %2621 = vmatprep.mubr.f32.mxu0 %v239
        %2622 = vmatmul.mubr.f32.gmra.mrb[0].mxu0 %v238
        %v2623 = vpop.f32.mrb[0].mxu0
        %v2624 = vadd.f32 %v2554, %v2623
        %v2625 = vpop.f32.mrb[0].mxu0
        %2626 = vdwg.mxu0
        %2627 = vmatprep.subr.mxu0 0.0
        %2628 = vmatpush1.msra.mxu0 %v874
        %2629 = vmatprep.subr.mxu0 0.0
        %2630 = vmatpush1.msra.mxu0 %v875
        %2631 = vmatprep.subr.mxu0 0.0
        %2632 = vmatpush1.msra.mxu0 %v876
        %2633 = vmatprep.subr.mxu0 0.0
        %2634 = vmatpush1.msra.mxu0 %v877
        %2635 = vmatprep.subr.mxu0 0.0
        %2636 = vmatpush1.msra.mxu0 %v878
        %2637 = vmatprep.subr.mxu0 0.0
        %2638 = vmatpush1.msra.mxu0 %v879
        %2639 = vmatprep.subr.mxu0 0.0
        %2640 = vmatpush1.msra.mxu0 %v880
        %2641 = vmatprep.subr.mxu0 0.0
        %2642 = vmatpush1.msra.mxu0 %v881
        %2643 = vmatprep.subr.mxu0 0.0
        %2644 = vmatpush1.msra.mxu0 %v882
        %2645 = vmatprep.subr.mxu0 0.0
        %2646 = vmatpush1.msra.mxu0 %v883
        %2647 = vmatprep.subr.mxu0 0.0
        %2648 = vmatpush1.msra.mxu0 %v884
        %2649 = vmatprep.subr.mxu0 0.0
        %2650 = vmatpush1.msra.mxu0 %v885
        %2651 = vmatprep.subr.mxu0 0.0
        %2652 = vmatpush1.msra.mxu0 %v886
        %2653 = vmatprep.subr.mxu0 0.0
        %2654 = vmatpush1.msra.mxu0 %v887
        %2655 = vmatprep.subr.mxu0 0.0
        %2656 = vmatpush1.msra.mxu0 %v888
        %2657 = vmatprep.subr.mxu0 0.0
        %2658 = vmatpush1.msra.mxu0 %v889
        %2659 = vmatprep.subr.mxu0 0.0
        %2660 = vmatpush1.msra.mxu0 %v890
        %2661 = vmatprep.subr.mxu0 0.0
        %2662 = vmatpush1.msra.mxu0 %v891
        %2663 = vmatprep.subr.mxu0 0.0
        %2664 = vmatpush1.msra.mxu0 %v892
        %2665 = vmatprep.subr.mxu0 0.0
        %2666 = vmatpush1.msra.mxu0 %v893
        %2667 = vmatprep.subr.mxu0 0.0
        %2668 = vmatpush1.msra.mxu0 %v894
        %2669 = vmatprep.subr.mxu0 0.0
        %2670 = vmatpush1.msra.mxu0 %v895
        %2671 = vmatprep.subr.mxu0 0.0
        %2672 = vmatpush1.msra.mxu0 %v896
        %2673 = vmatprep.subr.mxu0 0.0
        %2674 = vmatpush1.msra.mxu0 %v897
        %2675 = vmatprep.subr.mxu0 0.0
        %2676 = vmatpush1.msra.mxu0 %v898
        %2677 = vmatprep.subr.mxu0 0.0
        %2678 = vmatpush1.msra.mxu0 %v899
        %2679 = vmatprep.subr.mxu0 0.0
        %2680 = vmatpush1.msra.mxu0 %v900
        %2681 = vmatprep.subr.mxu0 0.0
        %2682 = vmatpush1.msra.mxu0 %v901
        %2683 = vmatprep.subr.mxu0 0.0
        %2684 = vmatpush1.msra.mxu0 %v902
        %2685 = vmatprep.subr.mxu0 0.0
        %2686 = vmatpush1.msra.mxu0 %v903
        %2687 = vmatprep.subr.mxu0 0.0
        %2688 = vmatpush1.msra.mxu0 %v904
        %2689 = vmatprep.subr.mxu0 0.0
        %2690 = vmatpush1.msra.mxu0 %v905
        %2691 = vmatprep.mubr.f32.mxu0 %v241
        %2692 = vmatmul.mubr.f32.gmra.mrb[0].mxu0 %v240
        %v2693 = vpop.f32.mrb[0].mxu0
        %v2694 = vadd.f32 %v2624, %v2693
        %v2695 = vpop.f32.mrb[0].mxu0
        %2696 = vdwg.mxu0
        %2697 = vmatprep.subr.mxu0 0.0
        %2698 = vmatpush1.msra.mxu0 %v906
        %2699 = vmatprep.subr.mxu0 0.0
        %2700 = vmatpush1.msra.mxu0 %v907
        %2701 = vmatprep.subr.mxu0 0.0
        %2702 = vmatpush1.msra.mxu0 %v908
        %2703 = vmatprep.subr.mxu0 0.0
        %2704 = vmatpush1.msra.mxu0 %v909
        %2705 = vmatprep.subr.mxu0 0.0
        %2706 = vmatpush1.msra.mxu0 %v910
        %2707 = vmatprep.subr.mxu0 0.0
        %2708 = vmatpush1.msra.mxu0 %v911
        %2709 = vmatprep.subr.mxu0 0.0
        %2710 = vmatpush1.msra.mxu0 %v912
        %2711 = vmatprep.subr.mxu0 0.0
        %2712 = vmatpush1.msra.mxu0 %v913
        %2713 = vmatprep.subr.mxu0 0.0
        %2714 = vmatpush1.msra.mxu0 %v914
        %2715 = vmatprep.subr.mxu0 0.0
        %2716 = vmatpush1.msra.mxu0 %v915
        %2717 = vmatprep.subr.mxu0 0.0
        %2718 = vmatpush1.msra.mxu0 %v916
        %2719 = vmatprep.subr.mxu0 0.0
        %2720 = vmatpush1.msra.mxu0 %v917
        %2721 = vmatprep.subr.mxu0 0.0
        %2722 = vmatpush1.msra.mxu0 %v918
        %2723 = vmatprep.subr.mxu0 0.0
        %2724 = vmatpush1.msra.mxu0 %v919
        %2725 = vmatprep.subr.mxu0 0.0
        %2726 = vmatpush1.msra.mxu0 %v920
        %2727 = vmatprep.subr.mxu0 0.0
        %2728 = vmatpush1.msra.mxu0 %v921
        %2729 = vmatprep.subr.mxu0 0.0
        %2730 = vmatpush1.msra.mxu0 %v922
        %2731 = vmatprep.subr.mxu0 0.0
        %2732 = vmatpush1.msra.mxu0 %v923
        %2733 = vmatprep.subr.mxu0 0.0
        %2734 = vmatpush1.msra.mxu0 %v924
        %2735 = vmatprep.subr.mxu0 0.0
        %2736 = vmatpush1.msra.mxu0 %v925
        %2737 = vmatprep.subr.mxu0 0.0
        %2738 = vmatpush1.msra.mxu0 %v926
        %2739 = vmatprep.subr.mxu0 0.0
        %2740 = vmatpush1.msra.mxu0 %v927
        %2741 = vmatprep.subr.mxu0 0.0
        %2742 = vmatpush1.msra.mxu0 %v928
        %2743 = vmatprep.subr.mxu0 0.0
        %2744 = vmatpush1.msra.mxu0 %v929
        %2745 = vmatprep.subr.mxu0 0.0
        %2746 = vmatpush1.msra.mxu0 %v930
        %2747 = vmatprep.subr.mxu0 0.0
        %2748 = vmatpush1.msra.mxu0 %v931
        %2749 = vmatprep.subr.mxu0 0.0
        %2750 = vmatpush1.msra.mxu0 %v932
        %2751 = vmatprep.subr.mxu0 0.0
        %2752 = vmatpush1.msra.mxu0 %v933
        %2753 = vmatprep.subr.mxu0 0.0
        %2754 = vmatpush1.msra.mxu0 %v934
        %2755 = vmatprep.subr.mxu0 0.0
        %2756 = vmatpush1.msra.mxu0 %v935
        %2757 = vmatprep.subr.mxu0 0.0
        %2758 = vmatpush1.msra.mxu0 %v936
        %2759 = vmatprep.subr.mxu0 0.0
        %2760 = vmatpush1.msra.mxu0 %v937
        %2761 = vmatprep.mubr.f32.mxu0 %v243
        %2762 = vmatmul.mubr.f32.gmra.mrb[0].mxu0 %v242
        %v2763 = vpop.f32.mrb[0].mxu0
        %v2764 = vadd.f32 %v2694, %v2763
        %v2765 = vpop.f32.mrb[0].mxu0
        %2766 = vdwg.mxu0
        %2767 = vmatprep.subr.mxu0 0.0
        %2768 = vmatpush1.msra.mxu0 %v938
        %2769 = vmatprep.subr.mxu0 0.0
        %2770 = vmatpush1.msra.mxu0 %v939
        %2771 = vmatprep.subr.mxu0 0.0
        %2772 = vmatpush1.msra.mxu0 %v940
        %2773 = vmatprep.subr.mxu0 0.0
        %2774 = vmatpush1.msra.mxu0 %v941
        %2775 = vmatprep.subr.mxu0 0.0
        %2776 = vmatpush1.msra.mxu0 %v942
        %2777 = vmatprep.subr.mxu0 0.0
        %2778 = vmatpush1.msra.mxu0 %v943
        %2779 = vmatprep.subr.mxu0 0.0
        %2780 = vmatpush1.msra.mxu0 %v944
        %2781 = vmatprep.subr.mxu0 0.0
        %2782 = vmatpush1.msra.mxu0 %v945
        %2783 = vmatprep.subr.mxu0 0.0
        %2784 = vmatpush1.msra.mxu0 %v946
        %2785 = vmatprep.subr.mxu0 0.0
        %2786 = vmatpush1.msra.mxu0 %v947
        %2787 = vmatprep.subr.mxu0 0.0
        %2788 = vmatpush1.msra.mxu0 %v948
        %2789 = vmatprep.subr.mxu0 0.0
        %2790 = vmatpush1.msra.mxu0 %v949
        %2791 = vmatprep.subr.mxu0 0.0
        %2792 = vmatpush1.msra.mxu0 %v950
        %2793 = vmatprep.subr.mxu0 0.0
        %2794 = vmatpush1.msra.mxu0 %v951
        %2795 = vmatprep.subr.mxu0 0.0
        %2796 = vmatpush1.msra.mxu0 %v952
        %2797 = vmatprep.subr.mxu0 0.0
        %2798 = vmatpush1.msra.mxu0 %v953
        %2799 = vmatprep.subr.mxu0 0.0
        %2800 = vmatpush1.msra.mxu0 %v954
        %2801 = vmatprep.subr.mxu0 0.0
        %2802 = vmatpush1.msra.mxu0 %v955
        %2803 = vmatprep.subr.mxu0 0.0
        %2804 = vmatpush1.msra.mxu0 %v956
        %2805 = vmatprep.subr.mxu0 0.0
        %2806 = vmatpush1.msra.mxu0 %v957
        %2807 = vmatprep.subr.mxu0 0.0
        %2808 = vmatpush1.msra.mxu0 %v958
        %2809 = vmatprep.subr.mxu0 0.0
        %2810 = vmatpush1.msra.mxu0 %v959
        %2811 = vmatprep.subr.mxu0 0.0
        %2812 = vmatpush1.msra.mxu0 %v960
        %2813 = vmatprep.subr.mxu0 0.0
        %2814 = vmatpush1.msra.mxu0 %v961
        %2815 = vmatprep.subr.mxu0 0.0
        %2816 = vmatpush1.msra.mxu0 %v962
        %2817 = vmatprep.subr.mxu0 0.0
        %2818 = vmatpush1.msra.mxu0 %v963
        %2819 = vmatprep.subr.mxu0 0.0
        %2820 = vmatpush1.msra.mxu0 %v964
        %2821 = vmatprep.subr.mxu0 0.0
        %2822 = vmatpush1.msra.mxu0 %v965
        %2823 = vmatprep.subr.mxu0 0.0
        %2824 = vmatpush1.msra.mxu0 %v966
        %2825 = vmatprep.subr.mxu0 0.0
        %2826 = vmatpush1.msra.mxu0 %v967
        %2827 = vmatprep.subr.mxu0 0.0
        %2828 = vmatpush1.msra.mxu0 %v968
        %2829 = vmatprep.subr.mxu0 0.0
        %2830 = vmatpush1.msra.mxu0 %v969
        %2831 = vmatprep.mubr.f32.mxu0 %v245
        %2832 = vmatmul.mubr.f32.gmra.mrb[0].mxu0 %v244
        %v2833 = vpop.f32.mrb[0].mxu0
        %v2834 = vadd.f32 %v2764, %v2833
        %v2835 = vpop.f32.mrb[0].mxu0
        %2836 = vdwg.mxu0
        %2837 = vmatprep.subr.mxu0 0.0
        %2838 = vmatpush1.msra.mxu0 %v970
        %2839 = vmatprep.subr.mxu0 0.0
        %2840 = vmatpush1.msra.mxu0 %v971
        %2841 = vmatprep.subr.mxu0 0.0
        %2842 = vmatpush1.msra.mxu0 %v972
        %2843 = vmatprep.subr.mxu0 0.0
        %2844 = vmatpush1.msra.mxu0 %v973
        %2845 = vmatprep.subr.mxu0 0.0
        %2846 = vmatpush1.msra.mxu0 %v974
        %2847 = vmatprep.subr.mxu0 0.0
        %2848 = vmatpush1.msra.mxu0 %v975
        %2849 = vmatprep.subr.mxu0 0.0
        %2850 = vmatpush1.msra.mxu0 %v976
        %2851 = vmatprep.subr.mxu0 0.0
        %2852 = vmatpush1.msra.mxu0 %v977
        %2853 = vmatprep.subr.mxu0 0.0
        %2854 = vmatpush1.msra.mxu0 %v978
        %2855 = vmatprep.subr.mxu0 0.0
        %2856 = vmatpush1.msra.mxu0 %v979
        %2857 = vmatprep.subr.mxu0 0.0
        %2858 = vmatpush1.msra.mxu0 %v980
        %2859 = vmatprep.subr.mxu0 0.0
        %2860 = vmatpush1.msra.mxu0 %v981
        %2861 = vmatprep.subr.mxu0 0.0
        %2862 = vmatpush1.msra.mxu0 %v982
        %2863 = vmatprep.subr.mxu0 0.0
        %2864 = vmatpush1.msra.mxu0 %v983
        %2865 = vmatprep.subr.mxu0 0.0
        %2866 = vmatpush1.msra.mxu0 %v984
        %2867 = vmatprep.subr.mxu0 0.0
        %2868 = vmatpush1.msra.mxu0 %v985
        %2869 = vmatprep.subr.mxu0 0.0
        %2870 = vmatpush1.msra.mxu0 %v986
        %2871 = vmatprep.subr.mxu0 0.0
        %2872 = vmatpush1.msra.mxu0 %v987
        %2873 = vmatprep.subr.mxu0 0.0
        %2874 = vmatpush1.msra.mxu0 %v988
        %2875 = vmatprep.subr.mxu0 0.0
        %2876 = vmatpush1.msra.mxu0 %v989
        %2877 = vmatprep.subr.mxu0 0.0
        %2878 = vmatpush1.msra.mxu0 %v990
        %2879 = vmatprep.subr.mxu0 0.0
        %2880 = vmatpush1.msra.mxu0 %v991
        %2881 = vmatprep.subr.mxu0 0.0
        %2882 = vmatpush1.msra.mxu0 %v992
        %2883 = vmatprep.subr.mxu0 0.0
        %2884 = vmatpush1.msra.mxu0 %v993
        %2885 = vmatprep.subr.mxu0 0.0
        %2886 = vmatpush1.msra.mxu0 %v994
        %2887 = vmatprep.subr.mxu0 0.0
        %2888 = vmatpush1.msra.mxu0 %v995
        %2889 = vmatprep.subr.mxu0 0.0
        %2890 = vmatpush1.msra.mxu0 %v996
        %2891 = vmatprep.subr.mxu0 0.0
        %2892 = vmatpush1.msra.mxu0 %v997
        %2893 = vmatprep.subr.mxu0 0.0
        %2894 = vmatpush1.msra.mxu0 %v998
        %2895 = vmatprep.subr.mxu0 0.0
        %2896 = vmatpush1.msra.mxu0 %v999
        %2897 = vmatprep.subr.mxu0 0.0
        %2898 = vmatpush1.msra.mxu0 %v1000
        %2899 = vmatprep.subr.mxu0 0.0
        %2900 = vmatpush1.msra.mxu0 %v1001
        %2901 = vmatprep.mubr.f32.mxu0 %v247
        %2902 = vmatmul.mubr.f32.gmra.mrb[0].mxu0 %v246
        %v2903 = vpop.f32.mrb[0].mxu0
        %v2904 = vadd.f32 %v2834, %v2903
        %v2905 = vpop.f32.mrb[0].mxu0
        %2906 = vdwg.mxu0
        %2907 = vmatprep.subr.mxu0 0.0
        %2908 = vmatpush1.msra.mxu0 %v1002
        %2909 = vmatprep.subr.mxu0 0.0
        %2910 = vmatpush1.msra.mxu0 %v1003
        %2911 = vmatprep.subr.mxu0 0.0
        %2912 = vmatpush1.msra.mxu0 %v1004
        %2913 = vmatprep.subr.mxu0 0.0
        %2914 = vmatpush1.msra.mxu0 %v1005
        %2915 = vmatprep.subr.mxu0 0.0
        %2916 = vmatpush1.msra.mxu0 %v1006
        %2917 = vmatprep.subr.mxu0 0.0
        %2918 = vmatpush1.msra.mxu0 %v1007
        %2919 = vmatprep.subr.mxu0 0.0
        %2920 = vmatpush1.msra.mxu0 %v1008
        %2921 = vmatprep.subr.mxu0 0.0
        %2922 = vmatpush1.msra.mxu0 %v1009
        %2923 = vmatprep.subr.mxu0 0.0
        %2924 = vmatpush1.msra.mxu0 %v1010
        %2925 = vmatprep.subr.mxu0 0.0
        %2926 = vmatpush1.msra.mxu0 %v1011
        %2927 = vmatprep.subr.mxu0 0.0
        %2928 = vmatpush1.msra.mxu0 %v1012
        %2929 = vmatprep.subr.mxu0 0.0
        %2930 = vmatpush1.msra.mxu0 %v1013
        %2931 = vmatprep.subr.mxu0 0.0
        %2932 = vmatpush1.msra.mxu0 %v1014
        %2933 = vmatprep.subr.mxu0 0.0
        %2934 = vmatpush1.msra.mxu0 %v1015
        %2935 = vmatprep.subr.mxu0 0.0
        %2936 = vmatpush1.msra.mxu0 %v1016
        %2937 = vmatprep.subr.mxu0 0.0
        %2938 = vmatpush1.msra.mxu0 %v1017
        %2939 = vmatprep.subr.mxu0 0.0
        %2940 = vmatpush1.msra.mxu0 %v1018
        %2941 = vmatprep.subr.mxu0 0.0
        %2942 = vmatpush1.msra.mxu0 %v1019
        %2943 = vmatprep.subr.mxu0 0.0
        %2944 = vmatpush1.msra.mxu0 %v1020
        %2945 = vmatprep.subr.mxu0 0.0
        %2946 = vmatpush1.msra.mxu0 %v1021
        %2947 = vmatprep.subr.mxu0 0.0
        %2948 = vmatpush1.msra.mxu0 %v1022
        %2949 = vmatprep.subr.mxu0 0.0
        %2950 = vmatpush1.msra.mxu0 %v1023
        %2951 = vmatprep.subr.mxu0 0.0
        %2952 = vmatpush1.msra.mxu0 %v1024
        %2953 = vmatprep.subr.mxu0 0.0
        %2954 = vmatpush1.msra.mxu0 %v1025
        %2955 = vmatprep.subr.mxu0 0.0
        %2956 = vmatpush1.msra.mxu0 %v1026
        %2957 = vmatprep.subr.mxu0 0.0
        %2958 = vmatpush1.msra.mxu0 %v1027
        %2959 = vmatprep.subr.mxu0 0.0
        %2960 = vmatpush1.msra.mxu0 %v1028
        %2961 = vmatprep.subr.mxu0 0.0
        %2962 = vmatpush1.msra.mxu0 %v1029
        %2963 = vmatprep.subr.mxu0 0.0
        %2964 = vmatpush1.msra.mxu0 %v1030
        %2965 = vmatprep.subr.mxu0 0.0
        %2966 = vmatpush1.msra.mxu0 %v1031
        %2967 = vmatprep.subr.mxu0 0.0
        %2968 = vmatpush1.msra.mxu0 %v1032
        %2969 = vmatprep.subr.mxu0 0.0
        %2970 = vmatpush1.msra.mxu0 %v1033
        %2971 = vmatprep.mubr.f32.mxu0 %v249
        %2972 = vmatmul.mubr.f32.gmra.mrb[0].mxu0 %v248
        %v2973 = vpop.f32.mrb[0].mxu0
        %v2974 = vadd.f32 %v2904, %v2973
        %v2975 = vpop.f32.mrb[0].mxu0
        %2976 = vdwg.mxu0
        %2977 = vmatprep.subr.mxu0 0.0
        %2978 = vmatpush1.msra.mxu0 %v1034
        %2979 = vmatprep.subr.mxu0 0.0
        %2980 = vmatpush1.msra.mxu0 %v1035
        %2981 = vmatprep.subr.mxu0 0.0
        %2982 = vmatpush1.msra.mxu0 %v1036
        %2983 = vmatprep.subr.mxu0 0.0
        %2984 = vmatpush1.msra.mxu0 %v1037
        %2985 = vmatprep.subr.mxu0 0.0
        %2986 = vmatpush1.msra.mxu0 %v1038
        %2987 = vmatprep.subr.mxu0 0.0
        %2988 = vmatpush1.msra.mxu0 %v1039
        %2989 = vmatprep.subr.mxu0 0.0
        %2990 = vmatpush1.msra.mxu0 %v1040
        %2991 = vmatprep.subr.mxu0 0.0
        %2992 = vmatpush1.msra.mxu0 %v1041
        %2993 = vmatprep.subr.mxu0 0.0
        %2994 = vmatpush1.msra.mxu0 %v1042
        %2995 = vmatprep.subr.mxu0 0.0
        %2996 = vmatpush1.msra.mxu0 %v1043
        %2997 = vmatprep.subr.mxu0 0.0
        %2998 = vmatpush1.msra.mxu0 %v1044
        %2999 = vmatprep.subr.mxu0 0.0
        %3000 = vmatpush1.msra.mxu0 %v1045
        %3001 = vmatprep.subr.mxu0 0.0
        %3002 = vmatpush1.msra.mxu0 %v1046
        %3003 = vmatprep.subr.mxu0 0.0
        %3004 = vmatpush1.msra.mxu0 %v1047
        %3005 = vmatprep.subr.mxu0 0.0
        %3006 = vmatpush1.msra.mxu0 %v1048
        %3007 = vmatprep.subr.mxu0 0.0
        %3008 = vmatpush1.msra.mxu0 %v1049
        %3009 = vmatprep.subr.mxu0 0.0
        %3010 = vmatpush1.msra.mxu0 %v1050
        %3011 = vmatprep.subr.mxu0 0.0
        %3012 = vmatpush1.msra.mxu0 %v1051
        %3013 = vmatprep.subr.mxu0 0.0
        %3014 = vmatpush1.msra.mxu0 %v1052
        %3015 = vmatprep.subr.mxu0 0.0
        %3016 = vmatpush1.msra.mxu0 %v1053
        %3017 = vmatprep.subr.mxu0 0.0
        %3018 = vmatpush1.msra.mxu0 %v1054
        %3019 = vmatprep.subr.mxu0 0.0
        %3020 = vmatpush1.msra.mxu0 %v1055
        %3021 = vmatprep.subr.mxu0 0.0
        %3022 = vmatpush1.msra.mxu0 %v1056
        %3023 = vmatprep.subr.mxu0 0.0
        %3024 = vmatpush1.msra.mxu0 %v1057
        %3025 = vmatprep.subr.mxu0 0.0
        %3026 = vmatpush1.msra.mxu0 %v1058
        %3027 = vmatprep.subr.mxu0 0.0
        %3028 = vmatpush1.msra.mxu0 %v1059
        %3029 = vmatprep.subr.mxu0 0.0
        %3030 = vmatpush1.msra.mxu0 %v1060
        %3031 = vmatprep.subr.mxu0 0.0
        %3032 = vmatpush1.msra.mxu0 %v1061
        %3033 = vmatprep.subr.mxu0 0.0
        %3034 = vmatpush1.msra.mxu0 %v1062
        %3035 = vmatprep.subr.mxu0 0.0
        %3036 = vmatpush1.msra.mxu0 %v1063
        %3037 = vmatprep.subr.mxu0 0.0
        %3038 = vmatpush1.msra.mxu0 %v1064
        %3039 = vmatprep.subr.mxu0 0.0
        %3040 = vmatpush1.msra.mxu0 %v1065
        %3041 = vmatprep.mubr.f32.mxu0 %v251
        %3042 = vmatmul.mubr.f32.gmra.mrb[0].mxu0 %v250
        %v3043 = vpop.f32.mrb[0].mxu0
        %v3044 = vadd.f32 %v2974, %v3043
        %v3045 = vpop.f32.mrb[0].mxu0
        %3046 = vdwg.mxu0
        %3047 = vmatprep.subr.mxu0 0.0
        %3048 = vmatpush1.msra.mxu0 %v1066
        %3049 = vmatprep.subr.mxu0 0.0
        %3050 = vmatpush1.msra.mxu0 %v1067
        %3051 = vmatprep.subr.mxu0 0.0
        %3052 = vmatpush1.msra.mxu0 %v1068
        %3053 = vmatprep.subr.mxu0 0.0
        %3054 = vmatpush1.msra.mxu0 %v1069
        %3055 = vmatprep.subr.mxu0 0.0
        %3056 = vmatpush1.msra.mxu0 %v1070
        %3057 = vmatprep.subr.mxu0 0.0
        %3058 = vmatpush1.msra.mxu0 %v1071
        %3059 = vmatprep.subr.mxu0 0.0
        %3060 = vmatpush1.msra.mxu0 %v1072
        %3061 = vmatprep.subr.mxu0 0.0
        %3062 = vmatpush1.msra.mxu0 %v1073
        %3063 = vmatprep.subr.mxu0 0.0
        %3064 = vmatpush1.msra.mxu0 %v1074
        %3065 = vmatprep.subr.mxu0 0.0
        %3066 = vmatpush1.msra.mxu0 %v1075
        %3067 = vmatprep.subr.mxu0 0.0
        %3068 = vmatpush1.msra.mxu0 %v1076
        %3069 = vmatprep.subr.mxu0 0.0
        %3070 = vmatpush1.msra.mxu0 %v1077
        %3071 = vmatprep.subr.mxu0 0.0
        %3072 = vmatpush1.msra.mxu0 %v1078
        %3073 = vmatprep.subr.mxu0 0.0
        %3074 = vmatpush1.msra.mxu0 %v1079
        %3075 = vmatprep.subr.mxu0 0.0
        %3076 = vmatpush1.msra.mxu0 %v1080
        %3077 = vmatprep.subr.mxu0 0.0
        %3078 = vmatpush1.msra.mxu0 %v1081
        %3079 = vmatprep.subr.mxu0 0.0
        %3080 = vmatpush1.msra.mxu0 %v1082
        %3081 = vmatprep.subr.mxu0 0.0
        %3082 = vmatpush1.msra.mxu0 %v1083
        %3083 = vmatprep.subr.mxu0 0.0
        %3084 = vmatpush1.msra.mxu0 %v1084
        %3085 = vmatprep.subr.mxu0 0.0
        %3086 = vmatpush1.msra.mxu0 %v1085
        %3087 = vmatprep.subr.mxu0 0.0
        %3088 = vmatpush1.msra.mxu0 %v1086
        %3089 = vmatprep.subr.mxu0 0.0
        %3090 = vmatpush1.msra.mxu0 %v1087
        %3091 = vmatprep.subr.mxu0 0.0
        %3092 = vmatpush1.msra.mxu0 %v1088
        %3093 = vmatprep.subr.mxu0 0.0
        %3094 = vmatpush1.msra.mxu0 %v1089
        %3095 = vmatprep.subr.mxu0 0.0
        %3096 = vmatpush1.msra.mxu0 %v1090
        %3097 = vmatprep.subr.mxu0 0.0
        %3098 = vmatpush1.msra.mxu0 %v1091
        %3099 = vmatprep.subr.mxu0 0.0
        %3100 = vmatpush1.msra.mxu0 %v1092
        %3101 = vmatprep.subr.mxu0 0.0
        %3102 = vmatpush1.msra.mxu0 %v1093
        %3103 = vmatprep.subr.mxu0 0.0
        %3104 = vmatpush1.msra.mxu0 %v1094
        %3105 = vmatprep.subr.mxu0 0.0
        %3106 = vmatpush1.msra.mxu0 %v1095
        %3107 = vmatprep.subr.mxu0 0.0
        %3108 = vmatpush1.msra.mxu0 %v1096
        %3109 = vmatprep.subr.mxu0 0.0
        %3110 = vmatpush1.msra.mxu0 %v1097
        %3111 = vmatprep.mubr.f32.mxu0 %v253
        %3112 = vmatmul.mubr.f32.gmra.mrb[0].mxu0 %v252
        %v3113 = vpop.f32.mrb[0].mxu0
        %v3114 = vadd.f32 %v3044, %v3113
        %v3115 = vpop.f32.mrb[0].mxu0
        %3116 = vdwg.mxu0
        %3117 = vmatprep.subr.mxu0 0.0
        %3118 = vmatpush1.msra.mxu0 %v1098
        %3119 = vmatprep.subr.mxu0 0.0
        %3120 = vmatpush1.msra.mxu0 %v1099
        %3121 = vmatprep.subr.mxu0 0.0
        %3122 = vmatpush1.msra.mxu0 %v1100
        %3123 = vmatprep.subr.mxu0 0.0
        %3124 = vmatpush1.msra.mxu0 %v1101
        %3125 = vmatprep.subr.mxu0 0.0
        %3126 = vmatpush1.msra.mxu0 %v1102
        %3127 = vmatprep.subr.mxu0 0.0
        %3128 = vmatpush1.msra.mxu0 %v1103
        %3129 = vmatprep.subr.mxu0 0.0
        %3130 = vmatpush1.msra.mxu0 %v1104
        %3131 = vmatprep.subr.mxu0 0.0
        %3132 = vmatpush1.msra.mxu0 %v1105
        %3133 = vmatprep.subr.mxu0 0.0
        %3134 = vmatpush1.msra.mxu0 %v1106
        %3135 = vmatprep.subr.mxu0 0.0
        %3136 = vmatpush1.msra.mxu0 %v1107
        %3137 = vmatprep.subr.mxu0 0.0
        %3138 = vmatpush1.msra.mxu0 %v1108
        %3139 = vmatprep.subr.mxu0 0.0
        %3140 = vmatpush1.msra.mxu0 %v1109
        %3141 = vmatprep.subr.mxu0 0.0
        %3142 = vmatpush1.msra.mxu0 %v1110
        %3143 = vmatprep.subr.mxu0 0.0
        %3144 = vmatpush1.msra.mxu0 %v1111
        %3145 = vmatprep.subr.mxu0 0.0
        %3146 = vmatpush1.msra.mxu0 %v1112
        %3147 = vmatprep.subr.mxu0 0.0
        %3148 = vmatpush1.msra.mxu0 %v1113
        %3149 = vmatprep.subr.mxu0 0.0
        %3150 = vmatpush1.msra.mxu0 %v1114
        %3151 = vmatprep.subr.mxu0 0.0
        %3152 = vmatpush1.msra.mxu0 %v1115
        %3153 = vmatprep.subr.mxu0 0.0
        %3154 = vmatpush1.msra.mxu0 %v1116
        %3155 = vmatprep.subr.mxu0 0.0
        %3156 = vmatpush1.msra.mxu0 %v1117
        %3157 = vmatprep.subr.mxu0 0.0
        %3158 = vmatpush1.msra.mxu0 %v1118
        %3159 = vmatprep.subr.mxu0 0.0
        %3160 = vmatpush1.msra.mxu0 %v1119
        %3161 = vmatprep.subr.mxu0 0.0
        %3162 = vmatpush1.msra.mxu0 %v1120
        %3163 = vmatprep.subr.mxu0 0.0
        %3164 = vmatpush1.msra.mxu0 %v1121
        %3165 = vmatprep.subr.mxu0 0.0
        %3166 = vmatpush1.msra.mxu0 %v1122
        %3167 = vmatprep.subr.mxu0 0.0
        %3168 = vmatpush1.msra.mxu0 %v1123
        %3169 = vmatprep.subr.mxu0 0.0
        %3170 = vmatpush1.msra.mxu0 %v1124
        %3171 = vmatprep.subr.mxu0 0.0
        %3172 = vmatpush1.msra.mxu0 %v1125
        %3173 = vmatprep.subr.mxu0 0.0
        %3174 = vmatpush1.msra.mxu0 %v1126
        %3175 = vmatprep.subr.mxu0 0.0
        %3176 = vmatpush1.msra.mxu0 %v1127
        %3177 = vmatprep.subr.mxu0 0.0
        %3178 = vmatpush1.msra.mxu0 %v1128
        %3179 = vmatprep.subr.mxu0 0.0
        %3180 = vmatpush1.msra.mxu0 %v1129
        %3181 = vmatprep.mubr.f32.mxu0 %v255
        %3182 = vmatmul.mubr.f32.gmra.mrb[0].mxu0 %v254
        %v3183 = vpop.f32.mrb[0].mxu0
        %v3184 = vadd.f32 %v3114, %v3183
        %v3185 = vpop.f32.mrb[0].mxu0
        %3186 = vdwg.mxu0
        %3187 = vmatprep.subr.mxu0 0.0
        %3188 = vmatpush1.msra.mxu0 %v1130
        %3189 = vmatprep.subr.mxu0 0.0
        %3190 = vmatpush1.msra.mxu0 %v1131
        %3191 = vmatprep.subr.mxu0 0.0
        %3192 = vmatpush1.msra.mxu0 %v1132
        %3193 = vmatprep.subr.mxu0 0.0
        %3194 = vmatpush1.msra.mxu0 %v1133
        %3195 = vmatprep.subr.mxu0 0.0
        %3196 = vmatpush1.msra.mxu0 %v1134
        %3197 = vmatprep.subr.mxu0 0.0
        %3198 = vmatpush1.msra.mxu0 %v1135
        %3199 = vmatprep.subr.mxu0 0.0
        %3200 = vmatpush1.msra.mxu0 %v1136
        %3201 = vmatprep.subr.mxu0 0.0
        %3202 = vmatpush1.msra.mxu0 %v1137
        %3203 = vmatprep.subr.mxu0 0.0
        %3204 = vmatpush1.msra.mxu0 %v1138
        %3205 = vmatprep.subr.mxu0 0.0
        %3206 = vmatpush1.msra.mxu0 %v1139
        %3207 = vmatprep.subr.mxu0 0.0
        %3208 = vmatpush1.msra.mxu0 %v1140
        %3209 = vmatprep.subr.mxu0 0.0
        %3210 = vmatpush1.msra.mxu0 %v1141
        %3211 = vmatprep.subr.mxu0 0.0
        %3212 = vmatpush1.msra.mxu0 %v1142
        %3213 = vmatprep.subr.mxu0 0.0
        %3214 = vmatpush1.msra.mxu0 %v1143
        %3215 = vmatprep.subr.mxu0 0.0
        %3216 = vmatpush1.msra.mxu0 %v1144
        %3217 = vmatprep.subr.mxu0 0.0
        %3218 = vmatpush1.msra.mxu0 %v1145
        %3219 = vmatprep.subr.mxu0 0.0
        %3220 = vmatpush1.msra.mxu0 %v1146
        %3221 = vmatprep.subr.mxu0 0.0
        %3222 = vmatpush1.msra.mxu0 %v1147
        %3223 = vmatprep.subr.mxu0 0.0
        %3224 = vmatpush1.msra.mxu0 %v1148
        %3225 = vmatprep.subr.mxu0 0.0
        %3226 = vmatpush1.msra.mxu0 %v1149
        %3227 = vmatprep.subr.mxu0 0.0
        %3228 = vmatpush1.msra.mxu0 %v1150
        %3229 = vmatprep.subr.mxu0 0.0
        %3230 = vmatpush1.msra.mxu0 %v1151
        %3231 = vmatprep.subr.mxu0 0.0
        %3232 = vmatpush1.msra.mxu0 %v1152
        %3233 = vmatprep.subr.mxu0 0.0
        %3234 = vmatpush1.msra.mxu0 %v1153
        %3235 = vmatprep.subr.mxu0 0.0
        %3236 = vmatpush1.msra.mxu0 %v1154
        %3237 = vmatprep.subr.mxu0 0.0
        %3238 = vmatpush1.msra.mxu0 %v1155
        %3239 = vmatprep.subr.mxu0 0.0
        %3240 = vmatpush1.msra.mxu0 %v1156
        %3241 = vmatprep.subr.mxu0 0.0
        %3242 = vmatpush1.msra.mxu0 %v1157
        %3243 = vmatprep.subr.mxu0 0.0
        %3244 = vmatpush1.msra.mxu0 %v1158
        %3245 = vmatprep.subr.mxu0 0.0
        %3246 = vmatpush1.msra.mxu0 %v1159
        %3247 = vmatprep.subr.mxu0 0.0
        %3248 = vmatpush1.msra.mxu0 %v1160
        %3249 = vmatprep.subr.mxu0 0.0
        %3250 = vmatpush1.msra.mxu0 %v1161
        %3251 = vmatprep.mubr.f32.mxu0 %v257
        %3252 = vmatmul.mubr.f32.gmra.mrb[0].mxu0 %v256
        %v3253 = vpop.f32.mrb[0].mxu0
        %v3254 = vadd.f32 %v3184, %v3253
        %v3255 = vpop.f32.mrb[0].mxu0
        %3256 = vdwg.mxu0
        %3257 = vmatprep.subr.mxu0 0.0
        %3258 = vmatpush1.msra.mxu0 %v1162
        %3259 = vmatprep.subr.mxu0 0.0
        %3260 = vmatpush1.msra.mxu0 %v1163
        %3261 = vmatprep.subr.mxu0 0.0
        %3262 = vmatpush1.msra.mxu0 %v1164
        %3263 = vmatprep.subr.mxu0 0.0
        %3264 = vmatpush1.msra.mxu0 %v1165
        %3265 = vmatprep.subr.mxu0 0.0
        %3266 = vmatpush1.msra.mxu0 %v1166
        %3267 = vmatprep.subr.mxu0 0.0
        %3268 = vmatpush1.msra.mxu0 %v1167
        %3269 = vmatprep.subr.mxu0 0.0
        %3270 = vmatpush1.msra.mxu0 %v1168
        %3271 = vmatprep.subr.mxu0 0.0
        %3272 = vmatpush1.msra.mxu0 %v1169
        %3273 = vmatprep.subr.mxu0 0.0
        %3274 = vmatpush1.msra.mxu0 %v1170
        %3275 = vmatprep.subr.mxu0 0.0
        %3276 = vmatpush1.msra.mxu0 %v1171
        %3277 = vmatprep.subr.mxu0 0.0
        %3278 = vmatpush1.msra.mxu0 %v1172
        %3279 = vmatprep.subr.mxu0 0.0
        %3280 = vmatpush1.msra.mxu0 %v1173
        %3281 = vmatprep.subr.mxu0 0.0
        %3282 = vmatpush1.msra.mxu0 %v1174
        %3283 = vmatprep.subr.mxu0 0.0
        %3284 = vmatpush1.msra.mxu0 %v1175
        %3285 = vmatprep.subr.mxu0 0.0
        %3286 = vmatpush1.msra.mxu0 %v1176
        %3287 = vmatprep.subr.mxu0 0.0
        %3288 = vmatpush1.msra.mxu0 %v1177
        %3289 = vmatprep.subr.mxu0 0.0
        %3290 = vmatpush1.msra.mxu0 %v1178
        %3291 = vmatprep.subr.mxu0 0.0
        %3292 = vmatpush1.msra.mxu0 %v1179
        %3293 = vmatprep.subr.mxu0 0.0
        %3294 = vmatpush1.msra.mxu0 %v1180
        %3295 = vmatprep.subr.mxu0 0.0
        %3296 = vmatpush1.msra.mxu0 %v1181
        %3297 = vmatprep.subr.mxu0 0.0
        %3298 = vmatpush1.msra.mxu0 %v1182
        %3299 = vmatprep.subr.mxu0 0.0
        %3300 = vmatpush1.msra.mxu0 %v1183
        %3301 = vmatprep.subr.mxu0 0.0
        %3302 = vmatpush1.msra.mxu0 %v1184
        %3303 = vmatprep.subr.mxu0 0.0
        %3304 = vmatpush1.msra.mxu0 %v1185
        %3305 = vmatprep.subr.mxu0 0.0
        %3306 = vmatpush1.msra.mxu0 %v1186
        %3307 = vmatprep.subr.mxu0 0.0
        %3308 = vmatpush1.msra.mxu0 %v1187
        %3309 = vmatprep.subr.mxu0 0.0
        %3310 = vmatpush1.msra.mxu0 %v1188
        %3311 = vmatprep.subr.mxu0 0.0
        %3312 = vmatpush1.msra.mxu0 %v1189
        %3313 = vmatprep.subr.mxu0 0.0
        %3314 = vmatpush1.msra.mxu0 %v1190
        %3315 = vmatprep.subr.mxu0 0.0
        %3316 = vmatpush1.msra.mxu0 %v1191
        %3317 = vmatprep.subr.mxu0 0.0
        %3318 = vmatpush1.msra.mxu0 %v1192
        %3319 = vmatprep.subr.mxu0 0.0
        %3320 = vmatpush1.msra.mxu0 %v1193
        %3321 = vmatprep.mubr.f32.mxu0 %v259
        %3322 = vmatmul.mubr.f32.gmra.mrb[0].mxu0 %v258
        %v3323 = vpop.f32.mrb[0].mxu0
        %v3324 = vadd.f32 %v3254, %v3323
        %v3325 = vpop.f32.mrb[0].mxu0
        %3326 = vdwg.mxu0
        %3327 = vmatprep.subr.mxu0 0.0
        %3328 = vmatpush1.msra.mxu0 %v1194
        %3329 = vmatprep.subr.mxu0 0.0
        %3330 = vmatpush1.msra.mxu0 %v1195
        %3331 = vmatprep.subr.mxu0 0.0
        %3332 = vmatpush1.msra.mxu0 %v1196
        %3333 = vmatprep.subr.mxu0 0.0
        %3334 = vmatpush1.msra.mxu0 %v1197
        %3335 = vmatprep.subr.mxu0 0.0
        %3336 = vmatpush1.msra.mxu0 %v1198
        %3337 = vmatprep.subr.mxu0 0.0
        %3338 = vmatpush1.msra.mxu0 %v1199
        %3339 = vmatprep.subr.mxu0 0.0
        %3340 = vmatpush1.msra.mxu0 %v1200
        %3341 = vmatprep.subr.mxu0 0.0
        %3342 = vmatpush1.msra.mxu0 %v1201
        %3343 = vmatprep.subr.mxu0 0.0
        %3344 = vmatpush1.msra.mxu0 %v1202
        %3345 = vmatprep.subr.mxu0 0.0
        %3346 = vmatpush1.msra.mxu0 %v1203
        %3347 = vmatprep.subr.mxu0 0.0
        %3348 = vmatpush1.msra.mxu0 %v1204
        %3349 = vmatprep.subr.mxu0 0.0
        %3350 = vmatpush1.msra.mxu0 %v1205
        %3351 = vmatprep.subr.mxu0 0.0
        %3352 = vmatpush1.msra.mxu0 %v1206
        %3353 = vmatprep.subr.mxu0 0.0
        %3354 = vmatpush1.msra.mxu0 %v1207
        %3355 = vmatprep.subr.mxu0 0.0
        %3356 = vmatpush1.msra.mxu0 %v1208
        %3357 = vmatprep.subr.mxu0 0.0
        %3358 = vmatpush1.msra.mxu0 %v1209
        %3359 = vmatprep.subr.mxu0 0.0
        %3360 = vmatpush1.msra.mxu0 %v1210
        %3361 = vmatprep.subr.mxu0 0.0
        %3362 = vmatpush1.msra.mxu0 %v1211
        %3363 = vmatprep.subr.mxu0 0.0
        %3364 = vmatpush1.msra.mxu0 %v1212
        %3365 = vmatprep.subr.mxu0 0.0
        %3366 = vmatpush1.msra.mxu0 %v1213
        %3367 = vmatprep.subr.mxu0 0.0
        %3368 = vmatpush1.msra.mxu0 %v1214
        %3369 = vmatprep.subr.mxu0 0.0
        %3370 = vmatpush1.msra.mxu0 %v1215
        %3371 = vmatprep.subr.mxu0 0.0
        %3372 = vmatpush1.msra.mxu0 %v1216
        %3373 = vmatprep.subr.mxu0 0.0
        %3374 = vmatpush1.msra.mxu0 %v1217
        %3375 = vmatprep.subr.mxu0 0.0
        %3376 = vmatpush1.msra.mxu0 %v1218
        %3377 = vmatprep.subr.mxu0 0.0
        %3378 = vmatpush1.msra.mxu0 %v1219
        %3379 = vmatprep.subr.mxu0 0.0
        %3380 = vmatpush1.msra.mxu0 %v1220
        %3381 = vmatprep.subr.mxu0 0.0
        %3382 = vmatpush1.msra.mxu0 %v1221
        %3383 = vmatprep.subr.mxu0 0.0
        %3384 = vmatpush1.msra.mxu0 %v1222
        %3385 = vmatprep.subr.mxu0 0.0
        %3386 = vmatpush1.msra.mxu0 %v1223
        %3387 = vmatprep.subr.mxu0 0.0
        %3388 = vmatpush1.msra.mxu0 %v1224
        %3389 = vmatprep.subr.mxu0 0.0
        %3390 = vmatpush1.msra.mxu0 %v1225
        %3391 = vmatprep.mubr.f32.mxu0 %v261
        %3392 = vmatmul.mubr.f32.gmra.mrb[0].mxu0 %v260
        %v3393 = vpop.f32.mrb[0].mxu0
        %v3394 = vadd.f32 %v3324, %v3393
        %v3395 = vpop.f32.mrb[0].mxu0
        %3396 = vdwg.mxu0
        %3397 = vmatprep.subr.mxu0 0.0
        %3398 = vmatpush1.msra.mxu0 %v1226
        %3399 = vmatprep.subr.mxu0 0.0
        %3400 = vmatpush1.msra.mxu0 %v1227
        %3401 = vmatprep.subr.mxu0 0.0
        %3402 = vmatpush1.msra.mxu0 %v1228
        %3403 = vmatprep.subr.mxu0 0.0
        %3404 = vmatpush1.msra.mxu0 %v1229
        %3405 = vmatprep.subr.mxu0 0.0
        %3406 = vmatpush1.msra.mxu0 %v1230
        %3407 = vmatprep.subr.mxu0 0.0
        %3408 = vmatpush1.msra.mxu0 %v1231
        %3409 = vmatprep.subr.mxu0 0.0
        %3410 = vmatpush1.msra.mxu0 %v1232
        %3411 = vmatprep.subr.mxu0 0.0
        %3412 = vmatpush1.msra.mxu0 %v1233
        %3413 = vmatprep.subr.mxu0 0.0
        %3414 = vmatpush1.msra.mxu0 %v1234
        %3415 = vmatprep.subr.mxu0 0.0
        %3416 = vmatpush1.msra.mxu0 %v1235
        %3417 = vmatprep.subr.mxu0 0.0
        %3418 = vmatpush1.msra.mxu0 %v1236
        %3419 = vmatprep.subr.mxu0 0.0
        %3420 = vmatpush1.msra.mxu0 %v1237
        %3421 = vmatprep.subr.mxu0 0.0
        %3422 = vmatpush1.msra.mxu0 %v1238
        %3423 = vmatprep.subr.mxu0 0.0
        %3424 = vmatpush1.msra.mxu0 %v1239
        %3425 = vmatprep.subr.mxu0 0.0
        %3426 = vmatpush1.msra.mxu0 %v1240
        %3427 = vmatprep.subr.mxu0 0.0
        %3428 = vmatpush1.msra.mxu0 %v1241
        %3429 = vmatprep.subr.mxu0 0.0
        %3430 = vmatpush1.msra.mxu0 %v1242
        %3431 = vmatprep.subr.mxu0 0.0
        %3432 = vmatpush1.msra.mxu0 %v1243
        %3433 = vmatprep.subr.mxu0 0.0
        %3434 = vmatpush1.msra.mxu0 %v1244
        %3435 = vmatprep.subr.mxu0 0.0
        %3436 = vmatpush1.msra.mxu0 %v1245
        %3437 = vmatprep.subr.mxu0 0.0
        %3438 = vmatpush1.msra.mxu0 %v1246
        %3439 = vmatprep.subr.mxu0 0.0
        %3440 = vmatpush1.msra.mxu0 %v1247
        %3441 = vmatprep.subr.mxu0 0.0
        %3442 = vmatpush1.msra.mxu0 %v1248
        %3443 = vmatprep.subr.mxu0 0.0
        %3444 = vmatpush1.msra.mxu0 %v1249
        %3445 = vmatprep.subr.mxu0 0.0
        %3446 = vmatpush1.msra.mxu0 %v1250
        %3447 = vmatprep.subr.mxu0 0.0
        %3448 = vmatpush1.msra.mxu0 %v1251
        %3449 = vmatprep.subr.mxu0 0.0
        %3450 = vmatpush1.msra.mxu0 %v1252
        %3451 = vmatprep.subr.mxu0 0.0
        %3452 = vmatpush1.msra.mxu0 %v1253
        %3453 = vmatprep.subr.mxu0 0.0
        %3454 = vmatpush1.msra.mxu0 %v1254
        %3455 = vmatprep.subr.mxu0 0.0
        %3456 = vmatpush1.msra.mxu0 %v1255
        %3457 = vmatprep.subr.mxu0 0.0
        %3458 = vmatpush1.msra.mxu0 %v1256
        %3459 = vmatprep.subr.mxu0 0.0
        %3460 = vmatpush1.msra.mxu0 %v1257
        %3461 = vmatprep.mubr.f32.mxu0 %v263
        %3462 = vmatmul.mubr.f32.gmra.mrb[0].mxu0 %v262
        %v3463 = vpop.f32.mrb[0].mxu0
        %v3464 = vadd.f32 %v3394, %v3463
        %v3465 = vpop.f32.mrb[0].mxu0
        %3466 = vdwg.mxu0
        %3467 = vmatprep.subr.mxu0 0.0
        %3468 = vmatpush1.msra.mxu0 %v1258
        %3469 = vmatprep.subr.mxu0 0.0
        %3470 = vmatpush1.msra.mxu0 %v1259
        %3471 = vmatprep.subr.mxu0 0.0
        %3472 = vmatpush1.msra.mxu0 %v1260
        %3473 = vmatprep.subr.mxu0 0.0
        %3474 = vmatpush1.msra.mxu0 %v1261
        %3475 = vmatprep.subr.mxu0 0.0
        %3476 = vmatpush1.msra.mxu0 %v1262
        %3477 = vmatprep.subr.mxu0 0.0
        %3478 = vmatpush1.msra.mxu0 %v1263
        %3479 = vmatprep.subr.mxu0 0.0
        %3480 = vmatpush1.msra.mxu0 %v1264
        %3481 = vmatprep.subr.mxu0 0.0
        %3482 = vmatpush1.msra.mxu0 %v1265
        %3483 = vmatprep.subr.mxu0 0.0
        %3484 = vmatpush1.msra.mxu0 %v1266
        %3485 = vmatprep.subr.mxu0 0.0
        %3486 = vmatpush1.msra.mxu0 %v1267
        %3487 = vmatprep.subr.mxu0 0.0
        %3488 = vmatpush1.msra.mxu0 %v1268
        %3489 = vmatprep.subr.mxu0 0.0
        %3490 = vmatpush1.msra.mxu0 %v1269
        %3491 = vmatprep.subr.mxu0 0.0
        %3492 = vmatpush1.msra.mxu0 %v1270
        %3493 = vmatprep.subr.mxu0 0.0
        %3494 = vmatpush1.msra.mxu0 %v1271
        %3495 = vmatprep.subr.mxu0 0.0
        %3496 = vmatpush1.msra.mxu0 %v1272
        %3497 = vmatprep.subr.mxu0 0.0
        %3498 = vmatpush1.msra.mxu0 %v1273
        %3499 = vmatprep.subr.mxu0 0.0
        %3500 = vmatpush1.msra.mxu0 %v1274
        %3501 = vmatprep.subr.mxu0 0.0
        %3502 = vmatpush1.msra.mxu0 %v1275
        %3503 = vmatprep.subr.mxu0 0.0
        %3504 = vmatpush1.msra.mxu0 %v1276
        %3505 = vmatprep.subr.mxu0 0.0
        %3506 = vmatpush1.msra.mxu0 %v1277
        %3507 = vmatprep.subr.mxu0 0.0
        %3508 = vmatpush1.msra.mxu0 %v1278
        %3509 = vmatprep.subr.mxu0 0.0
        %3510 = vmatpush1.msra.mxu0 %v1279
        %3511 = vmatprep.subr.mxu0 0.0
        %3512 = vmatpush1.msra.mxu0 %v1280
        %3513 = vmatprep.subr.mxu0 0.0
        %3514 = vmatpush1.msra.mxu0 %v1281
        %3515 = vmatprep.subr.mxu0 0.0
        %3516 = vmatpush1.msra.mxu0 %v1282
        %3517 = vmatprep.subr.mxu0 0.0
        %3518 = vmatpush1.msra.mxu0 %v1283
        %3519 = vmatprep.subr.mxu0 0.0
        %3520 = vmatpush1.msra.mxu0 %v1284
        %3521 = vmatprep.subr.mxu0 0.0
        %3522 = vmatpush1.msra.mxu0 %v1285
        %3523 = vmatprep.subr.mxu0 0.0
        %3524 = vmatpush1.msra.mxu0 %v1286
        %3525 = vmatprep.subr.mxu0 0.0
        %3526 = vmatpush1.msra.mxu0 %v1287
        %3527 = vmatprep.subr.mxu0 0.0
        %3528 = vmatpush1.msra.mxu0 %v1288
        %3529 = vmatprep.subr.mxu0 0.0
        %3530 = vmatpush1.msra.mxu0 %v1289
        %3531 = vmatprep.mubr.f32.mxu0 %v265
        %3532 = vmatmul.mubr.f32.gmra.mrb[0].mxu0 %v264
        %v3533 = vpop.f32.mrb[0].mxu0
        %v3534 = vadd.f32 %v3464, %v3533
        %v3535 = vpop.f32.mrb[0].mxu0
        %3536 = vdwg.mxu0
        %vm3537 = vcmask 31744
        %3538 = vst.msk [vmem:[%s194] sm:$0xff] %vm3537, %v3534
        %v3539 = vlaneseq
        %v3540 = vshrl.u32 %v3539, 7
        %s3541 = smul.u32 %s17, 8
        %v3542 = vstv %s3541
        %v3543 = vadd.s32 %v3540, %v3542
        %v3544 = vlaneseq
        %v3545 = vand.u32 %v3544, 127
        %v3546 = vmul.u32 %v3543, 4
        %v3547 = vadd.s32 %v3546, %v3545
        %vm3548 = vcmp.lt.s32.totalorder %v3543, 10
        %v3549 = vsel %vm3548, %v3534, -inf
        %v3550 = vsel %vm3548, %v3547, 2147483647
        %v3551 = vsel %vm3537, %v3549, -inf
        %3552 = vmax.xlane.f32.xlu0 %v3551
        %v3553 = vpop.xlane.xlu0 %3552
        %v3554 = vrot.slane %v3553, 4
        %v3555 = vmax.f32 %v3553, %v3554
        %v3556 = vrot.slane %v3555, 2
        %v3557 = vmax.f32 %v3555, %v3556
        %v3558 = vrot.slane %v3557, 1
        %v3559 = vmax.f32 %v3557, %v3558
        %s3560 = vtos %v3559
        %v3561 = vstv %s3560
        %vm3562 = vcmp.eq.f32.partialorder %v3549, %v3561
        %v3563 = vsel %vm3562, %v3550, 2147483647
        %v3564 = vsel %vm3537, %v3563, 2147483647
        %v3565 = vand.u32 %v3564, 65535
        %v3566 = vshra.s32 %v3564, 16
        %v3567 = vcvt.s32.f32 %v3565
        %v3568 = vcvt.s32.f32 %v3566
        %3569 = vmin.xlane.f32.xlu0 %v3568
        %v3570 = vpop.xlane.xlu0 %3569
        %vm3571 = vcmp.eq.f32.partialorder %v3568, %v3570
        %v3572 = vsel %vm3571, %v3567, inf
        %3573 = vmin.xlane.f32.xlu0 %v3572
        %v3574 = vpop.xlane.xlu0 %3573
        %v3575 = vcvt.f32.s32 %v3574
        %v3576 = vcvt.f32.s32 %v3570
        %v3577 = vshll.u32 %v3576, 16
        %v3578 = vadd.s32 %v3577, %v3575
        %v3579 = vrot.slane %v3578, 4
        %vm3580 = vcmp.lt.s32.totalorder %v3578, %v3579
        %v3581 = vsel %vm3580, %v3578, %v3579
        %v3582 = vrot.slane %v3581, 2
        %vm3583 = vcmp.lt.s32.totalorder %v3581, %v3582
        %v3584 = vsel %vm3583, %v3581, %v3582
        %v3585 = vrot.slane %v3584, 1
        %vm3586 = vcmp.lt.s32.totalorder %v3584, %v3585
        %v3587 = vsel %vm3586, %v3584, %v3585
        %s3588 = vtos %v3587
        %v3589 = vld [vmem:[#allocation2] sm:$0x1]
        %vm3590 = vcmp.lt.f32.partialorder %v3589, %v3561
        %v3591 = vld [vmem:[#allocation3] sm:$0x1]
        %v3592 = vstv %s3588
        %v3593 = vsel %vm3590, %v3592, %v3591
        %vm3594 = vcmask 0
        %3595 = vst.msk [vmem:[#allocation3] sm:$0x1] %vm3594, %v3593
        %v3596 = vld [vmem:[#allocation2] sm:$0x1]
        %v3597 = vsel %vm3590, %v3561, %v3596
        %3598 = vst.msk [vmem:[#allocation2] sm:$0x1] %vm3594, %v3597
        %p3599 = scmp.eq.s32.totalorder %s17, 1
        // Predicated region
        $region37: #{agent_forward.1} parent=31 // pred_check
          %p3600 = pneg %p3599
        $region38: #{agent_forward.1} parent=31 // pred_check_branch
          %3602 = sbr.rel (%p3600) target = $region40
        $region39: #{agent_forward.1} parent=31 // pred_region
          %v3603 = vld [vmem:[#allocation3] sm:$0x1]
          %s3604 = vtos %v3603
          %s3605 = scalar_lea.smem [#allocation4], 0
          %3606 = sst [smem:[%s3605]] %s3604
        $region40: #{agent_forward.1} parent=31 // pred_fallthru
          _
        %p3607 = scmp.lt.s32.totalorder %s17, 1
        %s3608 = scalar_select %p3607, %s17, 1
        %s3609 = smul.addr %s3608, 8
        %s3610 = scalar_lea.vmem %s3, %s3609
        // Predicated region
        $region41: #{agent_forward.1} parent=31 // pred_check
          %p3611 = pneg %p103
        $region42: #{agent_forward.1} parent=31 // pred_check_branch
          %3613 = sbr.rel (%p3611) target = $region44
        $region43: #{agent_forward.1} parent=31 // pred_region
          _
        $region44: #{agent_forward.1} parent=31 // pred_fallthru
          _
        // Predicated region
        $region45: #{agent_forward.1} parent=31 // pred_check
          %p3614 = pneg %p124
        $region46: #{agent_forward.1} parent=31 // pred_check_branch
          %3616 = sbr.rel (%p3614) target = $region48
        $region47: #{agent_forward.1} parent=31 // pred_region
          %s3618 = ssub.s32 16, 16
          %3619 = vsyncadd [#allocation5], %s3618
          %3622 = dma.smem_to_hbm [#allocation4], 16, %s4, [#allocation5]
        $region48: #{agent_forward.1} parent=31 // pred_fallthru
          _
        // Predicated region
        $region49: #{agent_forward.1} parent=31 // pred_check
          %p3623 = pneg %p124
        $region50: #{agent_forward.1} parent=31 // pred_check_branch
          %3625 = sbr.rel (%p3623) target = $region52
        $region51: #{agent_forward.1} parent=31 // pred_region
          %3626 = dma.done [#allocation5], 16
        $region52: #{agent_forward.1} parent=31 // pred_fallthru
          _
        %3627 = sfence
      $region32: #{agent_forward.1} parent=5 // pred_fallthru
        _
      %p3628 = scmp.le.s32.totalorder 2, %s12
      // Predicated region
      $region53: #{agent_forward.1} parent=5 // pred_check
        %p3629 = pneg %p3628
      $region54: #{agent_forward.1} parent=5 // pred_check_branch
        %3631 = sbr.rel (%p3629) target = $region56
      $region55: #{agent_forward.1} parent=5 // pred_region
        %s3632 = ssub.s32 %s12, 2
        // Predicated region
        $region57: #{agent_forward.1} parent=55 // pred_check
          %p3633 = pneg %p109
        $region58: #{agent_forward.1} parent=55 // pred_check_branch
          %3635 = sbr.rel (%p3633) target = $region60
        $region59: #{agent_forward.1} parent=55 // pred_region
          %p3636 = scmp.lt.s32.totalorder %s18, 1
          %s3637 = scalar_select %p3636, %s18, 1
          %s3638 = smul.addr %s3637, 8
          %s3639 = scalar_lea.vmem %s3, %s3638
        $region60: #{agent_forward.1} parent=55 // pred_fallthru
          _
      $region56: #{agent_forward.1} parent=5 // pred_fallthru
        _
    $region6: #{agent_forward.1} parent=1 // loop_footer
      %s16 = sadd.s32 1, %s12
    $region7: #{agent_forward.1} parent=1 // loop_footer_branch
      %11 = sbr.rel target = $region3
    $region8: #{agent_forward.1} parent=1 // loop_exit
      _
    %3640 = vsyncpa [#allocation5], 1
    %s3641 = scalar_lea.sflag [#allocation5], 1
    %3642 = vsyncpa %s3641, 1

</llo_original>
